<compile_context>
chip_gen: v5e
topology: v5e:2x2
jax: 0.10.0
libtpu: 0.0.40
codegen_flags: <defaults>
</compile_context>

<pallas_src>
import functools

import numpy as np

import jax
import jax.numpy as jnp
from jax.experimental import pallas as pl
from jax.experimental.pallas import tpu as pltpu


# ----------------------------------------------------------------------------
# Small host-side helpers
# ----------------------------------------------------------------------------

def _round_up(n, m):
    return ((n + m - 1) // m) * m


def _cdiv(a, b):
    return -(-a // b)


def _tpu_defaults():
    """(tensorcores_per_chip, tm_max) from the device kind string."""
    try:
        kind = jax.devices()[0].device_kind.lower()
    except Exception:
        return 1, 512
    cores = 2 if any(tag in kind for tag in ("v4", "v5p", "7")) else 1
    # v5e: MXU is ~5x slower, tm=512 already amortizes step overhead.
    tm_max = 512 if ("v5e" in kind or "v5 lite" in kind or "v5lite" in kind) else 1024
    return cores, tm_max


def _choose_tm(n, cores, tm_max, tm_min=128):
    """Largest MXU-friendly row tile such that every TensorCore gets at least
    one grid step and we do not compute mostly zero-padding."""
    tm = tm_max
    while tm > tm_min and (_cdiv(n, tm) < cores or _round_up(n, tm) >= 2 * n):
        tm //= 2
    return tm


def _pad_rows(a, n_pad):
    n = a.shape[0]
    if n_pad == n:
        return a
    return jnp.pad(a, ((0, n_pad - n), (0, 0)))


def _separable_split(b_out, b_in, b_all):
    """Return s such that (right-aligned) b_out == b_all[:s] + ones and
    b_in == ones + b_all[s:], else None.  This is the 'all-pairs' pattern."""
    k = len(b_all)
    bo = (1,) * (k - len(b_out)) + tuple(b_out)
    bi = (1,) * (k - len(b_in)) + tuple(b_in)
    for s in range(k + 1):
        if (all(bo[i] == b_all[i] for i in range(s))
                and all(bo[i] == 1 for i in range(s, k))
                and all(bi[i] == 1 for i in range(s))
                and all(bi[i] == b_all[i] for i in range(s, k))):
            return s
    return None


# ----------------------------------------------------------------------------
# Kernels
# ----------------------------------------------------------------------------

def _mlp_pair_kernel(x_ref, xp_ref,
                     w1a_ref, w1b_ref, b1_ref,
                     w2_ref, b2_ref, w3_ref, b3_ref, w4_ref, b4_ref,
                     w5t_ref, b5_ref, o_ref):
    """Paired rows: x_ref/xp_ref are (tm, D) bf16 row tiles of matched pairs.

    o_ref is a lane-dense (1, tm) f32 slice of the flat output."""
    f32, bf16 = jnp.float32, jnp.bfloat16

    # Layer 1 with the concat fused: concat([x, x']) @ W1 == x@W1a + x'@W1b.
    h = (jnp.dot(x_ref[...], w1a_ref[...], preferred_element_type=f32)
         + jnp.dot(xp_ref[...], w1b_ref[...], preferred_element_type=f32)
         + b1_ref[...])
    h = jnp.maximum(h, 0.0).astype(bf16)

    h = jnp.dot(h, w2_ref[...], preferred_element_type=f32) + b2_ref[...]
    h = jnp.maximum(h, 0.0).astype(bf16)

    h = jnp.dot(h, w3_ref[...], preferred_element_type=f32) + b3_ref[...]
    h = jnp.maximum(h, 0.0).astype(bf16)

    h = jnp.dot(h, w4_ref[...], preferred_element_type=f32) + b4_ref[...]
    h = jnp.maximum(h, 0.0).astype(bf16)                      # (tm, Lp)

    # Final width-1 layer, lane-dense: (8, Lp) x (tm, Lp) contracted on the
    # feature axis -> (8, tm); only row 0 carries real weights.
    out = jax.lax.dot_general(w5t_ref[...], h,
                              dimension_numbers=(((1,), (1,)), ((), ())),
                              preferred_element_type=f32)     # (8, tm)
    o_ref[...] = (out[0:1, :] + b5_ref[...]).astype(o_ref.dtype)


def _mlp_outer_kernel(xo_ref, xi_ref,
                      wo_ref, wi_ref, b1_ref,
                      w2_ref, b2_ref, w3_ref, b3_ref, w4_ref, b4_ref,
                      w5r_ref, b5_ref, o_ref):
    """All-pairs (separable broadcast): every outer row is paired with every
    inner row of this tile.  xo_ref: (to, D) bf16, xi_ref: (ti, D) bf16,
    o_ref: (to, ti) f32.  wo/wi are the W1 halves for the outer/inner input."""
    f32, bf16 = jnp.float32, jnp.bfloat16
    to, ti = o_ref.shape

    # Layer-1 activations computed once per row set, combined by broadcast-add
    # (this also removes the HBM materialization of the broadcast pairs).
    ha = jnp.dot(xo_ref[...], wo_ref[...], preferred_element_type=f32)   # (to, Hp)
    hb = jnp.dot(xi_ref[...], wi_ref[...], preferred_element_type=f32)   # (ti, Hp)
    h = ha[:, None, :] + hb[None, :, :] + b1_ref[...]                    # (to, ti, Hp)
    h = jnp.maximum(h, 0.0).astype(bf16).reshape(to * ti, -1)            # (R, Hp)

    h = jnp.dot(h, w2_ref[...], preferred_element_type=f32) + b2_ref[...]
    h = jnp.maximum(h, 0.0).astype(bf16)

    h = jnp.dot(h, w3_ref[...], preferred_element_type=f32) + b3_ref[...]
    h = jnp.maximum(h, 0.0).astype(bf16)

    h = jnp.dot(h, w4_ref[...], preferred_element_type=f32) + b4_ref[...]
    h = jnp.maximum(h, 0.0)                                              # (R, Lp) f32

    # Final width-1 layer as a VPU multiply + lane reduction so the result
    # lands directly in the (to, ti) output layout (no relayout / reshape of
    # the lane dimension).  Cheap next to the 256x256 matmuls above.
    lp = h.shape[-1]
    prod = h.reshape(to, ti, lp) * w5r_ref[...]                          # (to, ti, Lp)
    o_ref[...] = (jnp.sum(prod, axis=-1) + b5_ref[...]).astype(o_ref.dtype)


# ----------------------------------------------------------------------------
# pallas_call wrappers
# ----------------------------------------------------------------------------

def _paired_weights(kp):
    return [kp["w1a"], kp["w1b"], kp["b1"], kp["w2"], kp["b2"],
            kp["w3"], kp["b3"], kp["w4"], kp["b4"], kp["w5t"], kp["b5"]]


def _outer_weights(kp, x_is_outer):
    wo, wi = (kp["w1a"], kp["w1b"]) if x_is_outer else (kp["w1b"], kp["w1a"])
    return [wo, wi, kp["b1"], kp["w2"], kp["b2"],
            kp["w3"], kp["b3"], kp["w4"], kp["b4"], kp["w5r"], kp["b5"]]


def _forward_paired(x_flat, xp_flat, kp, bshape, cores, tm_max):
    """Both inputs already flattened to (N, D) matched row pairs."""
    n, d = x_flat.shape
    tm = _choose_tm(n, cores, tm_max)
    steps = _cdiv(n, tm)
    if cores > 1 and steps > 1 and steps % 2 == 1:
        steps += 1                        # even split across both TensorCores
    n_pad = steps * tm

    x_flat = _pad_rows(x_flat, n_pad).astype(jnp.bfloat16)
    xp_flat = _pad_rows(xp_flat, n_pad).astype(jnp.bfloat16)
    weights = _paired_weights(kp)

    out = pl.pallas_call(
        _mlp_pair_kernel,
        out_shape=jax.ShapeDtypeStruct((1, n_pad), jnp.float32),
        grid=(steps,),
        in_specs=[pl.BlockSpec((tm, d), lambda i: (i, 0)),
                  pl.BlockSpec((tm, d), lambda i: (i, 0))]
                 + [pl.BlockSpec(w.shape, lambda i: (0, 0)) for w in weights],
        out_specs=pl.BlockSpec((1, tm), lambda i: (0, i)),
        compiler_params=pltpu.CompilerParams(
            dimension_semantics=("parallel",)),
    )(x_flat, xp_flat, *weights)
    return out[0, :n].reshape(*bshape, 1)


def _forward_outer(outer_flat, inner_flat, kp, bshape, x_is_outer, cores):
    """Separable broadcast: output row (o, i) pairs outer row o with inner
    row i.  No broadcast materialization in HBM."""
    o_rows, d = outer_flat.shape
    i_rows = inner_flat.shape[0]

    ti, to = 128, 16                      # 2048 pair-rows per grid step
    i_pad = _round_up(i_rows, ti)
    o_pad = _round_up(o_rows, to)
    steps = (o_pad // to) * (i_pad // ti)
    if cores > 1 and steps > 1 and steps % 2 == 1:
        o_pad += to                       # even split across both TensorCores

    outer_b = _pad_rows(outer_flat, o_pad).astype(jnp.bfloat16)
    inner_b = _pad_rows(inner_flat, i_pad).astype(jnp.bfloat16)
    weights = _outer_weights(kp, x_is_outer)

    out = pl.pallas_call(
        _mlp_outer_kernel,
        out_shape=jax.ShapeDtypeStruct((o_pad, i_pad), jnp.float32),
        grid=(o_pad // to, i_pad // ti),
        in_specs=[pl.BlockSpec((to, d), lambda i, j: (i, 0)),
                  pl.BlockSpec((ti, d), lambda i, j: (j, 0))]
                 + [pl.BlockSpec(w.shape, lambda i, j: (0, 0)) for w in weights],
        out_specs=pl.BlockSpec((to, ti), lambda i, j: (i, j)),
        compiler_params=pltpu.CompilerParams(
            dimension_semantics=("parallel", "parallel")),
    )(outer_b, inner_b, *weights)
    return out[:o_rows, :i_rows].reshape(*bshape, 1)


def global_metric_mlp_forward(x, x_prime, kernel_params):
    """Mirrors GlobalMetricMlp.forward: broadcast, flatten, concat + MLP, reshape."""
    d = x.shape[-1]
    assert x_prime.shape[-1] == d, "feature dims must match"
    bx, bxp = tuple(x.shape[:-1]), tuple(x_prime.shape[:-1])
    bshape = tuple(np.broadcast_shapes(bx, bxp))
    cores, tm_max = _tpu_defaults()

    if bx == bxp:
        # No broadcasting needed at all.
        return _forward_paired(x.reshape(-1, d), x_prime.reshape(-1, d),
                               kernel_params, bshape, cores, tm_max)

    s = _separable_split(bx, bxp, bshape)
    if s is not None:                      # x outer, x' inner (all-pairs)
        return _forward_outer(x.reshape(-1, d), x_prime.reshape(-1, d),
                              kernel_params, bshape, True, cores)
    s = _separable_split(bxp, bx, bshape)
    if s is not None:                      # x' outer, x inner
        return _forward_outer(x_prime.reshape(-1, d), x.reshape(-1, d),
                              kernel_params, bshape, False, cores)

    # TODO(synk): arbitrary (non-separable) broadcasts still materialize the
    # broadcast copies in HBM; a scalar-prefetched row-gather kernel would
    # remove this extra pass for the fully general case.
    xb, xpb = jnp.broadcast_arrays(x, x_prime)
    return _forward_paired(xb.reshape(-1, d), xpb.reshape(-1, d),
                           kernel_params, bshape, cores, tm_max)


# ----------------------------------------------------------------------------
# Parameters
# ----------------------------------------------------------------------------

def init_params(key, input_dim, latent_dim=50, hidden=200):
    """PyTorch nn.Linear-style init: U(-1/sqrt(fan_in), 1/sqrt(fan_in)).
    Weights stored transposed as (in_features, out_features); biases (out,)."""
    dims = [input_dim * 2, hidden, hidden, hidden, latent_dim, 1]
    params = []
    for i in range(len(dims) - 1):
        fan_in, fan_out = dims[i], dims[i + 1]
        key, kw, kb = jax.random.split(key, 3)
        bound = 1.0 / (fan_in ** 0.5)
        w = jax.random.uniform(kw, (fan_in, fan_out), jnp.float32, -bound, bound)
        b = jax.random.uniform(kb, (fan_out,), jnp.float32, -bound, bound)
        params.append((w, b))
    return params


def prepare_kernel_params(params):
    """Pad hidden dims to lane multiples (zero pads stay inert through ReLU),
    cast weights to bf16 for the MXU, split W1 for the fused concat, and keep
    W5 both as a padded-transposed (8, Lp) bf16 matrix (paired kernel) and as a
    (1, Lp) f32 row (outer kernel)."""
    (w1, b1), (w2, b2), (w3, b3), (w4, b4), (w5, b5) = params
    d2 = w1.shape[0]
    d = d2 // 2
    hp = _round_up(w1.shape[1], 128)       # 200 -> 256
    lp = _round_up(w4.shape[1], 128)       # 50  -> 128
    bf16 = jnp.bfloat16

    def pw(w, rows, cols):
        return jnp.pad(w, ((0, rows - w.shape[0]),
                           (0, cols - w.shape[1]))).astype(bf16)

    def pb(b, cols):
        return jnp.pad(b, (0, cols - b.shape[0])).reshape(1, cols).astype(jnp.float32)

    w1p = pw(w1, d2, hp)
    return {
        "w1a": w1p[:d], "w1b": w1p[d:], "b1": pb(b1, hp),
        "w2": pw(w2, hp, hp), "b2": pb(b2, hp),
        "w3": pw(w3, hp, hp), "b3": pb(b3, hp),
        "w4": pw(w4, hp, lp), "b4": pb(b4, lp),
        "w5t": pw(w5.T, 8, lp),                      # (8, Lp) bf16, row 0 real
        "w5r": pb(w5[:, 0], lp),                     # (1, Lp) f32
        "b5": b5.reshape(1, 1).astype(jnp.float32),
    }


def reference_forward(x, x_prime, params, *, matmul_dtype=jnp.bfloat16):
    """Pure-JAX reference.  matmul_dtype=bf16 mirrors the kernel numerics
    (bf16 operands, f32 accumulation); f32 is the exact PyTorch-module math."""
    x, x_prime = jnp.broadcast_arrays(x, x_prime)
    *b, w = x.shape
    h = jnp.concatenate([x.reshape(-1, w), x_prime.reshape(-1, w)], axis=-1)
    h = h.astype(jnp.float32)
    for i, (wk, bk) in enumerate(params):
        h = jnp.dot(h.astype(matmul_dtype), wk.astype(matmul_dtype),
                    preferred_element_type=jnp.float32) + bk
        if i < len(params) - 1:
            h = jnp.maximum(h, 0.0)
    return h.reshape(*b, 1)


# ----------------------------------------------------------------------------
# Self-test
# ----------------------------------------------------------------------------

if __name__ == "__main__":
    input_dim = 16
    latent_dim = 50

    key = jax.random.PRNGKey(0)
    key, kx1, kxp1, kx2, kxp2, kx3, kxp3, kx4, kxp4 = jax.random.split(key, 9)

    params = init_params(key, input_dim, latent_dim)
    kparams = prepare_kernel_params(params)

    fwd = jax.jit(functools.partial(global_metric_mlp_forward,
                                    kernel_params=kparams))

    def check(xa, xb, shape):
        out = jax.block_until_ready(fwd(xa, xb))
        assert out.shape == shape, (out.shape, shape)
        ref = reference_forward(xa, xb, params)        # bf16-matched reference
        assert jnp.allclose(out, ref, atol=3e-2, rtol=3e-2), (
            float(jnp.max(jnp.abs(out - ref))))

    # 1) Equal batch shapes -> paired-row kernel (no broadcast work at all).
    x = jax.random.normal(kx1, (4, 80, input_dim), jnp.float32)
    xp = jax.random.normal(kxp1, (4, 80, input_dim), jnp.float32)
    check(x, xp, (4, 80, 1))

    # 2) Separable all-pairs broadcast (x outer, x' inner): no HBM
    #    materialization of the (6, 10, D) broadcast.
    x = jax.random.normal(kx2, (6, 1, input_dim), jnp.float32)
    xp = jax.random.normal(kxp2, (1, 10, input_dim), jnp.float32)
    check(x, xp, (6, 10, 1))

    # 3) Separable with swapped roles (x' outer, x inner).
    x = jax.random.normal(kx3, (1, 5, input_dim), jnp.float32)
    xp = jax.random.normal(kxp3, (4, 1, input_dim), jnp.float32)
    check(x, xp, (4, 5, 1))

    # 4) Non-separable broadcast -> materializing fallback path.
    x = jax.random.normal(kx4, (2, 8, input_dim), jnp.float32)
    xp = jax.random.normal(kxp4, (1, 8, input_dim), jnp.float32)
    check(x, xp, (2, 8, 1))

    print("KERNEL_OK")
</pallas_src>

<mosaic_0001>
module attributes {stable_mosaic.version = 11 : i64} {
  func.func @_mlp_pair_kernel(%arg0: i32, %arg1: memref<512x16xbf16, #tpu.memory_space<vmem>>, %arg2: memref<512x16xbf16, #tpu.memory_space<vmem>>, %arg3: memref<16x256xbf16, #tpu.memory_space<vmem>>, %arg4: memref<16x256xbf16, #tpu.memory_space<vmem>>, %arg5: memref<1x256xf32, #tpu.memory_space<vmem>>, %arg6: memref<256x256xbf16, #tpu.memory_space<vmem>>, %arg7: memref<1x256xf32, #tpu.memory_space<vmem>>, %arg8: memref<256x256xbf16, #tpu.memory_space<vmem>>, %arg9: memref<1x256xf32, #tpu.memory_space<vmem>>, %arg10: memref<256x128xbf16, #tpu.memory_space<vmem>>, %arg11: memref<1x128xf32, #tpu.memory_space<vmem>>, %arg12: memref<8x128xbf16, #tpu.memory_space<vmem>>, %arg13: memref<1x1xf32, #tpu.memory_space<vmem>>, %arg14: memref<1x512xf32, #tpu.memory_space<vmem>>) attributes {dimension_semantics = [#tpu.dimension_semantics<parallel>], iteration_bounds = array<i64: 1>, scalar_prefetch = 0 : i64, scratch_operands = 0 : i64, tpu.core_type = #tpu.core_type<tc>, window_params = [{transform_indices = @transform_0, window_bounds = array<i64: 512, 16>}, {transform_indices = @transform_1, window_bounds = array<i64: 512, 16>}, {pipeline_mode = #tpu.pipeline_mode<synchronous>, transform_indices = @transform_2, window_bounds = array<i64: 16, 256>}, {pipeline_mode = #tpu.pipeline_mode<synchronous>, transform_indices = @transform_3, window_bounds = array<i64: 16, 256>}, {pipeline_mode = #tpu.pipeline_mode<synchronous>, transform_indices = @transform_4, window_bounds = array<i64: 1, 256>}, {pipeline_mode = #tpu.pipeline_mode<synchronous>, transform_indices = @transform_5, window_bounds = array<i64: 256, 256>}, {pipeline_mode = #tpu.pipeline_mode<synchronous>, transform_indices = @transform_6, window_bounds = array<i64: 1, 256>}, {pipeline_mode = #tpu.pipeline_mode<synchronous>, transform_indices = @transform_7, window_bounds = array<i64: 256, 256>}, {pipeline_mode = #tpu.pipeline_mode<synchronous>, transform_indices = @transform_8, window_bounds = array<i64: 1, 256>}, {pipeline_mode = #tpu.pipeline_mode<synchronous>, transform_indices = @transform_9, window_bounds = array<i64: 256, 128>}, {pipeline_mode = #tpu.pipeline_mode<synchronous>, transform_indices = @transform_10, window_bounds = array<i64: 1, 128>}, {pipeline_mode = #tpu.pipeline_mode<synchronous>, transform_indices = @transform_11, window_bounds = array<i64: 8, 128>}, {pipeline_mode = #tpu.pipeline_mode<synchronous>, transform_indices = @transform_12, window_bounds = array<i64: 1, 1>}, {transform_indices = @transform_13, window_bounds = array<i64: 1, 512>}]} {
    %c0 = arith.constant 0 : index
    %c0_0 = arith.constant 0 : index
    %0 = vector.load %arg1[%c0, %c0_0] : memref<512x16xbf16, #tpu.memory_space<vmem>>, vector<512x16xbf16>
    %c0_1 = arith.constant 0 : index
    %c0_2 = arith.constant 0 : index
    %1 = vector.load %arg3[%c0_1, %c0_2] : memref<16x256xbf16, #tpu.memory_space<vmem>>, vector<16x256xbf16>
    %cst = arith.constant dense<0.000000e+00> : vector<512x256xf32>
    %2 = tpu.matmul %0, %1, %cst {dimension_numbers = #tpu.dot_dimension_numbers<[1], [0], [0], [1], [0, 0, 1, 1], [], []>} : vector<512x16xbf16>, vector<16x256xbf16>, vector<512x256xf32> -> vector<512x256xf32>
    %c0_3 = arith.constant 0 : index
    %c0_4 = arith.constant 0 : index
    %3 = vector.load %arg2[%c0_3, %c0_4] : memref<512x16xbf16, #tpu.memory_space<vmem>>, vector<512x16xbf16>
    %c0_5 = arith.constant 0 : index
    %c0_6 = arith.constant 0 : index
    %4 = vector.load %arg4[%c0_5, %c0_6] : memref<16x256xbf16, #tpu.memory_space<vmem>>, vector<16x256xbf16>
    %cst_7 = arith.constant dense<0.000000e+00> : vector<512x256xf32>
    %5 = tpu.matmul %3, %4, %cst_7 {dimension_numbers = #tpu.dot_dimension_numbers<[1], [0], [0], [1], [0, 0, 1, 1], [], []>} : vector<512x16xbf16>, vector<16x256xbf16>, vector<512x256xf32> -> vector<512x256xf32>
    %6 = arith.addf %2, %5 : vector<512x256xf32>
    %c0_8 = arith.constant 0 : index
    %c0_9 = arith.constant 0 : index
    %7 = vector.load %arg5[%c0_8, %c0_9] : memref<1x256xf32, #tpu.memory_space<vmem>>, vector<1x256xf32>
    %8 = vector.broadcast %7 : vector<1x256xf32> to vector<512x256xf32>
    %9 = arith.addf %6, %8 : vector<512x256xf32>
    %cst_10 = arith.constant 0.000000e+00 : f32
    %10 = vector.broadcast %cst_10 : f32 to vector<512x256xf32>
    %11 = arith.maximumf %9, %10 : vector<512x256xf32>
    %12 = arith.truncf %11 : vector<512x256xf32> to vector<512x256xbf16>
    %c0_11 = arith.constant 0 : index
    %c0_12 = arith.constant 0 : index
    %13 = vector.load %arg6[%c0_11, %c0_12] : memref<256x256xbf16, #tpu.memory_space<vmem>>, vector<256x256xbf16>
    %cst_13 = arith.constant dense<0.000000e+00> : vector<512x256xf32>
    %14 = tpu.matmul %12, %13, %cst_13 {dimension_numbers = #tpu.dot_dimension_numbers<[1], [0], [0], [1], [0, 0, 1, 1], [], []>} : vector<512x256xbf16>, vector<256x256xbf16>, vector<512x256xf32> -> vector<512x256xf32>
    %c0_14 = arith.constant 0 : index
    %c0_15 = arith.constant 0 : index
    %15 = vector.load %arg7[%c0_14, %c0_15] : memref<1x256xf32, #tpu.memory_space<vmem>>, vector<1x256xf32>
    %16 = vector.broadcast %15 : vector<1x256xf32> to vector<512x256xf32>
    %17 = arith.addf %14, %16 : vector<512x256xf32>
    %cst_16 = arith.constant 0.000000e+00 : f32
    %18 = vector.broadcast %cst_16 : f32 to vector<512x256xf32>
    %19 = arith.maximumf %17, %18 : vector<512x256xf32>
    %20 = arith.truncf %19 : vector<512x256xf32> to vector<512x256xbf16>
    %c0_17 = arith.constant 0 : index
    %c0_18 = arith.constant 0 : index
    %21 = vector.load %arg8[%c0_17, %c0_18] : memref<256x256xbf16, #tpu.memory_space<vmem>>, vector<256x256xbf16>
    %cst_19 = arith.constant dense<0.000000e+00> : vector<512x256xf32>
    %22 = tpu.matmul %20, %21, %cst_19 {dimension_numbers = #tpu.dot_dimension_numbers<[1], [0], [0], [1], [0, 0, 1, 1], [], []>} : vector<512x256xbf16>, vector<256x256xbf16>, vector<512x256xf32> -> vector<512x256xf32>
    %c0_20 = arith.constant 0 : index
    %c0_21 = arith.constant 0 : index
    %23 = vector.load %arg9[%c0_20, %c0_21] : memref<1x256xf32, #tpu.memory_space<vmem>>, vector<1x256xf32>
    %24 = vector.broadcast %23 : vector<1x256xf32> to vector<512x256xf32>
    %25 = arith.addf %22, %24 : vector<512x256xf32>
    %cst_22 = arith.constant 0.000000e+00 : f32
    %26 = vector.broadcast %cst_22 : f32 to vector<512x256xf32>
    %27 = arith.maximumf %25, %26 : vector<512x256xf32>
    %28 = arith.truncf %27 : vector<512x256xf32> to vector<512x256xbf16>
    %c0_23 = arith.constant 0 : index
    %c0_24 = arith.constant 0 : index
    %29 = vector.load %arg10[%c0_23, %c0_24] : memref<256x128xbf16, #tpu.memory_space<vmem>>, vector<256x128xbf16>
    %cst_25 = arith.constant dense<0.000000e+00> : vector<512x128xf32>
    %30 = tpu.matmul %28, %29, %cst_25 {dimension_numbers = #tpu.dot_dimension_numbers<[1], [0], [0], [1], [0, 0, 1, 1], [], []>} : vector<512x256xbf16>, vector<256x128xbf16>, vector<512x128xf32> -> vector<512x128xf32>
    %c0_26 = arith.constant 0 : index
    %c0_27 = arith.constant 0 : index
    %31 = vector.load %arg11[%c0_26, %c0_27] : memref<1x128xf32, #tpu.memory_space<vmem>>, vector<1x128xf32>
    %32 = vector.broadcast %31 : vector<1x128xf32> to vector<512x128xf32>
    %33 = arith.addf %30, %32 : vector<512x128xf32>
    %cst_28 = arith.constant 0.000000e+00 : f32
    %34 = vector.broadcast %cst_28 : f32 to vector<512x128xf32>
    %35 = arith.maximumf %33, %34 : vector<512x128xf32>
    %36 = arith.truncf %35 : vector<512x128xf32> to vector<512x128xbf16>
    %c0_29 = arith.constant 0 : index
    %c0_30 = arith.constant 0 : index
    %37 = vector.load %arg12[%c0_29, %c0_30] : memref<8x128xbf16, #tpu.memory_space<vmem>>, vector<8x128xbf16>
    %cst_31 = arith.constant dense<0.000000e+00> : vector<8x512xf32>
    %38 = tpu.matmul %37, %36, %cst_31 {dimension_numbers = #tpu.dot_dimension_numbers<[1], [1], [0], [0], [0, 0, 1, 0], [], []>} : vector<8x128xbf16>, vector<512x128xbf16>, vector<8x512xf32> -> vector<8x512xf32>
    %39 = vector.extract_strided_slice %38 {offsets = [0, 0], sizes = [1, 512], strides = [1, 1]} : vector<8x512xf32> to vector<1x512xf32>
    %c0_32 = arith.constant 0 : index
    %c0_33 = arith.constant 0 : index
    %40 = vector.load %arg13[%c0_32, %c0_33] : memref<1x1xf32, #tpu.memory_space<vmem>>, vector<1x1xf32>
    %41 = vector.broadcast %40 : vector<1x1xf32> to vector<1x512xf32>
    %42 = arith.addf %39, %41 : vector<1x512xf32>
    %c0_34 = arith.constant 0 : index
    %c0_35 = arith.constant 0 : index
    %43 = vector.load %arg14[%c0_34, %c0_35] : memref<1x512xf32, #tpu.memory_space<vmem>>, vector<1x512xf32>
    tpu.vector_store %arg14[%c0_34, %c0_35], %42 {strides = array<i32>} : memref<1x512xf32, #tpu.memory_space<vmem>>, vector<1x512xf32>,
    return
  }
  func.func @transform_0(%arg0: i32) -> (i32, i32) {
    %c0_i32 = arith.constant 0 : i32
    %c0_i32_0 = arith.constant 0 : i32
    return %arg0, %c0_i32 : i32, i32
  }
  func.func @transform_1(%arg0: i32) -> (i32, i32) {
    %c0_i32 = arith.constant 0 : i32
    %c0_i32_0 = arith.constant 0 : i32
    return %arg0, %c0_i32 : i32, i32
  }
  func.func @transform_2(%arg0: i32) -> (i32, i32) {
    %c0_i32 = arith.constant 0 : i32
    %c0_i32_0 = arith.constant 0 : i32
    %c0_i32_1 = arith.constant 0 : i32
    return %c0_i32, %c0_i32_0 : i32, i32
  }
  func.func @transform_3(%arg0: i32) -> (i32, i32) {
    %c0_i32 = arith.constant 0 : i32
    %c0_i32_0 = arith.constant 0 : i32
    %c0_i32_1 = arith.constant 0 : i32
    return %c0_i32, %c0_i32_0 : i32, i32
  }
  func.func @transform_4(%arg0: i32) -> (i32, i32) {
    %c0_i32 = arith.constant 0 : i32
    %c0_i32_0 = arith.constant 0 : i32
    %c0_i32_1 = arith.constant 0 : i32
    return %c0_i32, %c0_i32_0 : i32, i32
  }
  func.func @transform_5(%arg0: i32) -> (i32, i32) {
    %c0_i32 = arith.constant 0 : i32
    %c0_i32_0 = arith.constant 0 : i32
    %c0_i32_1 = arith.constant 0 : i32
    return %c0_i32, %c0_i32_0 : i32, i32
  }
  func.func @transform_6(%arg0: i32) -> (i32, i32) {
    %c0_i32 = arith.constant 0 : i32
    %c0_i32_0 = arith.constant 0 : i32
    %c0_i32_1 = arith.constant 0 : i32
    return %c0_i32, %c0_i32_0 : i32, i32
  }
  func.func @transform_7(%arg0: i32) -> (i32, i32) {
    %c0_i32 = arith.constant 0 : i32
    %c0_i32_0 = arith.constant 0 : i32
    %c0_i32_1 = arith.constant 0 : i32
    return %c0_i32, %c0_i32_0 : i32, i32
  }
  func.func @transform_8(%arg0: i32) -> (i32, i32) {
    %c0_i32 = arith.constant 0 : i32
    %c0_i32_0 = arith.constant 0 : i32
    %c0_i32_1 = arith.constant 0 : i32
    return %c0_i32, %c0_i32_0 : i32, i32
  }
  func.func @transform_9(%arg0: i32) -> (i32, i32) {
    %c0_i32 = arith.constant 0 : i32
    %c0_i32_0 = arith.constant 0 : i32
    %c0_i32_1 = arith.constant 0 : i32
    return %c0_i32, %c0_i32_0 : i32, i32
  }
  func.func @transform_10(%arg0: i32) -> (i32, i32) {
    %c0_i32 = arith.constant 0 : i32
    %c0_i32_0 = arith.constant 0 : i32
    %c0_i32_1 = arith.constant 0 : i32
    return %c0_i32, %c0_i32_0 : i32, i32
  }
  func.func @transform_11(%arg0: i32) -> (i32, i32) {
    %c0_i32 = arith.constant 0 : i32
    %c0_i32_0 = arith.constant 0 : i32
    %c0_i32_1 = arith.constant 0 : i32
    return %c0_i32, %c0_i32_0 : i32, i32
  }
  func.func @transform_12(%arg0: i32) -> (i32, i32) {
    %c0_i32 = arith.constant 0 : i32
    %c0_i32_0 = arith.constant 0 : i32
    %c0_i32_1 = arith.constant 0 : i32
    return %c0_i32, %c0_i32_0 : i32, i32
  }
  func.func @transform_13(%arg0: i32) -> (i32, i32) {
    %c0_i32 = arith.constant 0 : i32
    %c0_i32_0 = arith.constant 0 : i32
    return %c0_i32, %arg0 : i32, i32
  }
}

</mosaic_0001>

<llo_original>
// kernel: squeeze.1
$region0: #{squeeze.1}
  %s0 = inlined_call_operand.vmem [shape: f32[320], index: 0, kind: input, shape index: {}]
  %s1 = inlined_call_operand.hbm [shape: f32[4,80,1], index: 1, kind: output, shape index: {}]
  $region1: #{squeeze.1} parent=0
    #allocation0 [shape = 'u8[2048]{0}', space=vmem, size = 0x800, scoped, tag = 'operand span for operand 1']
    #allocation1 [shape = 's32[1]{0}', space=sflag, size = 0x4, scoped, tag = 'scoped memory for squeeze.1']
    #allocation2 [shape = 'u8[4096]{0}', space=vmem, size = 0x1000, scoped, tag = 'scoped mem for output reshape']
    #allocation3 [shape = 'u8[4096]{0}', space=vmem, size = 0x1000, scoped, tag = 'scoped mem for input reshape']
    %2 = vsyncpa [#allocation1], 0
    %s4 = ssub.s32 16, 1
    %v5 = vld [vmem:[%s0] sm:%s4]
    %6 = vst [vmem:[#allocation3] sm:%s4] %v5
    %v7 = vld [vmem:[#allocation3] sm:$0x1]
    %vm8 = vcmask 654336
    %9 = vst.msk [vmem:[#allocation2] sm:$0x1] %vm8, %v7
    %s10 = scalar_lea.vmem [#allocation3], 1
    %v11 = vld [vmem:[%s10] sm:$0x1]
    %12 = vrot.lane.b32.xlu0 %v11, 96
    %v13 = vpop.permute.xlu0 %12
    %vm14 = vcmask 654336
    %s15 = scalar_lea.vmem [#allocation2], 2
    %16 = vst.msk [vmem:[%s15] sm:$0x1] %vm14, %v13
    %v17 = vld [vmem:[#allocation3] sm:$0x1]
    %s18 = scalar_lea.vmem [#allocation3], 1
    %v19 = vld [vmem:[%s18] sm:$0x1]
    %vm20 = vcmask 654336
    %v21 = vsel %vm20, %v19, %v17
    %22 = vrot.lane.b32.xlu0 %v21, 48
    %v23 = vpop.permute.xlu0 %22
    %vm24 = vcmask 392192
    %s25 = scalar_lea.vmem [#allocation2], 1
    %26 = vst.msk [vmem:[%s25] sm:$0x1] %vm24, %v23
    %vm27 = vcmask 654720
    %s28 = scalar_lea.vmem [#allocation2], 1
    %29 = vst.msk [vmem:[%s28] sm:$0x1] %vm27, %v23
    %s30 = scalar_lea.vmem [#allocation3], 1
    %v31 = vld [vmem:[%s30] sm:$0x1]
    %s32 = scalar_lea.vmem [#allocation3], 2
    %v33 = vld [vmem:[%s32] sm:$0x1]
    %vm34 = vcmask 916480
    %v35 = vsel %vm34, %v33, %v31
    %36 = vrot.lane.b32.xlu0 %v35, 16
    %v37 = vpop.permute.xlu0 %36
    %vm38 = vcmask 130048
    %s39 = scalar_lea.vmem [#allocation2], 3
    %40 = vst.msk [vmem:[%s39] sm:$0x1] %vm38, %v37
    %vm41 = vcmask 654464
    %s42 = scalar_lea.vmem [#allocation2], 3
    %43 = vst.msk [vmem:[%s42] sm:$0x1] %vm41, %v37
    %s45 = ssub.s32 16, 1
    %v46 = vld [vmem:[#allocation2] sm:%s45]
    %s48 = ssub.s32 16, 1
    %49 = vst [vmem:[#allocation0] sm:%s48] %v46
    %51 = vsyncadd [#allocation1], 0
    %s53 = sshll.u32 [#allocation0], 4
    %s54 = int_to_ptr.vmem [resolvable:$true] %s53
    %s55 = sshll.u32 %s1, 4
    %s56 = int_to_ptr.hbm [resolvable:$true] %s55
    %58 = dma.vmem_to_hbm [thread:$0]  %s54, 64, %s56, [#allocation1]
    %60 = dma.done [#allocation1], 64
    %61 = vsyncpa [#allocation1], 1

// kernel: global_metric_mlp_forward.1
$region0: #{global_metric_mlp_forward.1}
  #allocation0 [shape = 'u32[]', space=smem, size = 0x4, offset = 0x4, fixed_abs, tag = 'smem constant byte address 0x4 - core index']
  #allocation1 [shape = 'u32[72,128]{1,0:T(1,128)}', space=vmem, size = 0x9000, scoped, tag = 'internal scratch']
  #allocation2 [shape = 'f32[1,1]{1,0:T(1,128)S(1)}', space=vmem, size = 0x200, scoped, tag = 'scoped memory for global_metric_mlp_forward.1']
  %s0 = inlined_call_operand.vmem [shape: bf16[512,16], index: 0, kind: input, shape index: {}]
  %s1 = inlined_call_operand.vmem [shape: bf16[512,16], index: 1, kind: input, shape index: {}]
  %s2 = inlined_call_operand.vmem [shape: bf16[16,256], index: 2, kind: input, shape index: {}]
  %s3 = inlined_call_operand.vmem [shape: bf16[16,256], index: 3, kind: input, shape index: {}]
  %s4 = inlined_call_operand.vmem [shape: f32[1,256], index: 4, kind: input, shape index: {}]
  %s5 = inlined_call_operand.vmem [shape: bf16[256,256], index: 5, kind: input, shape index: {}]
  %s6 = inlined_call_operand.vmem [shape: f32[1,256], index: 6, kind: input, shape index: {}]
  %s7 = inlined_call_operand.vmem [shape: bf16[256,256], index: 7, kind: input, shape index: {}]
  %s8 = inlined_call_operand.vmem [shape: f32[1,256], index: 8, kind: input, shape index: {}]
  %s9 = inlined_call_operand.vmem [shape: bf16[256,128], index: 9, kind: input, shape index: {}]
  %s10 = inlined_call_operand.vmem [shape: f32[1,128], index: 10, kind: input, shape index: {}]
  %s11 = inlined_call_operand.vmem [shape: bf16[8,128], index: 11, kind: input, shape index: {}]
  %s12 = inlined_call_operand.<no memory space> [shape: f32[1,1], index: 12, kind: input, shape index: {}]
  %s13 = inlined_call_operand.vmem [shape: f32[1,512], index: 13, kind: output, shape index: {}]
  %s14 = sld [smem:[#allocation0]]
  $region62: #{global_metric_mlp_forward.1} parent=0
    _
  %s16 = ssub.s32 1, %s14
  %s17 = scalar_select 0, %s16, %s14
  %v18 = vstv %s12
  %19 = vst [vmem:[#allocation2] sm:$0x1] %v18
  // Predicated region
  $region2: #{global_metric_mlp_forward.1} parent=0 // pred_check
    _
  $region3: #{global_metric_mlp_forward.1} parent=0 // pred_check_branch
    %21 = sbr.rel (0) target = $region5
  $region4: #{global_metric_mlp_forward.1} parent=0 // pred_region
    _
  $region5: #{global_metric_mlp_forward.1} parent=0 // pred_fallthru
    _
  // Predicated region
  $region6: #{global_metric_mlp_forward.1} parent=0 // pred_check
    _
  $region7: #{global_metric_mlp_forward.1} parent=0 // pred_check_branch
    %23 = sbr.rel (0) target = $region9
  $region8: #{global_metric_mlp_forward.1} parent=0 // pred_region
    _
  $region9: #{global_metric_mlp_forward.1} parent=0 // pred_fallthru
    _
  // Predicated region
  $region10: #{global_metric_mlp_forward.1} parent=0 // pred_check
    _
  $region11: #{global_metric_mlp_forward.1} parent=0 // pred_check_branch
    %25 = sbr.rel (0) target = $region13
  $region12: #{global_metric_mlp_forward.1} parent=0 // pred_region
    _
  $region13: #{global_metric_mlp_forward.1} parent=0 // pred_fallthru
    _
  // Predicated region
  $region14: #{global_metric_mlp_forward.1} parent=0 // pred_check
    _
  $region15: #{global_metric_mlp_forward.1} parent=0 // pred_check_branch
    %27 = sbr.rel (0) target = $region17
  $region16: #{global_metric_mlp_forward.1} parent=0 // pred_region
    _
  $region17: #{global_metric_mlp_forward.1} parent=0 // pred_fallthru
    _
  // Predicated region
  $region18: #{global_metric_mlp_forward.1} parent=0 // pred_check
    _
  $region19: #{global_metric_mlp_forward.1} parent=0 // pred_check_branch
    %29 = sbr.rel (0) target = $region21
  $region20: #{global_metric_mlp_forward.1} parent=0 // pred_region
    _
  $region21: #{global_metric_mlp_forward.1} parent=0 // pred_fallthru
    _
  // Predicated region
  $region22: #{global_metric_mlp_forward.1} parent=0 // pred_check
    _
  $region23: #{global_metric_mlp_forward.1} parent=0 // pred_check_branch
    %31 = sbr.rel (0) target = $region25
  $region24: #{global_metric_mlp_forward.1} parent=0 // pred_region
    _
  $region25: #{global_metric_mlp_forward.1} parent=0 // pred_fallthru
    _
  // Predicated region
  $region26: #{global_metric_mlp_forward.1} parent=0 // pred_check
    _
  $region27: #{global_metric_mlp_forward.1} parent=0 // pred_check_branch
    %33 = sbr.rel (0) target = $region29
  $region28: #{global_metric_mlp_forward.1} parent=0 // pred_region
    _
  $region29: #{global_metric_mlp_forward.1} parent=0 // pred_fallthru
    _
  // Predicated region
  $region30: #{global_metric_mlp_forward.1} parent=0 // pred_check
    _
  $region31: #{global_metric_mlp_forward.1} parent=0 // pred_check_branch
    %35 = sbr.rel (0) target = $region33
  $region32: #{global_metric_mlp_forward.1} parent=0 // pred_region
    _
  $region33: #{global_metric_mlp_forward.1} parent=0 // pred_fallthru
    _
  // Predicated region
  $region34: #{global_metric_mlp_forward.1} parent=0 // pred_check
    _
  $region35: #{global_metric_mlp_forward.1} parent=0 // pred_check_branch
    %37 = sbr.rel (0) target = $region37
  $region36: #{global_metric_mlp_forward.1} parent=0 // pred_region
    _
  $region37: #{global_metric_mlp_forward.1} parent=0 // pred_fallthru
    _
  // Predicated region
  $region38: #{global_metric_mlp_forward.1} parent=0 // pred_check
    _
  $region39: #{global_metric_mlp_forward.1} parent=0 // pred_check_branch
    %39 = sbr.rel (0) target = $region41
  $region40: #{global_metric_mlp_forward.1} parent=0 // pred_region
    _
  $region41: #{global_metric_mlp_forward.1} parent=0 // pred_fallthru
    _
  // Predicated region
  $region42: #{global_metric_mlp_forward.1} parent=0 // pred_check
    _
  $region43: #{global_metric_mlp_forward.1} parent=0 // pred_check_branch
    %41 = sbr.rel (0) target = $region45
  $region44: #{global_metric_mlp_forward.1} parent=0 // pred_region
    _
  $region45: #{global_metric_mlp_forward.1} parent=0 // pred_fallthru
    _
  // Predicated region
  $region46: #{global_metric_mlp_forward.1} parent=0 // pred_check
    _
  $region47: #{global_metric_mlp_forward.1} parent=0 // pred_check_branch
    %43 = sbr.rel (0) target = $region49
  $region48: #{global_metric_mlp_forward.1} parent=0 // pred_region
    _
  $region49: #{global_metric_mlp_forward.1} parent=0 // pred_fallthru
    _
  // Predicated region
  $region50: #{global_metric_mlp_forward.1} parent=0 // pred_check
    _
  $region51: #{global_metric_mlp_forward.1} parent=0 // pred_check_branch
    %45 = sbr.rel (0) target = $region53
  $region52: #{global_metric_mlp_forward.1} parent=0 // pred_region
    _
  $region53: #{global_metric_mlp_forward.1} parent=0 // pred_fallthru
    _
  %v47 = vld [vmem:[%s0] sm:$0xf]
  %v48 = vld [vmem:[%s0 + $0x4] sm:$0xf]
  %v49 = vld [vmem:[%s0 + $0x8] sm:$0xf]
  %v50 = vld [vmem:[%s0 + $0xc] sm:$0xf]
  %v51 = vld [vmem:[%s0 + $0x10] sm:$0xf]
  %v52 = vld [vmem:[%s0 + $0x14] sm:$0xf]
  %v53 = vld [vmem:[%s0 + $0x18] sm:$0xf]
  %v54 = vld [vmem:[%s0 + $0x1c] sm:$0xf]
  %v55 = vld [vmem:[%s0 + $0x20] sm:$0xf]
  %v56 = vld [vmem:[%s0 + $0x24] sm:$0xf]
  %v57 = vld [vmem:[%s0 + $0x28] sm:$0xf]
  %v58 = vld [vmem:[%s0 + $0x2c] sm:$0xf]
  %v59 = vld [vmem:[%s0 + $0x30] sm:$0xf]
  %v60 = vld [vmem:[%s0 + $0x34] sm:$0xf]
  %v61 = vld [vmem:[%s0 + $0x38] sm:$0xf]
  %v62 = vld [vmem:[%s0 + $0x3c] sm:$0xf]
  %v63 = vld [vmem:[%s0 + $0x40] sm:$0xf]
  %v64 = vld [vmem:[%s0 + $0x44] sm:$0xf]
  %v65 = vld [vmem:[%s0 + $0x48] sm:$0xf]
  %v66 = vld [vmem:[%s0 + $0x4c] sm:$0xf]
  %v67 = vld [vmem:[%s0 + $0x50] sm:$0xf]
  %v68 = vld [vmem:[%s0 + $0x54] sm:$0xf]
  %v69 = vld [vmem:[%s0 + $0x58] sm:$0xf]
  %v70 = vld [vmem:[%s0 + $0x5c] sm:$0xf]
  %v71 = vld [vmem:[%s0 + $0x60] sm:$0xf]
  %v72 = vld [vmem:[%s0 + $0x64] sm:$0xf]
  %v73 = vld [vmem:[%s0 + $0x68] sm:$0xf]
  %v74 = vld [vmem:[%s0 + $0x6c] sm:$0xf]
  %v75 = vld [vmem:[%s0 + $0x70] sm:$0xf]
  %v76 = vld [vmem:[%s0 + $0x74] sm:$0xf]
  %v77 = vld [vmem:[%s0 + $0x78] sm:$0xf]
  %v78 = vld [vmem:[%s0 + $0x7c] sm:$0xf]
  %v79 = vld [vmem:[%s0 + $0x80] sm:$0xf]
  %v80 = vld [vmem:[%s0 + $0x84] sm:$0xf]
  %v81 = vld [vmem:[%s0 + $0x88] sm:$0xf]
  %v82 = vld [vmem:[%s0 + $0x8c] sm:$0xf]
  %v83 = vld [vmem:[%s0 + $0x90] sm:$0xf]
  %v84 = vld [vmem:[%s0 + $0x94] sm:$0xf]
  %v85 = vld [vmem:[%s0 + $0x98] sm:$0xf]
  %v86 = vld [vmem:[%s0 + $0x9c] sm:$0xf]
  %v87 = vld [vmem:[%s0 + $0xa0] sm:$0xf]
  %v88 = vld [vmem:[%s0 + $0xa4] sm:$0xf]
  %v89 = vld [vmem:[%s0 + $0xa8] sm:$0xf]
  %v90 = vld [vmem:[%s0 + $0xac] sm:$0xf]
  %v91 = vld [vmem:[%s0 + $0xb0] sm:$0xf]
  %v92 = vld [vmem:[%s0 + $0xb4] sm:$0xf]
  %v93 = vld [vmem:[%s0 + $0xb8] sm:$0xf]
  %v94 = vld [vmem:[%s0 + $0xbc] sm:$0xf]
  %v95 = vld [vmem:[%s0 + $0xc0] sm:$0xf]
  %v96 = vld [vmem:[%s0 + $0xc4] sm:$0xf]
  %v97 = vld [vmem:[%s0 + $0xc8] sm:$0xf]
  %v98 = vld [vmem:[%s0 + $0xcc] sm:$0xf]
  %v99 = vld [vmem:[%s0 + $0xd0] sm:$0xf]
  %v100 = vld [vmem:[%s0 + $0xd4] sm:$0xf]
  %v101 = vld [vmem:[%s0 + $0xd8] sm:$0xf]
  %v102 = vld [vmem:[%s0 + $0xdc] sm:$0xf]
  %v103 = vld [vmem:[%s0 + $0xe0] sm:$0xf]
  %v104 = vld [vmem:[%s0 + $0xe4] sm:$0xf]
  %v105 = vld [vmem:[%s0 + $0xe8] sm:$0xf]
  %v106 = vld [vmem:[%s0 + $0xec] sm:$0xf]
  %v107 = vld [vmem:[%s0 + $0xf0] sm:$0xf]
  %v108 = vld [vmem:[%s0 + $0xf4] sm:$0xf]
  %v109 = vld [vmem:[%s0 + $0xf8] sm:$0xf]
  %v110 = vld [vmem:[%s0 + $0xfc] sm:$0xf]
  %v111 = vld [vmem:[%s2] sm:$0xff]
  %v112 = vld [vmem:[%s2 + $0x8] sm:$0xff]
  %v113 = vld [vmem:[%s1] sm:$0xf]
  %v114 = vld [vmem:[%s1 + $0x4] sm:$0xf]
  %v115 = vld [vmem:[%s1 + $0x8] sm:$0xf]
  %v116 = vld [vmem:[%s1 + $0xc] sm:$0xf]
  %v117 = vld [vmem:[%s1 + $0x10] sm:$0xf]
  %v118 = vld [vmem:[%s1 + $0x14] sm:$0xf]
  %v119 = vld [vmem:[%s1 + $0x18] sm:$0xf]
  %v120 = vld [vmem:[%s1 + $0x1c] sm:$0xf]
  %v121 = vld [vmem:[%s1 + $0x20] sm:$0xf]
  %v122 = vld [vmem:[%s1 + $0x24] sm:$0xf]
  %v123 = vld [vmem:[%s1 + $0x28] sm:$0xf]
  %v124 = vld [vmem:[%s1 + $0x2c] sm:$0xf]
  %v125 = vld [vmem:[%s1 + $0x30] sm:$0xf]
  %v126 = vld [vmem:[%s1 + $0x34] sm:$0xf]
  %v127 = vld [vmem:[%s1 + $0x38] sm:$0xf]
  %v128 = vld [vmem:[%s1 + $0x3c] sm:$0xf]
  %v129 = vld [vmem:[%s1 + $0x40] sm:$0xf]
  %v130 = vld [vmem:[%s1 + $0x44] sm:$0xf]
  %v131 = vld [vmem:[%s1 + $0x48] sm:$0xf]
  %v132 = vld [vmem:[%s1 + $0x4c] sm:$0xf]
  %v133 = vld [vmem:[%s1 + $0x50] sm:$0xf]
  %v134 = vld [vmem:[%s1 + $0x54] sm:$0xf]
  %v135 = vld [vmem:[%s1 + $0x58] sm:$0xf]
  %v136 = vld [vmem:[%s1 + $0x5c] sm:$0xf]
  %v137 = vld [vmem:[%s1 + $0x60] sm:$0xf]
  %v138 = vld [vmem:[%s1 + $0x64] sm:$0xf]
  %v139 = vld [vmem:[%s1 + $0x68] sm:$0xf]
  %v140 = vld [vmem:[%s1 + $0x6c] sm:$0xf]
  %v141 = vld [vmem:[%s1 + $0x70] sm:$0xf]
  %v142 = vld [vmem:[%s1 + $0x74] sm:$0xf]
  %v143 = vld [vmem:[%s1 + $0x78] sm:$0xf]
  %v144 = vld [vmem:[%s1 + $0x7c] sm:$0xf]
  %v145 = vld [vmem:[%s1 + $0x80] sm:$0xf]
  %v146 = vld [vmem:[%s1 + $0x84] sm:$0xf]
  %v147 = vld [vmem:[%s1 + $0x88] sm:$0xf]
  %v148 = vld [vmem:[%s1 + $0x8c] sm:$0xf]
  %v149 = vld [vmem:[%s1 + $0x90] sm:$0xf]
  %v150 = vld [vmem:[%s1 + $0x94] sm:$0xf]
  %v151 = vld [vmem:[%s1 + $0x98] sm:$0xf]
  %v152 = vld [vmem:[%s1 + $0x9c] sm:$0xf]
  %v153 = vld [vmem:[%s1 + $0xa0] sm:$0xf]
  %v154 = vld [vmem:[%s1 + $0xa4] sm:$0xf]
  %v155 = vld [vmem:[%s1 + $0xa8] sm:$0xf]
  %v156 = vld [vmem:[%s1 + $0xac] sm:$0xf]
  %v157 = vld [vmem:[%s1 + $0xb0] sm:$0xf]
  %v158 = vld [vmem:[%s1 + $0xb4] sm:$0xf]
  %v159 = vld [vmem:[%s1 + $0xb8] sm:$0xf]
  %v160 = vld [vmem:[%s1 + $0xbc] sm:$0xf]
  %v161 = vld [vmem:[%s1 + $0xc0] sm:$0xf]
  %v162 = vld [vmem:[%s1 + $0xc4] sm:$0xf]
  %v163 = vld [vmem:[%s1 + $0xc8] sm:$0xf]
  %v164 = vld [vmem:[%s1 + $0xcc] sm:$0xf]
  %v165 = vld [vmem:[%s1 + $0xd0] sm:$0xf]
  %v166 = vld [vmem:[%s1 + $0xd4] sm:$0xf]
  %v167 = vld [vmem:[%s1 + $0xd8] sm:$0xf]
  %v168 = vld [vmem:[%s1 + $0xdc] sm:$0xf]
  %v169 = vld [vmem:[%s1 + $0xe0] sm:$0xf]
  %v170 = vld [vmem:[%s1 + $0xe4] sm:$0xf]
  %v171 = vld [vmem:[%s1 + $0xe8] sm:$0xf]
  %v172 = vld [vmem:[%s1 + $0xec] sm:$0xf]
  %v173 = vld [vmem:[%s1 + $0xf0] sm:$0xf]
  %v174 = vld [vmem:[%s1 + $0xf4] sm:$0xf]
  %v175 = vld [vmem:[%s1 + $0xf8] sm:$0xf]
  %v176 = vld [vmem:[%s1 + $0xfc] sm:$0xf]
  %v177 = vld [vmem:[%s3] sm:$0xff]
  %v178 = vld [vmem:[%s3 + $0x8] sm:$0xff]
  %v243 = vunpack.c.l.b16 %v113
  %v244 = vunpack.c.l.b16 %v114
  %v245 = vunpack.c.l.b16 %v115
  %v246 = vunpack.c.l.b16 %v116
  %v247 = vunpack.c.l.b16 %v117
  %v248 = vunpack.c.l.b16 %v118
  %v249 = vunpack.c.l.b16 %v119
  %v250 = vunpack.c.l.b16 %v120
  %v251 = vunpack.c.l.b16 %v121
  %v252 = vunpack.c.l.b16 %v122
  %v253 = vunpack.c.l.b16 %v123
  %v254 = vunpack.c.l.b16 %v124
  %v255 = vunpack.c.l.b16 %v125
  %v256 = vunpack.c.l.b16 %v126
  %v257 = vunpack.c.l.b16 %v127
  %v258 = vunpack.c.l.b16 %v128
  %v259 = vunpack.c.l.b16 %v129
  %v260 = vunpack.c.l.b16 %v130
  %v261 = vunpack.c.l.b16 %v131
  %v262 = vunpack.c.l.b16 %v132
  %v263 = vunpack.c.l.b16 %v133
  %v264 = vunpack.c.l.b16 %v134
  %v265 = vunpack.c.l.b16 %v135
  %v266 = vunpack.c.l.b16 %v136
  %v267 = vunpack.c.l.b16 %v137
  %v268 = vunpack.c.l.b16 %v138
  %v269 = vunpack.c.l.b16 %v139
  %v270 = vunpack.c.l.b16 %v140
  %v271 = vunpack.c.l.b16 %v141
  %v272 = vunpack.c.l.b16 %v142
  %v273 = vunpack.c.l.b16 %v143
  %v274 = vunpack.c.l.b16 %v144
  %v275 = vunpack.c.l.b16 %v145
  %v276 = vunpack.c.l.b16 %v146
  %v277 = vunpack.c.l.b16 %v147
  %v278 = vunpack.c.l.b16 %v148
  %v279 = vunpack.c.l.b16 %v149
  %v280 = vunpack.c.l.b16 %v150
  %v281 = vunpack.c.l.b16 %v151
  %v282 = vunpack.c.l.b16 %v152
  %v283 = vunpack.c.l.b16 %v153
  %v284 = vunpack.c.l.b16 %v154
  %v285 = vunpack.c.l.b16 %v155
  %v286 = vunpack.c.l.b16 %v156
  %v287 = vunpack.c.l.b16 %v157
  %v288 = vunpack.c.l.b16 %v158
  %v289 = vunpack.c.l.b16 %v159
  %v290 = vunpack.c.l.b16 %v160
  %v291 = vunpack.c.l.b16 %v161
  %v292 = vunpack.c.l.b16 %v162
  %v293 = vunpack.c.l.b16 %v163
  %v294 = vunpack.c.l.b16 %v164
  %v295 = vunpack.c.l.b16 %v165
  %v296 = vunpack.c.l.b16 %v166
  %v297 = vunpack.c.l.b16 %v167
  %v298 = vunpack.c.l.b16 %v168
  %v299 = vunpack.c.l.b16 %v169
  %v300 = vunpack.c.l.b16 %v170
  %v301 = vunpack.c.l.b16 %v171
  %v302 = vunpack.c.l.b16 %v172
  %v303 = vunpack.c.l.b16 %v173
  %v304 = vunpack.c.l.b16 %v174
  %v305 = vunpack.c.l.b16 %v175
  %v306 = vunpack.c.l.b16 %v176
  %v307 = vpack.c.b16 %v244, %v243
  %v308 = vpack.c.b16 %v246, %v245
  %v309 = vpack.c.b16 %v248, %v247
  %v310 = vpack.c.b16 %v250, %v249
  %v311 = vpack.c.b16 %v252, %v251
  %v312 = vpack.c.b16 %v254, %v253
  %v313 = vpack.c.b16 %v256, %v255
  %v314 = vpack.c.b16 %v258, %v257
  %v315 = vpack.c.b16 %v260, %v259
  %v316 = vpack.c.b16 %v262, %v261
  %v317 = vpack.c.b16 %v264, %v263
  %v318 = vpack.c.b16 %v266, %v265
  %v319 = vpack.c.b16 %v268, %v267
  %v320 = vpack.c.b16 %v270, %v269
  %v321 = vpack.c.b16 %v272, %v271
  %v322 = vpack.c.b16 %v274, %v273
  %v323 = vpack.c.b16 %v276, %v275
  %v324 = vpack.c.b16 %v278, %v277
  %v325 = vpack.c.b16 %v280, %v279
  %v326 = vpack.c.b16 %v282, %v281
  %v327 = vpack.c.b16 %v284, %v283
  %v328 = vpack.c.b16 %v286, %v285
  %v329 = vpack.c.b16 %v288, %v287
  %v330 = vpack.c.b16 %v290, %v289
  %v331 = vpack.c.b16 %v292, %v291
  %v332 = vpack.c.b16 %v294, %v293
  %v333 = vpack.c.b16 %v296, %v295
  %v334 = vpack.c.b16 %v298, %v297
  %v335 = vpack.c.b16 %v300, %v299
  %v336 = vpack.c.b16 %v302, %v301
  %v337 = vpack.c.b16 %v304, %v303
  %v338 = vpack.c.b16 %v306, %v305
  %v341 = vunpack.c.l.b16 %v177
  %v342 = vunpack.c.h.b16 %v177
  %v343 = vunpack.c.l.b16 %v178
  %v344 = vunpack.c.h.b16 %v178
  %v345 = vpack.c.b16 %v343, %v341
  %v346 = vpack.c.b16 %v344, %v342
  %vm349 = vcmask 130048
  %v351 = vsel %vm349, %v307, 0
  %v354 = vsel %vm349, %v308, 0
  %v357 = vsel %vm349, %v309, 0
  %v360 = vsel %vm349, %v310, 0
  %v363 = vsel %vm349, %v311, 0
  %v366 = vsel %vm349, %v312, 0
  %v369 = vsel %vm349, %v313, 0
  %v372 = vsel %vm349, %v314, 0
  %v375 = vsel %vm349, %v315, 0
  %v378 = vsel %vm349, %v316, 0
  %v381 = vsel %vm349, %v317, 0
  %v384 = vsel %vm349, %v318, 0
  %v387 = vsel %vm349, %v319, 0
  %v390 = vsel %vm349, %v320, 0
  %v393 = vsel %vm349, %v321, 0
  %v396 = vsel %vm349, %v322, 0
  %v399 = vsel %vm349, %v323, 0
  %v402 = vsel %vm349, %v324, 0
  %v405 = vsel %vm349, %v325, 0
  %v408 = vsel %vm349, %v326, 0
  %v411 = vsel %vm349, %v327, 0
  %v414 = vsel %vm349, %v328, 0
  %v417 = vsel %vm349, %v329, 0
  %v420 = vsel %vm349, %v330, 0
  %v423 = vsel %vm349, %v331, 0
  %v426 = vsel %vm349, %v332, 0
  %v429 = vsel %vm349, %v333, 0
  %v432 = vsel %vm349, %v334, 0
  %v435 = vsel %vm349, %v335, 0
  %v438 = vsel %vm349, %v336, 0
  %v441 = vsel %vm349, %v337, 0
  %v444 = vsel %vm349, %v338, 0
  %446 = vmatpush.bf16.msra.mxu0 0
  %447 = vmatpush.bf16.msra.mxu0 0
  %448 = vmatpush.bf16.msra.mxu0 0
  %449 = vmatpush.bf16.msra.mxu0 0
  %450 = vmatpush.bf16.msra.mxu0 0
  %451 = vmatpush.bf16.msra.mxu0 0
  %452 = vmatpush.bf16.msra.mxu0 0
  %453 = vmatpush.bf16.msra.mxu0 %v345
  %454 = vmatmul.bf16.gmra.mxu0 %v351
  %v455 = vpop.f32.mrf.mxu0
  %v456 = vadd.f32 0.0, %v455
  %v457 = vpop.f32.mrf.mxu0
  %v458 = vadd.f32 0.0, %v457
  %459 = vmatmul.bf16.gmra.mxu0 %v354
  %v460 = vpop.f32.mrf.mxu0
  %v461 = vadd.f32 0.0, %v460
  %v462 = vpop.f32.mrf.mxu0
  %v463 = vadd.f32 0.0, %v462
  %464 = vmatmul.bf16.gmra.mxu0 %v357
  %v465 = vpop.f32.mrf.mxu0
  %v466 = vadd.f32 0.0, %v465
  %v467 = vpop.f32.mrf.mxu0
  %v468 = vadd.f32 0.0, %v467
  %469 = vmatmul.bf16.gmra.mxu0 %v360
  %v470 = vpop.f32.mrf.mxu0
  %v471 = vadd.f32 0.0, %v470
  %v472 = vpop.f32.mrf.mxu0
  %v473 = vadd.f32 0.0, %v472
  %474 = vmatmul.bf16.gmra.mxu0 %v363
  %v475 = vpop.f32.mrf.mxu0
  %v476 = vadd.f32 0.0, %v475
  %v477 = vpop.f32.mrf.mxu0
  %v478 = vadd.f32 0.0, %v477
  %479 = vmatmul.bf16.gmra.mxu0 %v366
  %v480 = vpop.f32.mrf.mxu0
  %v481 = vadd.f32 0.0, %v480
  %v482 = vpop.f32.mrf.mxu0
  %v483 = vadd.f32 0.0, %v482
  %484 = vmatmul.bf16.gmra.mxu0 %v369
  %v485 = vpop.f32.mrf.mxu0
  %v486 = vadd.f32 0.0, %v485
  %v487 = vpop.f32.mrf.mxu0
  %v488 = vadd.f32 0.0, %v487
  %489 = vmatmul.bf16.gmra.mxu0 %v372
  %v490 = vpop.f32.mrf.mxu0
  %v491 = vadd.f32 0.0, %v490
  %v492 = vpop.f32.mrf.mxu0
  %v493 = vadd.f32 0.0, %v492
  %494 = vmatmul.bf16.gmra.mxu0 %v375
  %v495 = vpop.f32.mrf.mxu0
  %v496 = vadd.f32 0.0, %v495
  %v497 = vpop.f32.mrf.mxu0
  %v498 = vadd.f32 0.0, %v497
  %499 = vmatmul.bf16.gmra.mxu0 %v378
  %v500 = vpop.f32.mrf.mxu0
  %v501 = vadd.f32 0.0, %v500
  %v502 = vpop.f32.mrf.mxu0
  %v503 = vadd.f32 0.0, %v502
  %504 = vmatmul.bf16.gmra.mxu0 %v381
  %v505 = vpop.f32.mrf.mxu0
  %v506 = vadd.f32 0.0, %v505
  %v507 = vpop.f32.mrf.mxu0
  %v508 = vadd.f32 0.0, %v507
  %509 = vmatmul.bf16.gmra.mxu0 %v384
  %v510 = vpop.f32.mrf.mxu0
  %v511 = vadd.f32 0.0, %v510
  %v512 = vpop.f32.mrf.mxu0
  %v513 = vadd.f32 0.0, %v512
  %514 = vmatmul.bf16.gmra.mxu0 %v387
  %v515 = vpop.f32.mrf.mxu0
  %v516 = vadd.f32 0.0, %v515
  %v517 = vpop.f32.mrf.mxu0
  %v518 = vadd.f32 0.0, %v517
  %519 = vmatmul.bf16.gmra.mxu0 %v390
  %v520 = vpop.f32.mrf.mxu0
  %v521 = vadd.f32 0.0, %v520
  %v522 = vpop.f32.mrf.mxu0
  %v523 = vadd.f32 0.0, %v522
  %524 = vmatmul.bf16.gmra.mxu0 %v393
  %v525 = vpop.f32.mrf.mxu0
  %v526 = vadd.f32 0.0, %v525
  %v527 = vpop.f32.mrf.mxu0
  %v528 = vadd.f32 0.0, %v527
  %529 = vmatmul.bf16.gmra.mxu0 %v396
  %v530 = vpop.f32.mrf.mxu0
  %v531 = vadd.f32 0.0, %v530
  %v532 = vpop.f32.mrf.mxu0
  %v533 = vadd.f32 0.0, %v532
  %534 = vmatmul.bf16.gmra.mxu0 %v399
  %v535 = vpop.f32.mrf.mxu0
  %v536 = vadd.f32 0.0, %v535
  %v537 = vpop.f32.mrf.mxu0
  %v538 = vadd.f32 0.0, %v537
  %539 = vmatmul.bf16.gmra.mxu0 %v402
  %v540 = vpop.f32.mrf.mxu0
  %v541 = vadd.f32 0.0, %v540
  %v542 = vpop.f32.mrf.mxu0
  %v543 = vadd.f32 0.0, %v542
  %544 = vmatmul.bf16.gmra.mxu0 %v405
  %v545 = vpop.f32.mrf.mxu0
  %v546 = vadd.f32 0.0, %v545
  %v547 = vpop.f32.mrf.mxu0
  %v548 = vadd.f32 0.0, %v547
  %549 = vmatmul.bf16.gmra.mxu0 %v408
  %v550 = vpop.f32.mrf.mxu0
  %v551 = vadd.f32 0.0, %v550
  %v552 = vpop.f32.mrf.mxu0
  %v553 = vadd.f32 0.0, %v552
  %554 = vmatmul.bf16.gmra.mxu0 %v411
  %v555 = vpop.f32.mrf.mxu0
  %v556 = vadd.f32 0.0, %v555
  %v557 = vpop.f32.mrf.mxu0
  %v558 = vadd.f32 0.0, %v557
  %559 = vmatmul.bf16.gmra.mxu0 %v414
  %v560 = vpop.f32.mrf.mxu0
  %v561 = vadd.f32 0.0, %v560
  %v562 = vpop.f32.mrf.mxu0
  %v563 = vadd.f32 0.0, %v562
  %564 = vmatmul.bf16.gmra.mxu0 %v417
  %v565 = vpop.f32.mrf.mxu0
  %v566 = vadd.f32 0.0, %v565
  %v567 = vpop.f32.mrf.mxu0
  %v568 = vadd.f32 0.0, %v567
  %569 = vmatmul.bf16.gmra.mxu0 %v420
  %v570 = vpop.f32.mrf.mxu0
  %v571 = vadd.f32 0.0, %v570
  %v572 = vpop.f32.mrf.mxu0
  %v573 = vadd.f32 0.0, %v572
  %574 = vmatmul.bf16.gmra.mxu0 %v423
  %v575 = vpop.f32.mrf.mxu0
  %v576 = vadd.f32 0.0, %v575
  %v577 = vpop.f32.mrf.mxu0
  %v578 = vadd.f32 0.0, %v577
  %579 = vmatmul.bf16.gmra.mxu0 %v426
  %v580 = vpop.f32.mrf.mxu0
  %v581 = vadd.f32 0.0, %v580
  %v582 = vpop.f32.mrf.mxu0
  %v583 = vadd.f32 0.0, %v582
  %584 = vmatmul.bf16.gmra.mxu0 %v429
  %v585 = vpop.f32.mrf.mxu0
  %v586 = vadd.f32 0.0, %v585
  %v587 = vpop.f32.mrf.mxu0
  %v588 = vadd.f32 0.0, %v587
  %589 = vmatmul.bf16.gmra.mxu0 %v432
  %v590 = vpop.f32.mrf.mxu0
  %v591 = vadd.f32 0.0, %v590
  %v592 = vpop.f32.mrf.mxu0
  %v593 = vadd.f32 0.0, %v592
  %594 = vmatmul.bf16.gmra.mxu0 %v435
  %v595 = vpop.f32.mrf.mxu0
  %v596 = vadd.f32 0.0, %v595
  %v597 = vpop.f32.mrf.mxu0
  %v598 = vadd.f32 0.0, %v597
  %599 = vmatmul.bf16.gmra.mxu0 %v438
  %v600 = vpop.f32.mrf.mxu0
  %v601 = vadd.f32 0.0, %v600
  %v602 = vpop.f32.mrf.mxu0
  %v603 = vadd.f32 0.0, %v602
  %604 = vmatmul.bf16.gmra.mxu0 %v441
  %v605 = vpop.f32.mrf.mxu0
  %v606 = vadd.f32 0.0, %v605
  %v607 = vpop.f32.mrf.mxu0
  %v608 = vadd.f32 0.0, %v607
  %609 = vmatmul.bf16.gmra.mxu0 %v444
  %v610 = vpop.f32.mrf.mxu0
  %v611 = vadd.f32 0.0, %v610
  %v612 = vpop.f32.mrf.mxu0
  %v613 = vadd.f32 0.0, %v612
  %614 = vdwg.mxu0
  %615 = vmatpush.bf16.msra.mxu0 0
  %616 = vmatpush.bf16.msra.mxu0 0
  %617 = vmatpush.bf16.msra.mxu0 0
  %618 = vmatpush.bf16.msra.mxu0 0
  %619 = vmatpush.bf16.msra.mxu0 0
  %620 = vmatpush.bf16.msra.mxu0 0
  %621 = vmatpush.bf16.msra.mxu0 0
  %622 = vmatpush.bf16.msra.mxu0 %v346
  %623 = vmatmul.bf16.gmra.mxu0 %v351
  %v624 = vpop.f32.mrf.mxu0
  %v625 = vadd.f32 0.0, %v624
  %v626 = vpop.f32.mrf.mxu0
  %v627 = vadd.f32 0.0, %v626
  %628 = vmatmul.bf16.gmra.mxu0 %v354
  %v629 = vpop.f32.mrf.mxu0
  %v630 = vadd.f32 0.0, %v629
  %v631 = vpop.f32.mrf.mxu0
  %v632 = vadd.f32 0.0, %v631
  %633 = vmatmul.bf16.gmra.mxu0 %v357
  %v634 = vpop.f32.mrf.mxu0
  %v635 = vadd.f32 0.0, %v634
  %v636 = vpop.f32.mrf.mxu0
  %v637 = vadd.f32 0.0, %v636
  %638 = vmatmul.bf16.gmra.mxu0 %v360
  %v639 = vpop.f32.mrf.mxu0
  %v640 = vadd.f32 0.0, %v639
  %v641 = vpop.f32.mrf.mxu0
  %v642 = vadd.f32 0.0, %v641
  %643 = vmatmul.bf16.gmra.mxu0 %v363
  %v644 = vpop.f32.mrf.mxu0
  %v645 = vadd.f32 0.0, %v644
  %v646 = vpop.f32.mrf.mxu0
  %v647 = vadd.f32 0.0, %v646
  %648 = vmatmul.bf16.gmra.mxu0 %v366
  %v649 = vpop.f32.mrf.mxu0
  %v650 = vadd.f32 0.0, %v649
  %v651 = vpop.f32.mrf.mxu0
  %v652 = vadd.f32 0.0, %v651
  %653 = vmatmul.bf16.gmra.mxu0 %v369
  %v654 = vpop.f32.mrf.mxu0
  %v655 = vadd.f32 0.0, %v654
  %v656 = vpop.f32.mrf.mxu0
  %v657 = vadd.f32 0.0, %v656
  %658 = vmatmul.bf16.gmra.mxu0 %v372
  %v659 = vpop.f32.mrf.mxu0
  %v660 = vadd.f32 0.0, %v659
  %v661 = vpop.f32.mrf.mxu0
  %v662 = vadd.f32 0.0, %v661
  %663 = vmatmul.bf16.gmra.mxu0 %v375
  %v664 = vpop.f32.mrf.mxu0
  %v665 = vadd.f32 0.0, %v664
  %v666 = vpop.f32.mrf.mxu0
  %v667 = vadd.f32 0.0, %v666
  %668 = vmatmul.bf16.gmra.mxu0 %v378
  %v669 = vpop.f32.mrf.mxu0
  %v670 = vadd.f32 0.0, %v669
  %v671 = vpop.f32.mrf.mxu0
  %v672 = vadd.f32 0.0, %v671
  %673 = vmatmul.bf16.gmra.mxu0 %v381
  %v674 = vpop.f32.mrf.mxu0
  %v675 = vadd.f32 0.0, %v674
  %v676 = vpop.f32.mrf.mxu0
  %v677 = vadd.f32 0.0, %v676
  %678 = vmatmul.bf16.gmra.mxu0 %v384
  %v679 = vpop.f32.mrf.mxu0
  %v680 = vadd.f32 0.0, %v679
  %v681 = vpop.f32.mrf.mxu0
  %v682 = vadd.f32 0.0, %v681
  %683 = vmatmul.bf16.gmra.mxu0 %v387
  %v684 = vpop.f32.mrf.mxu0
  %v685 = vadd.f32 0.0, %v684
  %v686 = vpop.f32.mrf.mxu0
  %v687 = vadd.f32 0.0, %v686
  %688 = vmatmul.bf16.gmra.mxu0 %v390
  %v689 = vpop.f32.mrf.mxu0
  %v690 = vadd.f32 0.0, %v689
  %v691 = vpop.f32.mrf.mxu0
  %v692 = vadd.f32 0.0, %v691
  %693 = vmatmul.bf16.gmra.mxu0 %v393
  %v694 = vpop.f32.mrf.mxu0
  %v695 = vadd.f32 0.0, %v694
  %v696 = vpop.f32.mrf.mxu0
  %v697 = vadd.f32 0.0, %v696
  %698 = vmatmul.bf16.gmra.mxu0 %v396
  %v699 = vpop.f32.mrf.mxu0
  %v700 = vadd.f32 0.0, %v699
  %v701 = vpop.f32.mrf.mxu0
  %v702 = vadd.f32 0.0, %v701
  %703 = vmatmul.bf16.gmra.mxu0 %v399
  %v704 = vpop.f32.mrf.mxu0
  %v705 = vadd.f32 0.0, %v704
  %v706 = vpop.f32.mrf.mxu0
  %v707 = vadd.f32 0.0, %v706
  %708 = vmatmul.bf16.gmra.mxu0 %v402
  %v709 = vpop.f32.mrf.mxu0
  %v710 = vadd.f32 0.0, %v709
  %v711 = vpop.f32.mrf.mxu0
  %v712 = vadd.f32 0.0, %v711
  %713 = vmatmul.bf16.gmra.mxu0 %v405
  %v714 = vpop.f32.mrf.mxu0
  %v715 = vadd.f32 0.0, %v714
  %v716 = vpop.f32.mrf.mxu0
  %v717 = vadd.f32 0.0, %v716
  %718 = vmatmul.bf16.gmra.mxu0 %v408
  %v719 = vpop.f32.mrf.mxu0
  %v720 = vadd.f32 0.0, %v719
  %v721 = vpop.f32.mrf.mxu0
  %v722 = vadd.f32 0.0, %v721
  %723 = vmatmul.bf16.gmra.mxu0 %v411
  %v724 = vpop.f32.mrf.mxu0
  %v725 = vadd.f32 0.0, %v724
  %v726 = vpop.f32.mrf.mxu0
  %v727 = vadd.f32 0.0, %v726
  %728 = vmatmul.bf16.gmra.mxu0 %v414
  %v729 = vpop.f32.mrf.mxu0
  %v730 = vadd.f32 0.0, %v729
  %v731 = vpop.f32.mrf.mxu0
  %v732 = vadd.f32 0.0, %v731
  %733 = vmatmul.bf16.gmra.mxu0 %v417
  %v734 = vpop.f32.mrf.mxu0
  %v735 = vadd.f32 0.0, %v734
  %v736 = vpop.f32.mrf.mxu0
  %v737 = vadd.f32 0.0, %v736
  %738 = vmatmul.bf16.gmra.mxu0 %v420
  %v739 = vpop.f32.mrf.mxu0
  %v740 = vadd.f32 0.0, %v739
  %v741 = vpop.f32.mrf.mxu0
  %v742 = vadd.f32 0.0, %v741
  %743 = vmatmul.bf16.gmra.mxu0 %v423
  %v744 = vpop.f32.mrf.mxu0
  %v745 = vadd.f32 0.0, %v744
  %v746 = vpop.f32.mrf.mxu0
  %v747 = vadd.f32 0.0, %v746
  %748 = vmatmul.bf16.gmra.mxu0 %v426
  %v749 = vpop.f32.mrf.mxu0
  %v750 = vadd.f32 0.0, %v749
  %v751 = vpop.f32.mrf.mxu0
  %v752 = vadd.f32 0.0, %v751
  %753 = vmatmul.bf16.gmra.mxu0 %v429
  %v754 = vpop.f32.mrf.mxu0
  %v755 = vadd.f32 0.0, %v754
  %v756 = vpop.f32.mrf.mxu0
  %v757 = vadd.f32 0.0, %v756
  %758 = vmatmul.bf16.gmra.mxu0 %v432
  %v759 = vpop.f32.mrf.mxu0
  %v760 = vadd.f32 0.0, %v759
  %v761 = vpop.f32.mrf.mxu0
  %v762 = vadd.f32 0.0, %v761
  %763 = vmatmul.bf16.gmra.mxu0 %v435
  %v764 = vpop.f32.mrf.mxu0
  %v765 = vadd.f32 0.0, %v764
  %v766 = vpop.f32.mrf.mxu0
  %v767 = vadd.f32 0.0, %v766
  %768 = vmatmul.bf16.gmra.mxu0 %v438
  %v769 = vpop.f32.mrf.mxu0
  %v770 = vadd.f32 0.0, %v769
  %v771 = vpop.f32.mrf.mxu0
  %v772 = vadd.f32 0.0, %v771
  %773 = vmatmul.bf16.gmra.mxu0 %v441
  %v774 = vpop.f32.mrf.mxu0
  %v775 = vadd.f32 0.0, %v774
  %v776 = vpop.f32.mrf.mxu0
  %v777 = vadd.f32 0.0, %v776
  %778 = vmatmul.bf16.gmra.mxu0 %v444
  %v779 = vpop.f32.mrf.mxu0
  %v780 = vadd.f32 0.0, %v779
  %v781 = vpop.f32.mrf.mxu0
  %v782 = vadd.f32 0.0, %v781
  %783 = vdwg.mxu0
  %v848 = vunpack.c.l.b16 %v47
  %v849 = vunpack.c.l.b16 %v48
  %v850 = vunpack.c.l.b16 %v49
  %v851 = vunpack.c.l.b16 %v50
  %v852 = vunpack.c.l.b16 %v51
  %v853 = vunpack.c.l.b16 %v52
  %v854 = vunpack.c.l.b16 %v53
  %v855 = vunpack.c.l.b16 %v54
  %v856 = vunpack.c.l.b16 %v55
  %v857 = vunpack.c.l.b16 %v56
  %v858 = vunpack.c.l.b16 %v57
  %v859 = vunpack.c.l.b16 %v58
  %v860 = vunpack.c.l.b16 %v59
  %v861 = vunpack.c.l.b16 %v60
  %v862 = vunpack.c.l.b16 %v61
  %v863 = vunpack.c.l.b16 %v62
  %v864 = vunpack.c.l.b16 %v63
  %v865 = vunpack.c.l.b16 %v64
  %v866 = vunpack.c.l.b16 %v65
  %v867 = vunpack.c.l.b16 %v66
  %v868 = vunpack.c.l.b16 %v67
  %v869 = vunpack.c.l.b16 %v68
  %v870 = vunpack.c.l.b16 %v69
  %v871 = vunpack.c.l.b16 %v70
  %v872 = vunpack.c.l.b16 %v71
  %v873 = vunpack.c.l.b16 %v72
  %v874 = vunpack.c.l.b16 %v73
  %v875 = vunpack.c.l.b16 %v74
  %v876 = vunpack.c.l.b16 %v75
  %v877 = vunpack.c.l.b16 %v76
  %v878 = vunpack.c.l.b16 %v77
  %v879 = vunpack.c.l.b16 %v78
  %v880 = vunpack.c.l.b16 %v79
  %v881 = vunpack.c.l.b16 %v80
  %v882 = vunpack.c.l.b16 %v81
  %v883 = vunpack.c.l.b16 %v82
  %v884 = vunpack.c.l.b16 %v83
  %v885 = vunpack.c.l.b16 %v84
  %v886 = vunpack.c.l.b16 %v85
  %v887 = vunpack.c.l.b16 %v86
  %v888 = vunpack.c.l.b16 %v87
  %v889 = vunpack.c.l.b16 %v88
  %v890 = vunpack.c.l.b16 %v89
  %v891 = vunpack.c.l.b16 %v90
  %v892 = vunpack.c.l.b16 %v91
  %v893 = vunpack.c.l.b16 %v92
  %v894 = vunpack.c.l.b16 %v93
  %v895 = vunpack.c.l.b16 %v94
  %v896 = vunpack.c.l.b16 %v95
  %v897 = vunpack.c.l.b16 %v96
  %v898 = vunpack.c.l.b16 %v97
  %v899 = vunpack.c.l.b16 %v98
  %v900 = vunpack.c.l.b16 %v99
  %v901 = vunpack.c.l.b16 %v100
  %v902 = vunpack.c.l.b16 %v101
  %v903 = vunpack.c.l.b16 %v102
  %v904 = vunpack.c.l.b16 %v103
  %v905 = vunpack.c.l.b16 %v104
  %v906 = vunpack.c.l.b16 %v105
  %v907 = vunpack.c.l.b16 %v106
  %v908 = vunpack.c.l.b16 %v107
  %v909 = vunpack.c.l.b16 %v108
  %v910 = vunpack.c.l.b16 %v109
  %v911 = vunpack.c.l.b16 %v110
  %v912 = vpack.c.b16 %v849, %v848
  %v913 = vpack.c.b16 %v851, %v850
  %v914 = vpack.c.b16 %v853, %v852
  %v915 = vpack.c.b16 %v855, %v854
  %v916 = vpack.c.b16 %v857, %v856
  %v917 = vpack.c.b16 %v859, %v858
  %v918 = vpack.c.b16 %v861, %v860
  %v919 = vpack.c.b16 %v863, %v862
  %v920 = vpack.c.b16 %v865, %v864
  %v921 = vpack.c.b16 %v867, %v866
  %v922 = vpack.c.b16 %v869, %v868
  %v923 = vpack.c.b16 %v871, %v870
  %v924 = vpack.c.b16 %v873, %v872
  %v925 = vpack.c.b16 %v875, %v874
  %v926 = vpack.c.b16 %v877, %v876
  %v927 = vpack.c.b16 %v879, %v878
  %v928 = vpack.c.b16 %v881, %v880
  %v929 = vpack.c.b16 %v883, %v882
  %v930 = vpack.c.b16 %v885, %v884
  %v931 = vpack.c.b16 %v887, %v886
  %v932 = vpack.c.b16 %v889, %v888
  %v933 = vpack.c.b16 %v891, %v890
  %v934 = vpack.c.b16 %v893, %v892
  %v935 = vpack.c.b16 %v895, %v894
  %v936 = vpack.c.b16 %v897, %v896
  %v937 = vpack.c.b16 %v899, %v898
  %v938 = vpack.c.b16 %v901, %v900
  %v939 = vpack.c.b16 %v903, %v902
  %v940 = vpack.c.b16 %v905, %v904
  %v941 = vpack.c.b16 %v907, %v906
  %v942 = vpack.c.b16 %v909, %v908
  %v943 = vpack.c.b16 %v911, %v910
  %v946 = vunpack.c.l.b16 %v111
  %v947 = vunpack.c.h.b16 %v111
  %v948 = vunpack.c.l.b16 %v112
  %v949 = vunpack.c.h.b16 %v112
  %v950 = vpack.c.b16 %v948, %v946
  %v951 = vpack.c.b16 %v949, %v947
  %v955 = vsel %vm349, %v912, 0
  %v958 = vsel %vm349, %v913, 0
  %v961 = vsel %vm349, %v914, 0
  %v964 = vsel %vm349, %v915, 0
  %v967 = vsel %vm349, %v916, 0
  %v970 = vsel %vm349, %v917, 0
  %v973 = vsel %vm349, %v918, 0
  %v976 = vsel %vm349, %v919, 0
  %v979 = vsel %vm349, %v920, 0
  %v982 = vsel %vm349, %v921, 0
  %v985 = vsel %vm349, %v922, 0
  %v988 = vsel %vm349, %v923, 0
  %v991 = vsel %vm349, %v924, 0
  %v994 = vsel %vm349, %v925, 0
  %v997 = vsel %vm349, %v926, 0
  %v1000 = vsel %vm349, %v927, 0
  %v1003 = vsel %vm349, %v928, 0
  %v1006 = vsel %vm349, %v929, 0
  %v1009 = vsel %vm349, %v930, 0
  %v1012 = vsel %vm349, %v931, 0
  %v1015 = vsel %vm349, %v932, 0
  %v1018 = vsel %vm349, %v933, 0
  %v1021 = vsel %vm349, %v934, 0
  %v1024 = vsel %vm349, %v935, 0
  %v1027 = vsel %vm349, %v936, 0
  %v1030 = vsel %vm349, %v937, 0
  %v1033 = vsel %vm349, %v938, 0
  %v1036 = vsel %vm349, %v939, 0
  %v1039 = vsel %vm349, %v940, 0
  %v1042 = vsel %vm349, %v941, 0
  %v1045 = vsel %vm349, %v942, 0
  %v1048 = vsel %vm349, %v943, 0
  %1050 = vmatpush.bf16.msra.mxu0 0
  %1051 = vmatpush.bf16.msra.mxu0 0
  %1052 = vmatpush.bf16.msra.mxu0 0
  %1053 = vmatpush.bf16.msra.mxu0 0
  %1054 = vmatpush.bf16.msra.mxu0 0
  %1055 = vmatpush.bf16.msra.mxu0 0
  %1056 = vmatpush.bf16.msra.mxu0 0
  %1057 = vmatpush.bf16.msra.mxu0 %v950
  %1058 = vmatmul.bf16.gmra.mxu0 %v955
  %v1059 = vpop.f32.mrf.mxu0
  %v1060 = vadd.f32 %v456, %v1059
  %v1061 = vpop.f32.mrf.mxu0
  %v1062 = vadd.f32 %v458, %v1061
  %1063 = vmatmul.bf16.gmra.mxu0 %v958
  %v1064 = vpop.f32.mrf.mxu0
  %v1065 = vadd.f32 %v461, %v1064
  %v1066 = vpop.f32.mrf.mxu0
  %v1067 = vadd.f32 %v463, %v1066
  %1068 = vmatmul.bf16.gmra.mxu0 %v961
  %v1069 = vpop.f32.mrf.mxu0
  %v1070 = vadd.f32 %v466, %v1069
  %v1071 = vpop.f32.mrf.mxu0
  %v1072 = vadd.f32 %v468, %v1071
  %1073 = vmatmul.bf16.gmra.mxu0 %v964
  %v1074 = vpop.f32.mrf.mxu0
  %v1075 = vadd.f32 %v471, %v1074
  %v1076 = vpop.f32.mrf.mxu0
  %v1077 = vadd.f32 %v473, %v1076
  %1078 = vmatmul.bf16.gmra.mxu0 %v967
  %v1079 = vpop.f32.mrf.mxu0
  %v1080 = vadd.f32 %v476, %v1079
  %v1081 = vpop.f32.mrf.mxu0
  %v1082 = vadd.f32 %v478, %v1081
  %1083 = vmatmul.bf16.gmra.mxu0 %v970
  %v1084 = vpop.f32.mrf.mxu0
  %v1085 = vadd.f32 %v481, %v1084
  %v1086 = vpop.f32.mrf.mxu0
  %v1087 = vadd.f32 %v483, %v1086
  %1088 = vmatmul.bf16.gmra.mxu0 %v973
  %v1089 = vpop.f32.mrf.mxu0
  %v1090 = vadd.f32 %v486, %v1089
  %v1091 = vpop.f32.mrf.mxu0
  %v1092 = vadd.f32 %v488, %v1091
  %1093 = vmatmul.bf16.gmra.mxu0 %v976
  %v1094 = vpop.f32.mrf.mxu0
  %v1095 = vadd.f32 %v491, %v1094
  %v1096 = vpop.f32.mrf.mxu0
  %v1097 = vadd.f32 %v493, %v1096
  %1098 = vmatmul.bf16.gmra.mxu0 %v979
  %v1099 = vpop.f32.mrf.mxu0
  %v1100 = vadd.f32 %v496, %v1099
  %v1101 = vpop.f32.mrf.mxu0
  %v1102 = vadd.f32 %v498, %v1101
  %1103 = vmatmul.bf16.gmra.mxu0 %v982
  %v1104 = vpop.f32.mrf.mxu0
  %v1105 = vadd.f32 %v501, %v1104
  %v1106 = vpop.f32.mrf.mxu0
  %v1107 = vadd.f32 %v503, %v1106
  %1108 = vmatmul.bf16.gmra.mxu0 %v985
  %v1109 = vpop.f32.mrf.mxu0
  %v1110 = vadd.f32 %v506, %v1109
  %v1111 = vpop.f32.mrf.mxu0
  %v1112 = vadd.f32 %v508, %v1111
  %1113 = vmatmul.bf16.gmra.mxu0 %v988
  %v1114 = vpop.f32.mrf.mxu0
  %v1115 = vadd.f32 %v511, %v1114
  %v1116 = vpop.f32.mrf.mxu0
  %v1117 = vadd.f32 %v513, %v1116
  %1118 = vmatmul.bf16.gmra.mxu0 %v991
  %v1119 = vpop.f32.mrf.mxu0
  %v1120 = vadd.f32 %v516, %v1119
  %v1121 = vpop.f32.mrf.mxu0
  %v1122 = vadd.f32 %v518, %v1121
  %1123 = vmatmul.bf16.gmra.mxu0 %v994
  %v1124 = vpop.f32.mrf.mxu0
  %v1125 = vadd.f32 %v521, %v1124
  %v1126 = vpop.f32.mrf.mxu0
  %v1127 = vadd.f32 %v523, %v1126
  %1128 = vmatmul.bf16.gmra.mxu0 %v997
  %v1129 = vpop.f32.mrf.mxu0
  %v1130 = vadd.f32 %v526, %v1129
  %v1131 = vpop.f32.mrf.mxu0
  %v1132 = vadd.f32 %v528, %v1131
  %1133 = vmatmul.bf16.gmra.mxu0 %v1000
  %v1134 = vpop.f32.mrf.mxu0
  %v1135 = vadd.f32 %v531, %v1134
  %v1136 = vpop.f32.mrf.mxu0
  %v1137 = vadd.f32 %v533, %v1136
  %1138 = vmatmul.bf16.gmra.mxu0 %v1003
  %v1139 = vpop.f32.mrf.mxu0
  %v1140 = vadd.f32 %v536, %v1139
  %v1141 = vpop.f32.mrf.mxu0
  %v1142 = vadd.f32 %v538, %v1141
  %1143 = vmatmul.bf16.gmra.mxu0 %v1006
  %v1144 = vpop.f32.mrf.mxu0
  %v1145 = vadd.f32 %v541, %v1144
  %v1146 = vpop.f32.mrf.mxu0
  %v1147 = vadd.f32 %v543, %v1146
  %1148 = vmatmul.bf16.gmra.mxu0 %v1009
  %v1149 = vpop.f32.mrf.mxu0
  %v1150 = vadd.f32 %v546, %v1149
  %v1151 = vpop.f32.mrf.mxu0
  %v1152 = vadd.f32 %v548, %v1151
  %1153 = vmatmul.bf16.gmra.mxu0 %v1012
  %v1154 = vpop.f32.mrf.mxu0
  %v1155 = vadd.f32 %v551, %v1154
  %v1156 = vpop.f32.mrf.mxu0
  %v1157 = vadd.f32 %v553, %v1156
  %1158 = vmatmul.bf16.gmra.mxu0 %v1015
  %v1159 = vpop.f32.mrf.mxu0
  %v1160 = vadd.f32 %v556, %v1159
  %v1161 = vpop.f32.mrf.mxu0
  %v1162 = vadd.f32 %v558, %v1161
  %1163 = vmatmul.bf16.gmra.mxu0 %v1018
  %v1164 = vpop.f32.mrf.mxu0
  %v1165 = vadd.f32 %v561, %v1164
  %v1166 = vpop.f32.mrf.mxu0
  %v1167 = vadd.f32 %v563, %v1166
  %1168 = vmatmul.bf16.gmra.mxu0 %v1021
  %v1169 = vpop.f32.mrf.mxu0
  %v1170 = vadd.f32 %v566, %v1169
  %v1171 = vpop.f32.mrf.mxu0
  %v1172 = vadd.f32 %v568, %v1171
  %1173 = vmatmul.bf16.gmra.mxu0 %v1024
  %v1174 = vpop.f32.mrf.mxu0
  %v1175 = vadd.f32 %v571, %v1174
  %v1176 = vpop.f32.mrf.mxu0
  %v1177 = vadd.f32 %v573, %v1176
  %1178 = vmatmul.bf16.gmra.mxu0 %v1027
  %v1179 = vpop.f32.mrf.mxu0
  %v1180 = vadd.f32 %v576, %v1179
  %v1181 = vpop.f32.mrf.mxu0
  %v1182 = vadd.f32 %v578, %v1181
  %1183 = vmatmul.bf16.gmra.mxu0 %v1030
  %v1184 = vpop.f32.mrf.mxu0
  %v1185 = vadd.f32 %v581, %v1184
  %v1186 = vpop.f32.mrf.mxu0
  %v1187 = vadd.f32 %v583, %v1186
  %1188 = vmatmul.bf16.gmra.mxu0 %v1033
  %v1189 = vpop.f32.mrf.mxu0
  %v1190 = vadd.f32 %v586, %v1189
  %v1191 = vpop.f32.mrf.mxu0
  %v1192 = vadd.f32 %v588, %v1191
  %1193 = vmatmul.bf16.gmra.mxu0 %v1036
  %v1194 = vpop.f32.mrf.mxu0
  %v1195 = vadd.f32 %v591, %v1194
  %v1196 = vpop.f32.mrf.mxu0
  %v1197 = vadd.f32 %v593, %v1196
  %1198 = vmatmul.bf16.gmra.mxu0 %v1039
  %v1199 = vpop.f32.mrf.mxu0
  %v1200 = vadd.f32 %v596, %v1199
  %v1201 = vpop.f32.mrf.mxu0
  %v1202 = vadd.f32 %v598, %v1201
  %1203 = vmatmul.bf16.gmra.mxu0 %v1042
  %v1204 = vpop.f32.mrf.mxu0
  %v1205 = vadd.f32 %v601, %v1204
  %v1206 = vpop.f32.mrf.mxu0
  %v1207 = vadd.f32 %v603, %v1206
  %1208 = vmatmul.bf16.gmra.mxu0 %v1045
  %v1209 = vpop.f32.mrf.mxu0
  %v1210 = vadd.f32 %v606, %v1209
  %v1211 = vpop.f32.mrf.mxu0
  %v1212 = vadd.f32 %v608, %v1211
  %1213 = vmatmul.bf16.gmra.mxu0 %v1048
  %v1214 = vpop.f32.mrf.mxu0
  %v1215 = vadd.f32 %v611, %v1214
  %v1216 = vpop.f32.mrf.mxu0
  %v1217 = vadd.f32 %v613, %v1216
  %1218 = vdwg.mxu0
  %1219 = vmatpush.bf16.msra.mxu0 0
  %1220 = vmatpush.bf16.msra.mxu0 0
  %1221 = vmatpush.bf16.msra.mxu0 0
  %1222 = vmatpush.bf16.msra.mxu0 0
  %1223 = vmatpush.bf16.msra.mxu0 0
  %1224 = vmatpush.bf16.msra.mxu0 0
  %1225 = vmatpush.bf16.msra.mxu0 0
  %1226 = vmatpush.bf16.msra.mxu0 %v951
  %1227 = vmatmul.bf16.gmra.mxu0 %v955
  %v1228 = vpop.f32.mrf.mxu0
  %v1229 = vadd.f32 %v625, %v1228
  %v1230 = vpop.f32.mrf.mxu0
  %v1231 = vadd.f32 %v627, %v1230
  %1232 = vmatmul.bf16.gmra.mxu0 %v958
  %v1233 = vpop.f32.mrf.mxu0
  %v1234 = vadd.f32 %v630, %v1233
  %v1235 = vpop.f32.mrf.mxu0
  %v1236 = vadd.f32 %v632, %v1235
  %1237 = vmatmul.bf16.gmra.mxu0 %v961
  %v1238 = vpop.f32.mrf.mxu0
  %v1239 = vadd.f32 %v635, %v1238
  %v1240 = vpop.f32.mrf.mxu0
  %v1241 = vadd.f32 %v637, %v1240
  %1242 = vmatmul.bf16.gmra.mxu0 %v964
  %v1243 = vpop.f32.mrf.mxu0
  %v1244 = vadd.f32 %v640, %v1243
  %v1245 = vpop.f32.mrf.mxu0
  %v1246 = vadd.f32 %v642, %v1245
  %1247 = vmatmul.bf16.gmra.mxu0 %v967
  %v1248 = vpop.f32.mrf.mxu0
  %v1249 = vadd.f32 %v645, %v1248
  %v1250 = vpop.f32.mrf.mxu0
  %v1251 = vadd.f32 %v647, %v1250
  %1252 = vmatmul.bf16.gmra.mxu0 %v970
  %v1253 = vpop.f32.mrf.mxu0
  %v1254 = vadd.f32 %v650, %v1253
  %v1255 = vpop.f32.mrf.mxu0
  %v1256 = vadd.f32 %v652, %v1255
  %1257 = vmatmul.bf16.gmra.mxu0 %v973
  %v1258 = vpop.f32.mrf.mxu0
  %v1259 = vadd.f32 %v655, %v1258
  %v1260 = vpop.f32.mrf.mxu0
  %v1261 = vadd.f32 %v657, %v1260
  %1262 = vmatmul.bf16.gmra.mxu0 %v976
  %v1263 = vpop.f32.mrf.mxu0
  %v1264 = vadd.f32 %v660, %v1263
  %v1265 = vpop.f32.mrf.mxu0
  %v1266 = vadd.f32 %v662, %v1265
  %1267 = vmatmul.bf16.gmra.mxu0 %v979
  %v1268 = vpop.f32.mrf.mxu0
  %v1269 = vadd.f32 %v665, %v1268
  %v1270 = vpop.f32.mrf.mxu0
  %v1271 = vadd.f32 %v667, %v1270
  %1272 = vmatmul.bf16.gmra.mxu0 %v982
  %v1273 = vpop.f32.mrf.mxu0
  %v1274 = vadd.f32 %v670, %v1273
  %v1275 = vpop.f32.mrf.mxu0
  %v1276 = vadd.f32 %v672, %v1275
  %1277 = vmatmul.bf16.gmra.mxu0 %v985
  %v1278 = vpop.f32.mrf.mxu0
  %v1279 = vadd.f32 %v675, %v1278
  %v1280 = vpop.f32.mrf.mxu0
  %v1281 = vadd.f32 %v677, %v1280
  %1282 = vmatmul.bf16.gmra.mxu0 %v988
  %v1283 = vpop.f32.mrf.mxu0
  %v1284 = vadd.f32 %v680, %v1283
  %v1285 = vpop.f32.mrf.mxu0
  %v1286 = vadd.f32 %v682, %v1285
  %1287 = vmatmul.bf16.gmra.mxu0 %v991
  %v1288 = vpop.f32.mrf.mxu0
  %v1289 = vadd.f32 %v685, %v1288
  %v1290 = vpop.f32.mrf.mxu0
  %v1291 = vadd.f32 %v687, %v1290
  %1292 = vmatmul.bf16.gmra.mxu0 %v994
  %v1293 = vpop.f32.mrf.mxu0
  %v1294 = vadd.f32 %v690, %v1293
  %v1295 = vpop.f32.mrf.mxu0
  %v1296 = vadd.f32 %v692, %v1295
  %1297 = vmatmul.bf16.gmra.mxu0 %v997
  %v1298 = vpop.f32.mrf.mxu0
  %v1299 = vadd.f32 %v695, %v1298
  %v1300 = vpop.f32.mrf.mxu0
  %v1301 = vadd.f32 %v697, %v1300
  %1302 = vmatmul.bf16.gmra.mxu0 %v1000
  %v1303 = vpop.f32.mrf.mxu0
  %v1304 = vadd.f32 %v700, %v1303
  %v1305 = vpop.f32.mrf.mxu0
  %v1306 = vadd.f32 %v702, %v1305
  %1307 = vmatmul.bf16.gmra.mxu0 %v1003
  %v1308 = vpop.f32.mrf.mxu0
  %v1309 = vadd.f32 %v705, %v1308
  %v1310 = vpop.f32.mrf.mxu0
  %v1311 = vadd.f32 %v707, %v1310
  %1312 = vmatmul.bf16.gmra.mxu0 %v1006
  %v1313 = vpop.f32.mrf.mxu0
  %v1314 = vadd.f32 %v710, %v1313
  %v1315 = vpop.f32.mrf.mxu0
  %v1316 = vadd.f32 %v712, %v1315
  %1317 = vmatmul.bf16.gmra.mxu0 %v1009
  %v1318 = vpop.f32.mrf.mxu0
  %v1319 = vadd.f32 %v715, %v1318
  %v1320 = vpop.f32.mrf.mxu0
  %v1321 = vadd.f32 %v717, %v1320
  %1322 = vmatmul.bf16.gmra.mxu0 %v1012
  %v1323 = vpop.f32.mrf.mxu0
  %v1324 = vadd.f32 %v720, %v1323
  %v1325 = vpop.f32.mrf.mxu0
  %v1326 = vadd.f32 %v722, %v1325
  %1327 = vmatmul.bf16.gmra.mxu0 %v1015
  %v1328 = vpop.f32.mrf.mxu0
  %v1329 = vadd.f32 %v725, %v1328
  %v1330 = vpop.f32.mrf.mxu0
  %v1331 = vadd.f32 %v727, %v1330
  %1332 = vmatmul.bf16.gmra.mxu0 %v1018
  %v1333 = vpop.f32.mrf.mxu0
  %v1334 = vadd.f32 %v730, %v1333
  %v1335 = vpop.f32.mrf.mxu0
  %v1336 = vadd.f32 %v732, %v1335
  %1337 = vmatmul.bf16.gmra.mxu0 %v1021
  %v1338 = vpop.f32.mrf.mxu0
  %v1339 = vadd.f32 %v735, %v1338
  %v1340 = vpop.f32.mrf.mxu0
  %v1341 = vadd.f32 %v737, %v1340
  %1342 = vmatmul.bf16.gmra.mxu0 %v1024
  %v1343 = vpop.f32.mrf.mxu0
  %v1344 = vadd.f32 %v740, %v1343
  %v1345 = vpop.f32.mrf.mxu0
  %v1346 = vadd.f32 %v742, %v1345
  %1347 = vmatmul.bf16.gmra.mxu0 %v1027
  %v1348 = vpop.f32.mrf.mxu0
  %v1349 = vadd.f32 %v745, %v1348
  %v1350 = vpop.f32.mrf.mxu0
  %v1351 = vadd.f32 %v747, %v1350
  %1352 = vmatmul.bf16.gmra.mxu0 %v1030
  %v1353 = vpop.f32.mrf.mxu0
  %v1354 = vadd.f32 %v750, %v1353
  %v1355 = vpop.f32.mrf.mxu0
  %v1356 = vadd.f32 %v752, %v1355
  %1357 = vmatmul.bf16.gmra.mxu0 %v1033
  %v1358 = vpop.f32.mrf.mxu0
  %v1359 = vadd.f32 %v755, %v1358
  %v1360 = vpop.f32.mrf.mxu0
  %v1361 = vadd.f32 %v757, %v1360
  %1362 = vmatmul.bf16.gmra.mxu0 %v1036
  %v1363 = vpop.f32.mrf.mxu0
  %v1364 = vadd.f32 %v760, %v1363
  %v1365 = vpop.f32.mrf.mxu0
  %v1366 = vadd.f32 %v762, %v1365
  %1367 = vmatmul.bf16.gmra.mxu0 %v1039
  %v1368 = vpop.f32.mrf.mxu0
  %v1369 = vadd.f32 %v765, %v1368
  %v1370 = vpop.f32.mrf.mxu0
  %v1371 = vadd.f32 %v767, %v1370
  %1372 = vmatmul.bf16.gmra.mxu0 %v1042
  %v1373 = vpop.f32.mrf.mxu0
  %v1374 = vadd.f32 %v770, %v1373
  %v1375 = vpop.f32.mrf.mxu0
  %v1376 = vadd.f32 %v772, %v1375
  %1377 = vmatmul.bf16.gmra.mxu0 %v1045
  %v1378 = vpop.f32.mrf.mxu0
  %v1379 = vadd.f32 %v775, %v1378
  %v1380 = vpop.f32.mrf.mxu0
  %v1381 = vadd.f32 %v777, %v1380
  %1382 = vmatmul.bf16.gmra.mxu0 %v1048
  %v1383 = vpop.f32.mrf.mxu0
  %v1384 = vadd.f32 %v780, %v1383
  %v1385 = vpop.f32.mrf.mxu0
  %v1386 = vadd.f32 %v782, %v1385
  %1387 = vdwg.mxu0
  %v1388 = vld [vmem:[%s4] sm:$0x3]
  %v1390 = vperm.slane %v1388, 0
  %v1391 = vperm.slane %v1388, 1
  %v1394 = vadd.f32 %v1060, %v1390
  %v1395 = vadd.f32 %v1229, %v1391
  %v1396 = vadd.f32 %v1062, %v1390
  %v1397 = vadd.f32 %v1231, %v1391
  %v1398 = vadd.f32 %v1065, %v1390
  %v1399 = vadd.f32 %v1234, %v1391
  %v1400 = vadd.f32 %v1067, %v1390
  %v1401 = vadd.f32 %v1236, %v1391
  %v1402 = vadd.f32 %v1070, %v1390
  %v1403 = vadd.f32 %v1239, %v1391
  %v1404 = vadd.f32 %v1072, %v1390
  %v1405 = vadd.f32 %v1241, %v1391
  %v1406 = vadd.f32 %v1075, %v1390
  %v1407 = vadd.f32 %v1244, %v1391
  %v1408 = vadd.f32 %v1077, %v1390
  %v1409 = vadd.f32 %v1246, %v1391
  %v1410 = vadd.f32 %v1080, %v1390
  %v1411 = vadd.f32 %v1249, %v1391
  %v1412 = vadd.f32 %v1082, %v1390
  %v1413 = vadd.f32 %v1251, %v1391
  %v1414 = vadd.f32 %v1085, %v1390
  %v1415 = vadd.f32 %v1254, %v1391
  %v1416 = vadd.f32 %v1087, %v1390
  %v1417 = vadd.f32 %v1256, %v1391
  %v1418 = vadd.f32 %v1090, %v1390
  %v1419 = vadd.f32 %v1259, %v1391
  %v1420 = vadd.f32 %v1092, %v1390
  %v1421 = vadd.f32 %v1261, %v1391
  %v1422 = vadd.f32 %v1095, %v1390
  %v1423 = vadd.f32 %v1264, %v1391
  %v1424 = vadd.f32 %v1097, %v1390
  %v1425 = vadd.f32 %v1266, %v1391
  %v1426 = vadd.f32 %v1100, %v1390
  %v1427 = vadd.f32 %v1269, %v1391
  %v1428 = vadd.f32 %v1102, %v1390
  %v1429 = vadd.f32 %v1271, %v1391
  %v1430 = vadd.f32 %v1105, %v1390
  %v1431 = vadd.f32 %v1274, %v1391
  %v1432 = vadd.f32 %v1107, %v1390
  %v1433 = vadd.f32 %v1276, %v1391
  %v1434 = vadd.f32 %v1110, %v1390
  %v1435 = vadd.f32 %v1279, %v1391
  %v1436 = vadd.f32 %v1112, %v1390
  %v1437 = vadd.f32 %v1281, %v1391
  %v1438 = vadd.f32 %v1115, %v1390
  %v1439 = vadd.f32 %v1284, %v1391
  %v1440 = vadd.f32 %v1117, %v1390
  %v1441 = vadd.f32 %v1286, %v1391
  %v1442 = vadd.f32 %v1120, %v1390
  %v1443 = vadd.f32 %v1289, %v1391
  %v1444 = vadd.f32 %v1122, %v1390
  %v1445 = vadd.f32 %v1291, %v1391
  %v1446 = vadd.f32 %v1125, %v1390
  %v1447 = vadd.f32 %v1294, %v1391
  %v1448 = vadd.f32 %v1127, %v1390
  %v1449 = vadd.f32 %v1296, %v1391
  %v1450 = vadd.f32 %v1130, %v1390
  %v1451 = vadd.f32 %v1299, %v1391
  %v1452 = vadd.f32 %v1132, %v1390
  %v1453 = vadd.f32 %v1301, %v1391
  %v1454 = vadd.f32 %v1135, %v1390
  %v1455 = vadd.f32 %v1304, %v1391
  %v1456 = vadd.f32 %v1137, %v1390
  %v1457 = vadd.f32 %v1306, %v1391
  %v1458 = vadd.f32 %v1140, %v1390
  %v1459 = vadd.f32 %v1309, %v1391
  %v1460 = vadd.f32 %v1142, %v1390
  %v1461 = vadd.f32 %v1311, %v1391
  %v1462 = vadd.f32 %v1145, %v1390
  %v1463 = vadd.f32 %v1314, %v1391
  %v1464 = vadd.f32 %v1147, %v1390
  %v1465 = vadd.f32 %v1316, %v1391
  %v1466 = vadd.f32 %v1150, %v1390
  %v1467 = vadd.f32 %v1319, %v1391
  %v1468 = vadd.f32 %v1152, %v1390
  %v1469 = vadd.f32 %v1321, %v1391
  %v1470 = vadd.f32 %v1155, %v1390
  %v1471 = vadd.f32 %v1324, %v1391
  %v1472 = vadd.f32 %v1157, %v1390
  %v1473 = vadd.f32 %v1326, %v1391
  %v1474 = vadd.f32 %v1160, %v1390
  %v1475 = vadd.f32 %v1329, %v1391
  %v1476 = vadd.f32 %v1162, %v1390
  %v1477 = vadd.f32 %v1331, %v1391
  %v1478 = vadd.f32 %v1165, %v1390
  %v1479 = vadd.f32 %v1334, %v1391
  %v1480 = vadd.f32 %v1167, %v1390
  %v1481 = vadd.f32 %v1336, %v1391
  %v1482 = vadd.f32 %v1170, %v1390
  %v1483 = vadd.f32 %v1339, %v1391
  %v1484 = vadd.f32 %v1172, %v1390
  %v1485 = vadd.f32 %v1341, %v1391
  %v1486 = vadd.f32 %v1175, %v1390
  %v1487 = vadd.f32 %v1344, %v1391
  %v1488 = vadd.f32 %v1177, %v1390
  %v1489 = vadd.f32 %v1346, %v1391
  %v1490 = vadd.f32 %v1180, %v1390
  %v1491 = vadd.f32 %v1349, %v1391
  %v1492 = vadd.f32 %v1182, %v1390
  %v1493 = vadd.f32 %v1351, %v1391
  %v1494 = vadd.f32 %v1185, %v1390
  %v1495 = vadd.f32 %v1354, %v1391
  %v1496 = vadd.f32 %v1187, %v1390
  %v1497 = vadd.f32 %v1356, %v1391
  %v1498 = vadd.f32 %v1190, %v1390
  %v1499 = vadd.f32 %v1359, %v1391
  %v1500 = vadd.f32 %v1192, %v1390
  %v1501 = vadd.f32 %v1361, %v1391
  %v1502 = vadd.f32 %v1195, %v1390
  %v1503 = vadd.f32 %v1364, %v1391
  %v1504 = vadd.f32 %v1197, %v1390
  %v1505 = vadd.f32 %v1366, %v1391
  %v1506 = vadd.f32 %v1200, %v1390
  %v1507 = vadd.f32 %v1369, %v1391
  %v1508 = vadd.f32 %v1202, %v1390
  %v1509 = vadd.f32 %v1371, %v1391
  %v1510 = vadd.f32 %v1205, %v1390
  %v1511 = vadd.f32 %v1374, %v1391
  %v1512 = vadd.f32 %v1207, %v1390
  %v1513 = vadd.f32 %v1376, %v1391
  %v1514 = vadd.f32 %v1210, %v1390
  %v1515 = vadd.f32 %v1379, %v1391
  %v1516 = vadd.f32 %v1212, %v1390
  %v1517 = vadd.f32 %v1381, %v1391
  %v1518 = vadd.f32 %v1215, %v1390
  %v1519 = vadd.f32 %v1384, %v1391
  %v1520 = vadd.f32 %v1217, %v1390
  %v1521 = vadd.f32 %v1386, %v1391
  %v1522 = vmax.f32 %v1394, 0.0
  %v1523 = vmax.f32 %v1395, 0.0
  %v1524 = vmax.f32 %v1396, 0.0
  %v1525 = vmax.f32 %v1397, 0.0
  %v1526 = vmax.f32 %v1398, 0.0
  %v1527 = vmax.f32 %v1399, 0.0
  %v1528 = vmax.f32 %v1400, 0.0
  %v1529 = vmax.f32 %v1401, 0.0
  %v1530 = vmax.f32 %v1402, 0.0
  %v1531 = vmax.f32 %v1403, 0.0
  %v1532 = vmax.f32 %v1404, 0.0
  %v1533 = vmax.f32 %v1405, 0.0
  %v1534 = vmax.f32 %v1406, 0.0
  %v1535 = vmax.f32 %v1407, 0.0
  %v1536 = vmax.f32 %v1408, 0.0
  %v1537 = vmax.f32 %v1409, 0.0
  %v1538 = vmax.f32 %v1410, 0.0
  %v1539 = vmax.f32 %v1411, 0.0
  %v1540 = vmax.f32 %v1412, 0.0
  %v1541 = vmax.f32 %v1413, 0.0
  %v1542 = vmax.f32 %v1414, 0.0
  %v1543 = vmax.f32 %v1415, 0.0
  %v1544 = vmax.f32 %v1416, 0.0
  %v1545 = vmax.f32 %v1417, 0.0
  %v1546 = vmax.f32 %v1418, 0.0
  %v1547 = vmax.f32 %v1419, 0.0
  %v1548 = vmax.f32 %v1420, 0.0
  %v1549 = vmax.f32 %v1421, 0.0
  %v1550 = vmax.f32 %v1422, 0.0
  %v1551 = vmax.f32 %v1423, 0.0
  %v1552 = vmax.f32 %v1424, 0.0
  %v1553 = vmax.f32 %v1425, 0.0
  %v1554 = vmax.f32 %v1426, 0.0
  %v1555 = vmax.f32 %v1427, 0.0
  %v1556 = vmax.f32 %v1428, 0.0
  %v1557 = vmax.f32 %v1429, 0.0
  %v1558 = vmax.f32 %v1430, 0.0
  %v1559 = vmax.f32 %v1431, 0.0
  %v1560 = vmax.f32 %v1432, 0.0
  %v1561 = vmax.f32 %v1433, 0.0
  %v1562 = vmax.f32 %v1434, 0.0
  %v1563 = vmax.f32 %v1435, 0.0
  %v1564 = vmax.f32 %v1436, 0.0
  %v1565 = vmax.f32 %v1437, 0.0
  %v1566 = vmax.f32 %v1438, 0.0
  %v1567 = vmax.f32 %v1439, 0.0
  %v1568 = vmax.f32 %v1440, 0.0
  %v1569 = vmax.f32 %v1441, 0.0
  %v1570 = vmax.f32 %v1442, 0.0
  %v1571 = vmax.f32 %v1443, 0.0
  %v1572 = vmax.f32 %v1444, 0.0
  %v1573 = vmax.f32 %v1445, 0.0
  %v1574 = vmax.f32 %v1446, 0.0
  %v1575 = vmax.f32 %v1447, 0.0
  %v1576 = vmax.f32 %v1448, 0.0
  %v1577 = vmax.f32 %v1449, 0.0
  %v1578 = vmax.f32 %v1450, 0.0
  %v1579 = vmax.f32 %v1451, 0.0
  %v1580 = vmax.f32 %v1452, 0.0
  %v1581 = vmax.f32 %v1453, 0.0
  %v1582 = vmax.f32 %v1454, 0.0
  %v1583 = vmax.f32 %v1455, 0.0
  %v1584 = vmax.f32 %v1456, 0.0
  %v1585 = vmax.f32 %v1457, 0.0
  %v1586 = vmax.f32 %v1458, 0.0
  %v1587 = vmax.f32 %v1459, 0.0
  %v1588 = vmax.f32 %v1460, 0.0
  %v1589 = vmax.f32 %v1461, 0.0
  %v1590 = vmax.f32 %v1462, 0.0
  %v1591 = vmax.f32 %v1463, 0.0
  %v1592 = vmax.f32 %v1464, 0.0
  %v1593 = vmax.f32 %v1465, 0.0
  %v1594 = vmax.f32 %v1466, 0.0
  %v1595 = vmax.f32 %v1467, 0.0
  %v1596 = vmax.f32 %v1468, 0.0
  %v1597 = vmax.f32 %v1469, 0.0
  %v1598 = vmax.f32 %v1470, 0.0
  %v1599 = vmax.f32 %v1471, 0.0
  %v1600 = vmax.f32 %v1472, 0.0
  %v1601 = vmax.f32 %v1473, 0.0
  %v1602 = vmax.f32 %v1474, 0.0
  %v1603 = vmax.f32 %v1475, 0.0
  %v1604 = vmax.f32 %v1476, 0.0
  %v1605 = vmax.f32 %v1477, 0.0
  %v1606 = vmax.f32 %v1478, 0.0
  %v1607 = vmax.f32 %v1479, 0.0
  %v1608 = vmax.f32 %v1480, 0.0
  %v1609 = vmax.f32 %v1481, 0.0
  %v1610 = vmax.f32 %v1482, 0.0
  %v1611 = vmax.f32 %v1483, 0.0
  %v1612 = vmax.f32 %v1484, 0.0
  %v1613 = vmax.f32 %v1485, 0.0
  %v1614 = vmax.f32 %v1486, 0.0
  %v1615 = vmax.f32 %v1487, 0.0
  %v1616 = vmax.f32 %v1488, 0.0
  %v1617 = vmax.f32 %v1489, 0.0
  %v1618 = vmax.f32 %v1490, 0.0
  %v1619 = vmax.f32 %v1491, 0.0
  %v1620 = vmax.f32 %v1492, 0.0
  %v1621 = vmax.f32 %v1493, 0.0
  %v1622 = vmax.f32 %v1494, 0.0
  %v1623 = vmax.f32 %v1495, 0.0
  %v1624 = vmax.f32 %v1496, 0.0
  %v1625 = vmax.f32 %v1497, 0.0
  %v1626 = vmax.f32 %v1498, 0.0
  %v1627 = vmax.f32 %v1499, 0.0
  %v1628 = vmax.f32 %v1500, 0.0
  %v1629 = vmax.f32 %v1501, 0.0
  %v1630 = vmax.f32 %v1502, 0.0
  %v1631 = vmax.f32 %v1503, 0.0
  %v1632 = vmax.f32 %v1504, 0.0
  %v1633 = vmax.f32 %v1505, 0.0
  %v1634 = vmax.f32 %v1506, 0.0
  %v1635 = vmax.f32 %v1507, 0.0
  %v1636 = vmax.f32 %v1508, 0.0
  %v1637 = vmax.f32 %v1509, 0.0
  %v1638 = vmax.f32 %v1510, 0.0
  %v1639 = vmax.f32 %v1511, 0.0
  %v1640 = vmax.f32 %v1512, 0.0
  %v1641 = vmax.f32 %v1513, 0.0
  %v1642 = vmax.f32 %v1514, 0.0
  %v1643 = vmax.f32 %v1515, 0.0
  %v1644 = vmax.f32 %v1516, 0.0
  %v1645 = vmax.f32 %v1517, 0.0
  %v1646 = vmax.f32 %v1518, 0.0
  %v1647 = vmax.f32 %v1519, 0.0
  %v1648 = vmax.f32 %v1520, 0.0
  %v1649 = vmax.f32 %v1521, 0.0
  %v1650 = vpack.c.bf16 %v1524, %v1522
  %v1651 = vpack.c.bf16 %v1525, %v1523
  %v1652 = vpack.c.bf16 %v1528, %v1526
  %v1653 = vpack.c.bf16 %v1529, %v1527
  %v1654 = vpack.c.bf16 %v1532, %v1530
  %v1655 = vpack.c.bf16 %v1533, %v1531
  %v1656 = vpack.c.bf16 %v1536, %v1534
  %v1657 = vpack.c.bf16 %v1537, %v1535
  %v1658 = vpack.c.bf16 %v1540, %v1538
  %v1659 = vpack.c.bf16 %v1541, %v1539
  %v1660 = vpack.c.bf16 %v1544, %v1542
  %v1661 = vpack.c.bf16 %v1545, %v1543
  %v1662 = vpack.c.bf16 %v1548, %v1546
  %v1663 = vpack.c.bf16 %v1549, %v1547
  %v1664 = vpack.c.bf16 %v1552, %v1550
  %v1665 = vpack.c.bf16 %v1553, %v1551
  %v1666 = vpack.c.bf16 %v1556, %v1554
  %v1667 = vpack.c.bf16 %v1557, %v1555
  %v1668 = vpack.c.bf16 %v1560, %v1558
  %v1669 = vpack.c.bf16 %v1561, %v1559
  %v1670 = vpack.c.bf16 %v1564, %v1562
  %v1671 = vpack.c.bf16 %v1565, %v1563
  %v1672 = vpack.c.bf16 %v1568, %v1566
  %v1673 = vpack.c.bf16 %v1569, %v1567
  %v1674 = vpack.c.bf16 %v1572, %v1570
  %v1675 = vpack.c.bf16 %v1573, %v1571
  %v1676 = vpack.c.bf16 %v1576, %v1574
  %v1677 = vpack.c.bf16 %v1577, %v1575
  %v1678 = vpack.c.bf16 %v1580, %v1578
  %v1679 = vpack.c.bf16 %v1581, %v1579
  %v1680 = vpack.c.bf16 %v1584, %v1582
  %v1681 = vpack.c.bf16 %v1585, %v1583
  %v1682 = vpack.c.bf16 %v1588, %v1586
  %v1683 = vpack.c.bf16 %v1589, %v1587
  %v1684 = vpack.c.bf16 %v1592, %v1590
  %v1685 = vpack.c.bf16 %v1593, %v1591
  %v1686 = vpack.c.bf16 %v1596, %v1594
  %v1687 = vpack.c.bf16 %v1597, %v1595
  %v1688 = vpack.c.bf16 %v1600, %v1598
  %v1689 = vpack.c.bf16 %v1601, %v1599
  %v1690 = vpack.c.bf16 %v1604, %v1602
  %v1691 = vpack.c.bf16 %v1605, %v1603
  %v1692 = vpack.c.bf16 %v1608, %v1606
  %v1693 = vpack.c.bf16 %v1609, %v1607
  %v1694 = vpack.c.bf16 %v1612, %v1610
  %v1695 = vpack.c.bf16 %v1613, %v1611
  %v1696 = vpack.c.bf16 %v1616, %v1614
  %v1697 = vpack.c.bf16 %v1617, %v1615
  %v1698 = vpack.c.bf16 %v1620, %v1618
  %v1699 = vpack.c.bf16 %v1621, %v1619
  %v1700 = vpack.c.bf16 %v1624, %v1622
  %v1701 = vpack.c.bf16 %v1625, %v1623
  %v1702 = vpack.c.bf16 %v1628, %v1626
  %v1703 = vpack.c.bf16 %v1629, %v1627
  %v1704 = vpack.c.bf16 %v1632, %v1630
  %v1705 = vpack.c.bf16 %v1633, %v1631
  %v1706 = vpack.c.bf16 %v1636, %v1634
  %v1707 = vpack.c.bf16 %v1637, %v1635
  %v1708 = vpack.c.bf16 %v1640, %v1638
  %v1709 = vpack.c.bf16 %v1641, %v1639
  %v1710 = vpack.c.bf16 %v1644, %v1642
  %v1711 = vpack.c.bf16 %v1645, %v1643
  %v1712 = vpack.c.bf16 %v1648, %v1646
  %v1713 = vpack.c.bf16 %v1649, %v1647
  %v1714 = vld [vmem:[%s5] sm:$0xff]
  %v1715 = vld [vmem:[%s5 + $0x8] sm:$0xff]
  %v1716 = vld [vmem:[%s5 + $0x10] sm:$0xff]
  %v1717 = vld [vmem:[%s5 + $0x18] sm:$0xff]
  %v1718 = vld [vmem:[%s5 + $0x20] sm:$0xff]
  %v1719 = vld [vmem:[%s5 + $0x28] sm:$0xff]
  %v1720 = vld [vmem:[%s5 + $0x30] sm:$0xff]
  %v1721 = vld [vmem:[%s5 + $0x38] sm:$0xff]
  %v1722 = vld [vmem:[%s5 + $0x40] sm:$0xff]
  %v1723 = vld [vmem:[%s5 + $0x48] sm:$0xff]
  %v1724 = vld [vmem:[%s5 + $0x50] sm:$0xff]
  %v1725 = vld [vmem:[%s5 + $0x58] sm:$0xff]
  %v1726 = vld [vmem:[%s5 + $0x60] sm:$0xff]
  %v1727 = vld [vmem:[%s5 + $0x68] sm:$0xff]
  %v1728 = vld [vmem:[%s5 + $0x70] sm:$0xff]
  %v1729 = vld [vmem:[%s5 + $0x78] sm:$0xff]
  %v1730 = vld [vmem:[%s5 + $0x80] sm:$0xff]
  %v1731 = vld [vmem:[%s5 + $0x88] sm:$0xff]
  %v1732 = vld [vmem:[%s5 + $0x90] sm:$0xff]
  %v1733 = vld [vmem:[%s5 + $0x98] sm:$0xff]
  %v1734 = vld [vmem:[%s5 + $0xa0] sm:$0xff]
  %v1735 = vld [vmem:[%s5 + $0xa8] sm:$0xff]
  %v1736 = vld [vmem:[%s5 + $0xb0] sm:$0xff]
  %v1737 = vld [vmem:[%s5 + $0xb8] sm:$0xff]
  %v1738 = vld [vmem:[%s5 + $0xc0] sm:$0xff]
  %v1739 = vld [vmem:[%s5 + $0xc8] sm:$0xff]
  %v1740 = vld [vmem:[%s5 + $0xd0] sm:$0xff]
  %v1741 = vld [vmem:[%s5 + $0xd8] sm:$0xff]
  %v1742 = vld [vmem:[%s5 + $0xe0] sm:$0xff]
  %v1743 = vld [vmem:[%s5 + $0xe8] sm:$0xff]
  %v1744 = vld [vmem:[%s5 + $0xf0] sm:$0xff]
  %v1745 = vld [vmem:[%s5 + $0xf8] sm:$0xff]
  %v1746 = vld [vmem:[%s6] sm:$0x3]
  %v1748 = vperm.slane %v1746, 0
  %v1749 = vperm.slane %v1746, 1
  %v1784 = vunpack.c.l.b16 %v1714
  %v1785 = vunpack.c.h.b16 %v1714
  %v1786 = vunpack.c.l.b16 %v1715
  %v1787 = vunpack.c.h.b16 %v1715
  %v1788 = vunpack.c.l.b16 %v1716
  %v1789 = vunpack.c.h.b16 %v1716
  %v1790 = vunpack.c.l.b16 %v1717
  %v1791 = vunpack.c.h.b16 %v1717
  %v1792 = vunpack.c.l.b16 %v1718
  %v1793 = vunpack.c.h.b16 %v1718
  %v1794 = vunpack.c.l.b16 %v1719
  %v1795 = vunpack.c.h.b16 %v1719
  %v1796 = vunpack.c.l.b16 %v1720
  %v1797 = vunpack.c.h.b16 %v1720
  %v1798 = vunpack.c.l.b16 %v1721
  %v1799 = vunpack.c.h.b16 %v1721
  %v1800 = vunpack.c.l.b16 %v1722
  %v1801 = vunpack.c.h.b16 %v1722
  %v1802 = vunpack.c.l.b16 %v1723
  %v1803 = vunpack.c.h.b16 %v1723
  %v1804 = vunpack.c.l.b16 %v1724
  %v1805 = vunpack.c.h.b16 %v1724
  %v1806 = vunpack.c.l.b16 %v1725
  %v1807 = vunpack.c.h.b16 %v1725
  %v1808 = vunpack.c.l.b16 %v1726
  %v1809 = vunpack.c.h.b16 %v1726
  %v1810 = vunpack.c.l.b16 %v1727
  %v1811 = vunpack.c.h.b16 %v1727
  %v1812 = vunpack.c.l.b16 %v1728
  %v1813 = vunpack.c.h.b16 %v1728
  %v1814 = vunpack.c.l.b16 %v1729
  %v1815 = vunpack.c.h.b16 %v1729
  %v1816 = vunpack.c.l.b16 %v1730
  %v1817 = vunpack.c.h.b16 %v1730
  %v1818 = vunpack.c.l.b16 %v1731
  %v1819 = vunpack.c.h.b16 %v1731
  %v1820 = vunpack.c.l.b16 %v1732
  %v1821 = vunpack.c.h.b16 %v1732
  %v1822 = vunpack.c.l.b16 %v1733
  %v1823 = vunpack.c.h.b16 %v1733
  %v1824 = vunpack.c.l.b16 %v1734
  %v1825 = vunpack.c.h.b16 %v1734
  %v1826 = vunpack.c.l.b16 %v1735
  %v1827 = vunpack.c.h.b16 %v1735
  %v1828 = vunpack.c.l.b16 %v1736
  %v1829 = vunpack.c.h.b16 %v1736
  %v1830 = vunpack.c.l.b16 %v1737
  %v1831 = vunpack.c.h.b16 %v1737
  %v1832 = vunpack.c.l.b16 %v1738
  %v1833 = vunpack.c.h.b16 %v1738
  %v1834 = vunpack.c.l.b16 %v1739
  %v1835 = vunpack.c.h.b16 %v1739
  %v1836 = vunpack.c.l.b16 %v1740
  %v1837 = vunpack.c.h.b16 %v1740
  %v1838 = vunpack.c.l.b16 %v1741
  %v1839 = vunpack.c.h.b16 %v1741
  %v1840 = vunpack.c.l.b16 %v1742
  %v1841 = vunpack.c.h.b16 %v1742
  %v1842 = vunpack.c.l.b16 %v1743
  %v1843 = vunpack.c.h.b16 %v1743
  %v1844 = vunpack.c.l.b16 %v1744
  %v1845 = vunpack.c.h.b16 %v1744
  %v1846 = vunpack.c.l.b16 %v1745
  %v1847 = vunpack.c.h.b16 %v1745
  %v1848 = vpack.c.b16 %v1786, %v1784
  %v1849 = vpack.c.b16 %v1787, %v1785
  %v1850 = vpack.c.b16 %v1790, %v1788
  %v1851 = vpack.c.b16 %v1791, %v1789
  %v1852 = vpack.c.b16 %v1794, %v1792
  %v1853 = vpack.c.b16 %v1795, %v1793
  %v1854 = vpack.c.b16 %v1798, %v1796
  %v1855 = vpack.c.b16 %v1799, %v1797
  %v1856 = vpack.c.b16 %v1802, %v1800
  %v1857 = vpack.c.b16 %v1803, %v1801
  %v1858 = vpack.c.b16 %v1806, %v1804
  %v1859 = vpack.c.b16 %v1807, %v1805
  %v1860 = vpack.c.b16 %v1810, %v1808
  %v1861 = vpack.c.b16 %v1811, %v1809
  %v1862 = vpack.c.b16 %v1814, %v1812
  %v1863 = vpack.c.b16 %v1815, %v1813
  %v1864 = vpack.c.b16 %v1818, %v1816
  %v1865 = vpack.c.b16 %v1819, %v1817
  %v1866 = vpack.c.b16 %v1822, %v1820
  %v1867 = vpack.c.b16 %v1823, %v1821
  %v1868 = vpack.c.b16 %v1826, %v1824
  %v1869 = vpack.c.b16 %v1827, %v1825
  %v1870 = vpack.c.b16 %v1830, %v1828
  %v1871 = vpack.c.b16 %v1831, %v1829
  %v1872 = vpack.c.b16 %v1834, %v1832
  %v1873 = vpack.c.b16 %v1835, %v1833
  %v1874 = vpack.c.b16 %v1838, %v1836
  %v1875 = vpack.c.b16 %v1839, %v1837
  %v1876 = vpack.c.b16 %v1842, %v1840
  %v1877 = vpack.c.b16 %v1843, %v1841
  %v1878 = vpack.c.b16 %v1846, %v1844
  %v1879 = vpack.c.b16 %v1847, %v1845
  %1912 = vmatpush.bf16.msra.mxu0 %v1862
  %1913 = vmatpush.bf16.msra.mxu0 %v1860
  %1914 = vmatpush.bf16.msra.mxu0 %v1858
  %1915 = vmatpush.bf16.msra.mxu0 %v1856
  %1916 = vmatpush.bf16.msra.mxu0 %v1854
  %1917 = vmatpush.bf16.msra.mxu0 %v1852
  %1918 = vmatpush.bf16.msra.mxu0 %v1850
  %1919 = vmatpush.bf16.msra.mxu0 %v1848
  %1920 = vmatmul.bf16.gmra.mxu0 %v1650
  %v1921 = vpop.f32.mrf.mxu0
  %v1922 = vadd.f32 %v1748, %v1921
  %v1923 = vpop.f32.mrf.mxu0
  %v1924 = vadd.f32 %v1748, %v1923
  %1925 = vmatmul.bf16.gmra.mxu0 %v1652
  %v1926 = vpop.f32.mrf.mxu0
  %v1927 = vadd.f32 %v1748, %v1926
  %v1928 = vpop.f32.mrf.mxu0
  %v1929 = vadd.f32 %v1748, %v1928
  %1930 = vmatmul.bf16.gmra.mxu0 %v1654
  %v1931 = vpop.f32.mrf.mxu0
  %v1932 = vadd.f32 %v1748, %v1931
  %v1933 = vpop.f32.mrf.mxu0
  %v1934 = vadd.f32 %v1748, %v1933
  %1935 = vmatmul.bf16.gmra.mxu0 %v1656
  %v1936 = vpop.f32.mrf.mxu0
  %v1937 = vadd.f32 %v1748, %v1936
  %v1938 = vpop.f32.mrf.mxu0
  %v1939 = vadd.f32 %v1748, %v1938
  %1940 = vmatmul.bf16.gmra.mxu0 %v1658
  %v1941 = vpop.f32.mrf.mxu0
  %v1942 = vadd.f32 %v1748, %v1941
  %v1943 = vpop.f32.mrf.mxu0
  %v1944 = vadd.f32 %v1748, %v1943
  %1945 = vmatmul.bf16.gmra.mxu0 %v1660
  %v1946 = vpop.f32.mrf.mxu0
  %v1947 = vadd.f32 %v1748, %v1946
  %v1948 = vpop.f32.mrf.mxu0
  %v1949 = vadd.f32 %v1748, %v1948
  %1950 = vmatmul.bf16.gmra.mxu0 %v1662
  %v1951 = vpop.f32.mrf.mxu0
  %v1952 = vadd.f32 %v1748, %v1951
  %v1953 = vpop.f32.mrf.mxu0
  %v1954 = vadd.f32 %v1748, %v1953
  %1955 = vmatmul.bf16.gmra.mxu0 %v1664
  %v1956 = vpop.f32.mrf.mxu0
  %v1957 = vadd.f32 %v1748, %v1956
  %v1958 = vpop.f32.mrf.mxu0
  %v1959 = vadd.f32 %v1748, %v1958
  %1960 = vmatmul.bf16.gmra.mxu0 %v1666
  %v1961 = vpop.f32.mrf.mxu0
  %v1962 = vadd.f32 %v1748, %v1961
  %v1963 = vpop.f32.mrf.mxu0
  %v1964 = vadd.f32 %v1748, %v1963
  %1965 = vmatmul.bf16.gmra.mxu0 %v1668
  %v1966 = vpop.f32.mrf.mxu0
  %v1967 = vadd.f32 %v1748, %v1966
  %v1968 = vpop.f32.mrf.mxu0
  %v1969 = vadd.f32 %v1748, %v1968
  %1970 = vmatmul.bf16.gmra.mxu0 %v1670
  %v1971 = vpop.f32.mrf.mxu0
  %v1972 = vadd.f32 %v1748, %v1971
  %v1973 = vpop.f32.mrf.mxu0
  %v1974 = vadd.f32 %v1748, %v1973
  %1975 = vmatmul.bf16.gmra.mxu0 %v1672
  %v1976 = vpop.f32.mrf.mxu0
  %v1977 = vadd.f32 %v1748, %v1976
  %v1978 = vpop.f32.mrf.mxu0
  %v1979 = vadd.f32 %v1748, %v1978
  %1980 = vmatmul.bf16.gmra.mxu0 %v1674
  %v1981 = vpop.f32.mrf.mxu0
  %v1982 = vadd.f32 %v1748, %v1981
  %v1983 = vpop.f32.mrf.mxu0
  %v1984 = vadd.f32 %v1748, %v1983
  %1985 = vmatmul.bf16.gmra.mxu0 %v1676
  %v1986 = vpop.f32.mrf.mxu0
  %v1987 = vadd.f32 %v1748, %v1986
  %v1988 = vpop.f32.mrf.mxu0
  %v1989 = vadd.f32 %v1748, %v1988
  %1990 = vmatmul.bf16.gmra.mxu0 %v1678
  %v1991 = vpop.f32.mrf.mxu0
  %v1992 = vadd.f32 %v1748, %v1991
  %v1993 = vpop.f32.mrf.mxu0
  %v1994 = vadd.f32 %v1748, %v1993
  %1995 = vmatmul.bf16.gmra.mxu0 %v1680
  %v1996 = vpop.f32.mrf.mxu0
  %v1997 = vadd.f32 %v1748, %v1996
  %v1998 = vpop.f32.mrf.mxu0
  %v1999 = vadd.f32 %v1748, %v1998
  %2000 = vmatmul.bf16.gmra.mxu0 %v1682
  %v2001 = vpop.f32.mrf.mxu0
  %v2002 = vadd.f32 %v1748, %v2001
  %v2003 = vpop.f32.mrf.mxu0
  %v2004 = vadd.f32 %v1748, %v2003
  %2005 = vmatmul.bf16.gmra.mxu0 %v1684
  %v2006 = vpop.f32.mrf.mxu0
  %v2007 = vadd.f32 %v1748, %v2006
  %v2008 = vpop.f32.mrf.mxu0
  %v2009 = vadd.f32 %v1748, %v2008
  %2010 = vmatmul.bf16.gmra.mxu0 %v1686
  %v2011 = vpop.f32.mrf.mxu0
  %v2012 = vadd.f32 %v1748, %v2011
  %v2013 = vpop.f32.mrf.mxu0
  %v2014 = vadd.f32 %v1748, %v2013
  %2015 = vmatmul.bf16.gmra.mxu0 %v1688
  %v2016 = vpop.f32.mrf.mxu0
  %v2017 = vadd.f32 %v1748, %v2016
  %v2018 = vpop.f32.mrf.mxu0
  %v2019 = vadd.f32 %v1748, %v2018
  %2020 = vmatmul.bf16.gmra.mxu0 %v1690
  %v2021 = vpop.f32.mrf.mxu0
  %v2022 = vadd.f32 %v1748, %v2021
  %v2023 = vpop.f32.mrf.mxu0
  %v2024 = vadd.f32 %v1748, %v2023
  %2025 = vmatmul.bf16.gmra.mxu0 %v1692
  %v2026 = vpop.f32.mrf.mxu0
  %v2027 = vadd.f32 %v1748, %v2026
  %v2028 = vpop.f32.mrf.mxu0
  %v2029 = vadd.f32 %v1748, %v2028
  %2030 = vmatmul.bf16.gmra.mxu0 %v1694
  %v2031 = vpop.f32.mrf.mxu0
  %v2032 = vadd.f32 %v1748, %v2031
  %v2033 = vpop.f32.mrf.mxu0
  %v2034 = vadd.f32 %v1748, %v2033
  %2035 = vmatmul.bf16.gmra.mxu0 %v1696
  %v2036 = vpop.f32.mrf.mxu0
  %v2037 = vadd.f32 %v1748, %v2036
  %v2038 = vpop.f32.mrf.mxu0
  %v2039 = vadd.f32 %v1748, %v2038
  %2040 = vmatmul.bf16.gmra.mxu0 %v1698
  %v2041 = vpop.f32.mrf.mxu0
  %v2042 = vadd.f32 %v1748, %v2041
  %v2043 = vpop.f32.mrf.mxu0
  %v2044 = vadd.f32 %v1748, %v2043
  %2045 = vmatmul.bf16.gmra.mxu0 %v1700
  %v2046 = vpop.f32.mrf.mxu0
  %v2047 = vadd.f32 %v1748, %v2046
  %v2048 = vpop.f32.mrf.mxu0
  %v2049 = vadd.f32 %v1748, %v2048
  %2050 = vmatmul.bf16.gmra.mxu0 %v1702
  %v2051 = vpop.f32.mrf.mxu0
  %v2052 = vadd.f32 %v1748, %v2051
  %v2053 = vpop.f32.mrf.mxu0
  %v2054 = vadd.f32 %v1748, %v2053
  %2055 = vmatmul.bf16.gmra.mxu0 %v1704
  %v2056 = vpop.f32.mrf.mxu0
  %v2057 = vadd.f32 %v1748, %v2056
  %v2058 = vpop.f32.mrf.mxu0
  %v2059 = vadd.f32 %v1748, %v2058
  %2060 = vmatmul.bf16.gmra.mxu0 %v1706
  %v2061 = vpop.f32.mrf.mxu0
  %v2062 = vadd.f32 %v1748, %v2061
  %v2063 = vpop.f32.mrf.mxu0
  %v2064 = vadd.f32 %v1748, %v2063
  %2065 = vmatmul.bf16.gmra.mxu0 %v1708
  %v2066 = vpop.f32.mrf.mxu0
  %v2067 = vadd.f32 %v1748, %v2066
  %v2068 = vpop.f32.mrf.mxu0
  %v2069 = vadd.f32 %v1748, %v2068
  %2070 = vmatmul.bf16.gmra.mxu0 %v1710
  %v2071 = vpop.f32.mrf.mxu0
  %v2072 = vadd.f32 %v1748, %v2071
  %v2073 = vpop.f32.mrf.mxu0
  %v2074 = vadd.f32 %v1748, %v2073
  %2075 = vmatmul.bf16.gmra.mxu0 %v1712
  %v2076 = vpop.f32.mrf.mxu0
  %v2077 = vadd.f32 %v1748, %v2076
  %v2078 = vpop.f32.mrf.mxu0
  %v2079 = vadd.f32 %v1748, %v2078
  %2080 = vdwg.mxu0
  %2081 = vmatpush.bf16.msra.mxu0 %v1878
  %2082 = vmatpush.bf16.msra.mxu0 %v1876
  %2083 = vmatpush.bf16.msra.mxu0 %v1874
  %2084 = vmatpush.bf16.msra.mxu0 %v1872
  %2085 = vmatpush.bf16.msra.mxu0 %v1870
  %2086 = vmatpush.bf16.msra.mxu0 %v1868
  %2087 = vmatpush.bf16.msra.mxu0 %v1866
  %2088 = vmatpush.bf16.msra.mxu0 %v1864
  %2089 = vmatmul.bf16.gmra.mxu0 %v1651
  %v2090 = vpop.f32.mrf.mxu0
  %v2091 = vadd.f32 %v1922, %v2090
  %v2092 = vpop.f32.mrf.mxu0
  %v2093 = vadd.f32 %v1924, %v2092
  %2094 = vmatmul.bf16.gmra.mxu0 %v1653
  %v2095 = vpop.f32.mrf.mxu0
  %v2096 = vadd.f32 %v1927, %v2095
  %v2097 = vpop.f32.mrf.mxu0
  %v2098 = vadd.f32 %v1929, %v2097
  %2099 = vmatmul.bf16.gmra.mxu0 %v1655
  %v2100 = vpop.f32.mrf.mxu0
  %v2101 = vadd.f32 %v1932, %v2100
  %v2102 = vpop.f32.mrf.mxu0
  %v2103 = vadd.f32 %v1934, %v2102
  %2104 = vmatmul.bf16.gmra.mxu0 %v1657
  %v2105 = vpop.f32.mrf.mxu0
  %v2106 = vadd.f32 %v1937, %v2105
  %v2107 = vpop.f32.mrf.mxu0
  %v2108 = vadd.f32 %v1939, %v2107
  %2109 = vmatmul.bf16.gmra.mxu0 %v1659
  %v2110 = vpop.f32.mrf.mxu0
  %v2111 = vadd.f32 %v1942, %v2110
  %v2112 = vpop.f32.mrf.mxu0
  %v2113 = vadd.f32 %v1944, %v2112
  %2114 = vmatmul.bf16.gmra.mxu0 %v1661
  %v2115 = vpop.f32.mrf.mxu0
  %v2116 = vadd.f32 %v1947, %v2115
  %v2117 = vpop.f32.mrf.mxu0
  %v2118 = vadd.f32 %v1949, %v2117
  %2119 = vmatmul.bf16.gmra.mxu0 %v1663
  %v2120 = vpop.f32.mrf.mxu0
  %v2121 = vadd.f32 %v1952, %v2120
  %v2122 = vpop.f32.mrf.mxu0
  %v2123 = vadd.f32 %v1954, %v2122
  %2124 = vmatmul.bf16.gmra.mxu0 %v1665
  %v2125 = vpop.f32.mrf.mxu0
  %v2126 = vadd.f32 %v1957, %v2125
  %v2127 = vpop.f32.mrf.mxu0
  %v2128 = vadd.f32 %v1959, %v2127
  %2129 = vmatmul.bf16.gmra.mxu0 %v1667
  %v2130 = vpop.f32.mrf.mxu0
  %v2131 = vadd.f32 %v1962, %v2130
  %v2132 = vpop.f32.mrf.mxu0
  %v2133 = vadd.f32 %v1964, %v2132
  %2134 = vmatmul.bf16.gmra.mxu0 %v1669
  %v2135 = vpop.f32.mrf.mxu0
  %v2136 = vadd.f32 %v1967, %v2135
  %v2137 = vpop.f32.mrf.mxu0
  %v2138 = vadd.f32 %v1969, %v2137
  %2139 = vmatmul.bf16.gmra.mxu0 %v1671
  %v2140 = vpop.f32.mrf.mxu0
  %v2141 = vadd.f32 %v1972, %v2140
  %v2142 = vpop.f32.mrf.mxu0
  %v2143 = vadd.f32 %v1974, %v2142
  %2144 = vmatmul.bf16.gmra.mxu0 %v1673
  %v2145 = vpop.f32.mrf.mxu0
  %v2146 = vadd.f32 %v1977, %v2145
  %v2147 = vpop.f32.mrf.mxu0
  %v2148 = vadd.f32 %v1979, %v2147
  %2149 = vmatmul.bf16.gmra.mxu0 %v1675
  %v2150 = vpop.f32.mrf.mxu0
  %v2151 = vadd.f32 %v1982, %v2150
  %v2152 = vpop.f32.mrf.mxu0
  %v2153 = vadd.f32 %v1984, %v2152
  %2154 = vmatmul.bf16.gmra.mxu0 %v1677
  %v2155 = vpop.f32.mrf.mxu0
  %v2156 = vadd.f32 %v1987, %v2155
  %v2157 = vpop.f32.mrf.mxu0
  %v2158 = vadd.f32 %v1989, %v2157
  %2159 = vmatmul.bf16.gmra.mxu0 %v1679
  %v2160 = vpop.f32.mrf.mxu0
  %v2161 = vadd.f32 %v1992, %v2160
  %v2162 = vpop.f32.mrf.mxu0
  %v2163 = vadd.f32 %v1994, %v2162
  %2164 = vmatmul.bf16.gmra.mxu0 %v1681
  %v2165 = vpop.f32.mrf.mxu0
  %v2166 = vadd.f32 %v1997, %v2165
  %v2167 = vpop.f32.mrf.mxu0
  %v2168 = vadd.f32 %v1999, %v2167
  %2169 = vmatmul.bf16.gmra.mxu0 %v1683
  %v2170 = vpop.f32.mrf.mxu0
  %v2171 = vadd.f32 %v2002, %v2170
  %v2172 = vpop.f32.mrf.mxu0
  %v2173 = vadd.f32 %v2004, %v2172
  %2174 = vmatmul.bf16.gmra.mxu0 %v1685
  %v2175 = vpop.f32.mrf.mxu0
  %v2176 = vadd.f32 %v2007, %v2175
  %v2177 = vpop.f32.mrf.mxu0
  %v2178 = vadd.f32 %v2009, %v2177
  %2179 = vmatmul.bf16.gmra.mxu0 %v1687
  %v2180 = vpop.f32.mrf.mxu0
  %v2181 = vadd.f32 %v2012, %v2180
  %v2182 = vpop.f32.mrf.mxu0
  %v2183 = vadd.f32 %v2014, %v2182
  %2184 = vmatmul.bf16.gmra.mxu0 %v1689
  %v2185 = vpop.f32.mrf.mxu0
  %v2186 = vadd.f32 %v2017, %v2185
  %v2187 = vpop.f32.mrf.mxu0
  %v2188 = vadd.f32 %v2019, %v2187
  %2189 = vmatmul.bf16.gmra.mxu0 %v1691
  %v2190 = vpop.f32.mrf.mxu0
  %v2191 = vadd.f32 %v2022, %v2190
  %v2192 = vpop.f32.mrf.mxu0
  %v2193 = vadd.f32 %v2024, %v2192
  %2194 = vmatmul.bf16.gmra.mxu0 %v1693
  %v2195 = vpop.f32.mrf.mxu0
  %v2196 = vadd.f32 %v2027, %v2195
  %v2197 = vpop.f32.mrf.mxu0
  %v2198 = vadd.f32 %v2029, %v2197
  %2199 = vmatmul.bf16.gmra.mxu0 %v1695
  %v2200 = vpop.f32.mrf.mxu0
  %v2201 = vadd.f32 %v2032, %v2200
  %v2202 = vpop.f32.mrf.mxu0
  %v2203 = vadd.f32 %v2034, %v2202
  %2204 = vmatmul.bf16.gmra.mxu0 %v1697
  %v2205 = vpop.f32.mrf.mxu0
  %v2206 = vadd.f32 %v2037, %v2205
  %v2207 = vpop.f32.mrf.mxu0
  %v2208 = vadd.f32 %v2039, %v2207
  %2209 = vmatmul.bf16.gmra.mxu0 %v1699
  %v2210 = vpop.f32.mrf.mxu0
  %v2211 = vadd.f32 %v2042, %v2210
  %v2212 = vpop.f32.mrf.mxu0
  %v2213 = vadd.f32 %v2044, %v2212
  %2214 = vmatmul.bf16.gmra.mxu0 %v1701
  %v2215 = vpop.f32.mrf.mxu0
  %v2216 = vadd.f32 %v2047, %v2215
  %v2217 = vpop.f32.mrf.mxu0
  %v2218 = vadd.f32 %v2049, %v2217
  %2219 = vmatmul.bf16.gmra.mxu0 %v1703
  %v2220 = vpop.f32.mrf.mxu0
  %v2221 = vadd.f32 %v2052, %v2220
  %v2222 = vpop.f32.mrf.mxu0
  %v2223 = vadd.f32 %v2054, %v2222
  %2224 = vmatmul.bf16.gmra.mxu0 %v1705
  %v2225 = vpop.f32.mrf.mxu0
  %v2226 = vadd.f32 %v2057, %v2225
  %v2227 = vpop.f32.mrf.mxu0
  %v2228 = vadd.f32 %v2059, %v2227
  %2229 = vmatmul.bf16.gmra.mxu0 %v1707
  %v2230 = vpop.f32.mrf.mxu0
  %v2231 = vadd.f32 %v2062, %v2230
  %v2232 = vpop.f32.mrf.mxu0
  %v2233 = vadd.f32 %v2064, %v2232
  %2234 = vmatmul.bf16.gmra.mxu0 %v1709
  %v2235 = vpop.f32.mrf.mxu0
  %v2236 = vadd.f32 %v2067, %v2235
  %v2237 = vpop.f32.mrf.mxu0
  %v2238 = vadd.f32 %v2069, %v2237
  %2239 = vmatmul.bf16.gmra.mxu0 %v1711
  %v2240 = vpop.f32.mrf.mxu0
  %v2241 = vadd.f32 %v2072, %v2240
  %v2242 = vpop.f32.mrf.mxu0
  %v2243 = vadd.f32 %v2074, %v2242
  %2244 = vmatmul.bf16.gmra.mxu0 %v1713
  %v2245 = vpop.f32.mrf.mxu0
  %v2246 = vadd.f32 %v2077, %v2245
  %v2247 = vpop.f32.mrf.mxu0
  %v2248 = vadd.f32 %v2079, %v2247
  %2249 = vdwg.mxu0
  %2250 = vmatpush.bf16.msra.mxu0 %v1863
  %2251 = vmatpush.bf16.msra.mxu0 %v1861
  %2252 = vmatpush.bf16.msra.mxu0 %v1859
  %2253 = vmatpush.bf16.msra.mxu0 %v1857
  %2254 = vmatpush.bf16.msra.mxu0 %v1855
  %2255 = vmatpush.bf16.msra.mxu0 %v1853
  %2256 = vmatpush.bf16.msra.mxu0 %v1851
  %2257 = vmatpush.bf16.msra.mxu0 %v1849
  %2258 = vmatmul.bf16.gmra.mxu0 %v1650
  %v2259 = vpop.f32.mrf.mxu0
  %v2260 = vadd.f32 %v1749, %v2259
  %v2261 = vpop.f32.mrf.mxu0
  %v2262 = vadd.f32 %v1749, %v2261
  %2263 = vmatmul.bf16.gmra.mxu0 %v1652
  %v2264 = vpop.f32.mrf.mxu0
  %v2265 = vadd.f32 %v1749, %v2264
  %v2266 = vpop.f32.mrf.mxu0
  %v2267 = vadd.f32 %v1749, %v2266
  %2268 = vmatmul.bf16.gmra.mxu0 %v1654
  %v2269 = vpop.f32.mrf.mxu0
  %v2270 = vadd.f32 %v1749, %v2269
  %v2271 = vpop.f32.mrf.mxu0
  %v2272 = vadd.f32 %v1749, %v2271
  %2273 = vmatmul.bf16.gmra.mxu0 %v1656
  %v2274 = vpop.f32.mrf.mxu0
  %v2275 = vadd.f32 %v1749, %v2274
  %v2276 = vpop.f32.mrf.mxu0
  %v2277 = vadd.f32 %v1749, %v2276
  %2278 = vmatmul.bf16.gmra.mxu0 %v1658
  %v2279 = vpop.f32.mrf.mxu0
  %v2280 = vadd.f32 %v1749, %v2279
  %v2281 = vpop.f32.mrf.mxu0
  %v2282 = vadd.f32 %v1749, %v2281
  %2283 = vmatmul.bf16.gmra.mxu0 %v1660
  %v2284 = vpop.f32.mrf.mxu0
  %v2285 = vadd.f32 %v1749, %v2284
  %v2286 = vpop.f32.mrf.mxu0
  %v2287 = vadd.f32 %v1749, %v2286
  %2288 = vmatmul.bf16.gmra.mxu0 %v1662
  %v2289 = vpop.f32.mrf.mxu0
  %v2290 = vadd.f32 %v1749, %v2289
  %v2291 = vpop.f32.mrf.mxu0
  %v2292 = vadd.f32 %v1749, %v2291
  %2293 = vmatmul.bf16.gmra.mxu0 %v1664
  %v2294 = vpop.f32.mrf.mxu0
  %v2295 = vadd.f32 %v1749, %v2294
  %v2296 = vpop.f32.mrf.mxu0
  %v2297 = vadd.f32 %v1749, %v2296
  %2298 = vmatmul.bf16.gmra.mxu0 %v1666
  %v2299 = vpop.f32.mrf.mxu0
  %v2300 = vadd.f32 %v1749, %v2299
  %v2301 = vpop.f32.mrf.mxu0
  %v2302 = vadd.f32 %v1749, %v2301
  %2303 = vmatmul.bf16.gmra.mxu0 %v1668
  %v2304 = vpop.f32.mrf.mxu0
  %v2305 = vadd.f32 %v1749, %v2304
  %v2306 = vpop.f32.mrf.mxu0
  %v2307 = vadd.f32 %v1749, %v2306
  %2308 = vmatmul.bf16.gmra.mxu0 %v1670
  %v2309 = vpop.f32.mrf.mxu0
  %v2310 = vadd.f32 %v1749, %v2309
  %v2311 = vpop.f32.mrf.mxu0
  %v2312 = vadd.f32 %v1749, %v2311
  %2313 = vmatmul.bf16.gmra.mxu0 %v1672
  %v2314 = vpop.f32.mrf.mxu0
  %v2315 = vadd.f32 %v1749, %v2314
  %v2316 = vpop.f32.mrf.mxu0
  %v2317 = vadd.f32 %v1749, %v2316
  %2318 = vmatmul.bf16.gmra.mxu0 %v1674
  %v2319 = vpop.f32.mrf.mxu0
  %v2320 = vadd.f32 %v1749, %v2319
  %v2321 = vpop.f32.mrf.mxu0
  %v2322 = vadd.f32 %v1749, %v2321
  %2323 = vmatmul.bf16.gmra.mxu0 %v1676
  %v2324 = vpop.f32.mrf.mxu0
  %v2325 = vadd.f32 %v1749, %v2324
  %v2326 = vpop.f32.mrf.mxu0
  %v2327 = vadd.f32 %v1749, %v2326
  %2328 = vmatmul.bf16.gmra.mxu0 %v1678
  %v2329 = vpop.f32.mrf.mxu0
  %v2330 = vadd.f32 %v1749, %v2329
  %v2331 = vpop.f32.mrf.mxu0
  %v2332 = vadd.f32 %v1749, %v2331
  %2333 = vmatmul.bf16.gmra.mxu0 %v1680
  %v2334 = vpop.f32.mrf.mxu0
  %v2335 = vadd.f32 %v1749, %v2334
  %v2336 = vpop.f32.mrf.mxu0
  %v2337 = vadd.f32 %v1749, %v2336
  %2338 = vmatmul.bf16.gmra.mxu0 %v1682
  %v2339 = vpop.f32.mrf.mxu0
  %v2340 = vadd.f32 %v1749, %v2339
  %v2341 = vpop.f32.mrf.mxu0
  %v2342 = vadd.f32 %v1749, %v2341
  %2343 = vmatmul.bf16.gmra.mxu0 %v1684
  %v2344 = vpop.f32.mrf.mxu0
  %v2345 = vadd.f32 %v1749, %v2344
  %v2346 = vpop.f32.mrf.mxu0
  %v2347 = vadd.f32 %v1749, %v2346
  %2348 = vmatmul.bf16.gmra.mxu0 %v1686
  %v2349 = vpop.f32.mrf.mxu0
  %v2350 = vadd.f32 %v1749, %v2349
  %v2351 = vpop.f32.mrf.mxu0
  %v2352 = vadd.f32 %v1749, %v2351
  %2353 = vmatmul.bf16.gmra.mxu0 %v1688
  %v2354 = vpop.f32.mrf.mxu0
  %v2355 = vadd.f32 %v1749, %v2354
  %v2356 = vpop.f32.mrf.mxu0
  %v2357 = vadd.f32 %v1749, %v2356
  %2358 = vmatmul.bf16.gmra.mxu0 %v1690
  %v2359 = vpop.f32.mrf.mxu0
  %v2360 = vadd.f32 %v1749, %v2359
  %v2361 = vpop.f32.mrf.mxu0
  %v2362 = vadd.f32 %v1749, %v2361
  %2363 = vmatmul.bf16.gmra.mxu0 %v1692
  %v2364 = vpop.f32.mrf.mxu0
  %v2365 = vadd.f32 %v1749, %v2364
  %v2366 = vpop.f32.mrf.mxu0
  %v2367 = vadd.f32 %v1749, %v2366
  %2368 = vmatmul.bf16.gmra.mxu0 %v1694
  %v2369 = vpop.f32.mrf.mxu0
  %v2370 = vadd.f32 %v1749, %v2369
  %v2371 = vpop.f32.mrf.mxu0
  %v2372 = vadd.f32 %v1749, %v2371
  %2373 = vmatmul.bf16.gmra.mxu0 %v1696
  %v2374 = vpop.f32.mrf.mxu0
  %v2375 = vadd.f32 %v1749, %v2374
  %v2376 = vpop.f32.mrf.mxu0
  %v2377 = vadd.f32 %v1749, %v2376
  %2378 = vmatmul.bf16.gmra.mxu0 %v1698
  %v2379 = vpop.f32.mrf.mxu0
  %v2380 = vadd.f32 %v1749, %v2379
  %v2381 = vpop.f32.mrf.mxu0
  %v2382 = vadd.f32 %v1749, %v2381
  %2383 = vmatmul.bf16.gmra.mxu0 %v1700
  %v2384 = vpop.f32.mrf.mxu0
  %v2385 = vadd.f32 %v1749, %v2384
  %v2386 = vpop.f32.mrf.mxu0
  %v2387 = vadd.f32 %v1749, %v2386
  %2388 = vmatmul.bf16.gmra.mxu0 %v1702
  %v2389 = vpop.f32.mrf.mxu0
  %v2390 = vadd.f32 %v1749, %v2389
  %v2391 = vpop.f32.mrf.mxu0
  %v2392 = vadd.f32 %v1749, %v2391
  %2393 = vmatmul.bf16.gmra.mxu0 %v1704
  %v2394 = vpop.f32.mrf.mxu0
  %v2395 = vadd.f32 %v1749, %v2394
  %v2396 = vpop.f32.mrf.mxu0
  %v2397 = vadd.f32 %v1749, %v2396
  %2398 = vmatmul.bf16.gmra.mxu0 %v1706
  %v2399 = vpop.f32.mrf.mxu0
  %v2400 = vadd.f32 %v1749, %v2399
  %v2401 = vpop.f32.mrf.mxu0
  %v2402 = vadd.f32 %v1749, %v2401
  %2403 = vmatmul.bf16.gmra.mxu0 %v1708
  %v2404 = vpop.f32.mrf.mxu0
  %v2405 = vadd.f32 %v1749, %v2404
  %v2406 = vpop.f32.mrf.mxu0
  %v2407 = vadd.f32 %v1749, %v2406
  %2408 = vmatmul.bf16.gmra.mxu0 %v1710
  %v2409 = vpop.f32.mrf.mxu0
  %v2410 = vadd.f32 %v1749, %v2409
  %v2411 = vpop.f32.mrf.mxu0
  %v2412 = vadd.f32 %v1749, %v2411
  %2413 = vmatmul.bf16.gmra.mxu0 %v1712
  %v2414 = vpop.f32.mrf.mxu0
  %v2415 = vadd.f32 %v1749, %v2414
  %v2416 = vpop.f32.mrf.mxu0
  %v2417 = vadd.f32 %v1749, %v2416
  %2418 = vdwg.mxu0
  %2419 = vmatpush.bf16.msra.mxu0 %v1879
  %2420 = vmatpush.bf16.msra.mxu0 %v1877
  %2421 = vmatpush.bf16.msra.mxu0 %v1875
  %2422 = vmatpush.bf16.msra.mxu0 %v1873
  %2423 = vmatpush.bf16.msra.mxu0 %v1871
  %2424 = vmatpush.bf16.msra.mxu0 %v1869
  %2425 = vmatpush.bf16.msra.mxu0 %v1867
  %2426 = vmatpush.bf16.msra.mxu0 %v1865
  %2427 = vmatmul.bf16.gmra.mxu0 %v1651
  %v2428 = vpop.f32.mrf.mxu0
  %v2429 = vadd.f32 %v2260, %v2428
  %v2430 = vpop.f32.mrf.mxu0
  %v2431 = vadd.f32 %v2262, %v2430
  %2432 = vmatmul.bf16.gmra.mxu0 %v1653
  %v2433 = vpop.f32.mrf.mxu0
  %v2434 = vadd.f32 %v2265, %v2433
  %v2435 = vpop.f32.mrf.mxu0
  %v2436 = vadd.f32 %v2267, %v2435
  %2437 = vmatmul.bf16.gmra.mxu0 %v1655
  %v2438 = vpop.f32.mrf.mxu0
  %v2439 = vadd.f32 %v2270, %v2438
  %v2440 = vpop.f32.mrf.mxu0
  %v2441 = vadd.f32 %v2272, %v2440
  %2442 = vmatmul.bf16.gmra.mxu0 %v1657
  %v2443 = vpop.f32.mrf.mxu0
  %v2444 = vadd.f32 %v2275, %v2443
  %v2445 = vpop.f32.mrf.mxu0
  %v2446 = vadd.f32 %v2277, %v2445
  %2447 = vmatmul.bf16.gmra.mxu0 %v1659
  %v2448 = vpop.f32.mrf.mxu0
  %v2449 = vadd.f32 %v2280, %v2448
  %v2450 = vpop.f32.mrf.mxu0
  %v2451 = vadd.f32 %v2282, %v2450
  %2452 = vmatmul.bf16.gmra.mxu0 %v1661
  %v2453 = vpop.f32.mrf.mxu0
  %v2454 = vadd.f32 %v2285, %v2453
  %v2455 = vpop.f32.mrf.mxu0
  %v2456 = vadd.f32 %v2287, %v2455
  %2457 = vmatmul.bf16.gmra.mxu0 %v1663
  %v2458 = vpop.f32.mrf.mxu0
  %v2459 = vadd.f32 %v2290, %v2458
  %v2460 = vpop.f32.mrf.mxu0
  %v2461 = vadd.f32 %v2292, %v2460
  %2462 = vmatmul.bf16.gmra.mxu0 %v1665
  %v2463 = vpop.f32.mrf.mxu0
  %v2464 = vadd.f32 %v2295, %v2463
  %v2465 = vpop.f32.mrf.mxu0
  %v2466 = vadd.f32 %v2297, %v2465
  %2467 = vmatmul.bf16.gmra.mxu0 %v1667
  %v2468 = vpop.f32.mrf.mxu0
  %v2469 = vadd.f32 %v2300, %v2468
  %v2470 = vpop.f32.mrf.mxu0
  %v2471 = vadd.f32 %v2302, %v2470
  %2472 = vmatmul.bf16.gmra.mxu0 %v1669
  %v2473 = vpop.f32.mrf.mxu0
  %v2474 = vadd.f32 %v2305, %v2473
  %v2475 = vpop.f32.mrf.mxu0
  %v2476 = vadd.f32 %v2307, %v2475
  %2477 = vmatmul.bf16.gmra.mxu0 %v1671
  %v2478 = vpop.f32.mrf.mxu0
  %v2479 = vadd.f32 %v2310, %v2478
  %v2480 = vpop.f32.mrf.mxu0
  %v2481 = vadd.f32 %v2312, %v2480
  %2482 = vmatmul.bf16.gmra.mxu0 %v1673
  %v2483 = vpop.f32.mrf.mxu0
  %v2484 = vadd.f32 %v2315, %v2483
  %v2485 = vpop.f32.mrf.mxu0
  %v2486 = vadd.f32 %v2317, %v2485
  %2487 = vmatmul.bf16.gmra.mxu0 %v1675
  %v2488 = vpop.f32.mrf.mxu0
  %v2489 = vadd.f32 %v2320, %v2488
  %v2490 = vpop.f32.mrf.mxu0
  %v2491 = vadd.f32 %v2322, %v2490
  %2492 = vmatmul.bf16.gmra.mxu0 %v1677
  %v2493 = vpop.f32.mrf.mxu0
  %v2494 = vadd.f32 %v2325, %v2493
  %v2495 = vpop.f32.mrf.mxu0
  %v2496 = vadd.f32 %v2327, %v2495
  %2497 = vmatmul.bf16.gmra.mxu0 %v1679
  %v2498 = vpop.f32.mrf.mxu0
  %v2499 = vadd.f32 %v2330, %v2498
  %v2500 = vpop.f32.mrf.mxu0
  %v2501 = vadd.f32 %v2332, %v2500
  %2502 = vmatmul.bf16.gmra.mxu0 %v1681
  %v2503 = vpop.f32.mrf.mxu0
  %v2504 = vadd.f32 %v2335, %v2503
  %v2505 = vpop.f32.mrf.mxu0
  %v2506 = vadd.f32 %v2337, %v2505
  %2507 = vmatmul.bf16.gmra.mxu0 %v1683
  %v2508 = vpop.f32.mrf.mxu0
  %v2509 = vadd.f32 %v2340, %v2508
  %v2510 = vpop.f32.mrf.mxu0
  %v2511 = vadd.f32 %v2342, %v2510
  %2512 = vmatmul.bf16.gmra.mxu0 %v1685
  %v2513 = vpop.f32.mrf.mxu0
  %v2514 = vadd.f32 %v2345, %v2513
  %v2515 = vpop.f32.mrf.mxu0
  %v2516 = vadd.f32 %v2347, %v2515
  %2517 = vmatmul.bf16.gmra.mxu0 %v1687
  %v2518 = vpop.f32.mrf.mxu0
  %v2519 = vadd.f32 %v2350, %v2518
  %v2520 = vpop.f32.mrf.mxu0
  %v2521 = vadd.f32 %v2352, %v2520
  %2522 = vmatmul.bf16.gmra.mxu0 %v1689
  %v2523 = vpop.f32.mrf.mxu0
  %v2524 = vadd.f32 %v2355, %v2523
  %v2525 = vpop.f32.mrf.mxu0
  %v2526 = vadd.f32 %v2357, %v2525
  %2527 = vmatmul.bf16.gmra.mxu0 %v1691
  %v2528 = vpop.f32.mrf.mxu0
  %v2529 = vadd.f32 %v2360, %v2528
  %v2530 = vpop.f32.mrf.mxu0
  %v2531 = vadd.f32 %v2362, %v2530
  %2532 = vmatmul.bf16.gmra.mxu0 %v1693
  %v2533 = vpop.f32.mrf.mxu0
  %v2534 = vadd.f32 %v2365, %v2533
  %v2535 = vpop.f32.mrf.mxu0
  %v2536 = vadd.f32 %v2367, %v2535
  %2537 = vmatmul.bf16.gmra.mxu0 %v1695
  %v2538 = vpop.f32.mrf.mxu0
  %v2539 = vadd.f32 %v2370, %v2538
  %v2540 = vpop.f32.mrf.mxu0
  %v2541 = vadd.f32 %v2372, %v2540
  %2542 = vmatmul.bf16.gmra.mxu0 %v1697
  %v2543 = vpop.f32.mrf.mxu0
  %v2544 = vadd.f32 %v2375, %v2543
  %v2545 = vpop.f32.mrf.mxu0
  %v2546 = vadd.f32 %v2377, %v2545
  %2547 = vmatmul.bf16.gmra.mxu0 %v1699
  %v2548 = vpop.f32.mrf.mxu0
  %v2549 = vadd.f32 %v2380, %v2548
  %v2550 = vpop.f32.mrf.mxu0
  %v2551 = vadd.f32 %v2382, %v2550
  %2552 = vmatmul.bf16.gmra.mxu0 %v1701
  %v2553 = vpop.f32.mrf.mxu0
  %v2554 = vadd.f32 %v2385, %v2553
  %v2555 = vpop.f32.mrf.mxu0
  %v2556 = vadd.f32 %v2387, %v2555
  %2557 = vmatmul.bf16.gmra.mxu0 %v1703
  %v2558 = vpop.f32.mrf.mxu0
  %v2559 = vadd.f32 %v2390, %v2558
  %v2560 = vpop.f32.mrf.mxu0
  %v2561 = vadd.f32 %v2392, %v2560
  %2562 = vmatmul.bf16.gmra.mxu0 %v1705
  %v2563 = vpop.f32.mrf.mxu0
  %v2564 = vadd.f32 %v2395, %v2563
  %v2565 = vpop.f32.mrf.mxu0
  %v2566 = vadd.f32 %v2397, %v2565
  %2567 = vmatmul.bf16.gmra.mxu0 %v1707
  %v2568 = vpop.f32.mrf.mxu0
  %v2569 = vadd.f32 %v2400, %v2568
  %v2570 = vpop.f32.mrf.mxu0
  %v2571 = vadd.f32 %v2402, %v2570
  %2572 = vmatmul.bf16.gmra.mxu0 %v1709
  %v2573 = vpop.f32.mrf.mxu0
  %v2574 = vadd.f32 %v2405, %v2573
  %v2575 = vpop.f32.mrf.mxu0
  %v2576 = vadd.f32 %v2407, %v2575
  %2577 = vmatmul.bf16.gmra.mxu0 %v1711
  %v2578 = vpop.f32.mrf.mxu0
  %v2579 = vadd.f32 %v2410, %v2578
  %v2580 = vpop.f32.mrf.mxu0
  %v2581 = vadd.f32 %v2412, %v2580
  %2582 = vmatmul.bf16.gmra.mxu0 %v1713
  %v2583 = vpop.f32.mrf.mxu0
  %v2584 = vadd.f32 %v2415, %v2583
  %v2585 = vpop.f32.mrf.mxu0
  %v2586 = vadd.f32 %v2417, %v2585
  %2587 = vdwg.mxu0
  %v2588 = vmax.f32 %v2091, 0.0
  %v2589 = vmax.f32 %v2429, 0.0
  %v2590 = vmax.f32 %v2093, 0.0
  %v2591 = vmax.f32 %v2431, 0.0
  %v2592 = vmax.f32 %v2096, 0.0
  %v2593 = vmax.f32 %v2434, 0.0
  %v2594 = vmax.f32 %v2098, 0.0
  %v2595 = vmax.f32 %v2436, 0.0
  %v2596 = vmax.f32 %v2101, 0.0
  %v2597 = vmax.f32 %v2439, 0.0
  %v2598 = vmax.f32 %v2103, 0.0
  %v2599 = vmax.f32 %v2441, 0.0
  %v2600 = vmax.f32 %v2106, 0.0
  %v2601 = vmax.f32 %v2444, 0.0
  %v2602 = vmax.f32 %v2108, 0.0
  %v2603 = vmax.f32 %v2446, 0.0
  %v2604 = vmax.f32 %v2111, 0.0
  %v2605 = vmax.f32 %v2449, 0.0
  %v2606 = vmax.f32 %v2113, 0.0
  %v2607 = vmax.f32 %v2451, 0.0
  %v2608 = vmax.f32 %v2116, 0.0
  %v2609 = vmax.f32 %v2454, 0.0
  %v2610 = vmax.f32 %v2118, 0.0
  %v2611 = vmax.f32 %v2456, 0.0
  %v2612 = vmax.f32 %v2121, 0.0
  %v2613 = vmax.f32 %v2459, 0.0
  %v2614 = vmax.f32 %v2123, 0.0
  %v2615 = vmax.f32 %v2461, 0.0
  %v2616 = vmax.f32 %v2126, 0.0
  %v2617 = vmax.f32 %v2464, 0.0
  %v2618 = vmax.f32 %v2128, 0.0
  %v2619 = vmax.f32 %v2466, 0.0
  %v2620 = vmax.f32 %v2131, 0.0
  %v2621 = vmax.f32 %v2469, 0.0
  %v2622 = vmax.f32 %v2133, 0.0
  %v2623 = vmax.f32 %v2471, 0.0
  %v2624 = vmax.f32 %v2136, 0.0
  %v2625 = vmax.f32 %v2474, 0.0
  %v2626 = vmax.f32 %v2138, 0.0
  %v2627 = vmax.f32 %v2476, 0.0
  %v2628 = vmax.f32 %v2141, 0.0
  %v2629 = vmax.f32 %v2479, 0.0
  %v2630 = vmax.f32 %v2143, 0.0
  %v2631 = vmax.f32 %v2481, 0.0
  %v2632 = vmax.f32 %v2146, 0.0
  %v2633 = vmax.f32 %v2484, 0.0
  %v2634 = vmax.f32 %v2148, 0.0
  %v2635 = vmax.f32 %v2486, 0.0
  %v2636 = vmax.f32 %v2151, 0.0
  %v2637 = vmax.f32 %v2489, 0.0
  %v2638 = vmax.f32 %v2153, 0.0
  %v2639 = vmax.f32 %v2491, 0.0
  %v2640 = vmax.f32 %v2156, 0.0
  %v2641 = vmax.f32 %v2494, 0.0
  %v2642 = vmax.f32 %v2158, 0.0
  %v2643 = vmax.f32 %v2496, 0.0
  %v2644 = vmax.f32 %v2161, 0.0
  %v2645 = vmax.f32 %v2499, 0.0
  %v2646 = vmax.f32 %v2163, 0.0
  %v2647 = vmax.f32 %v2501, 0.0
  %v2648 = vmax.f32 %v2166, 0.0
  %v2649 = vmax.f32 %v2504, 0.0
  %v2650 = vmax.f32 %v2168, 0.0
  %v2651 = vmax.f32 %v2506, 0.0
  %v2652 = vmax.f32 %v2171, 0.0
  %v2653 = vmax.f32 %v2509, 0.0
  %v2654 = vmax.f32 %v2173, 0.0
  %v2655 = vmax.f32 %v2511, 0.0
  %v2656 = vmax.f32 %v2176, 0.0
  %v2657 = vmax.f32 %v2514, 0.0
  %v2658 = vmax.f32 %v2178, 0.0
  %v2659 = vmax.f32 %v2516, 0.0
  %v2660 = vmax.f32 %v2181, 0.0
  %v2661 = vmax.f32 %v2519, 0.0
  %v2662 = vmax.f32 %v2183, 0.0
  %v2663 = vmax.f32 %v2521, 0.0
  %v2664 = vmax.f32 %v2186, 0.0
  %v2665 = vmax.f32 %v2524, 0.0
  %v2666 = vmax.f32 %v2188, 0.0
  %v2667 = vmax.f32 %v2526, 0.0
  %v2668 = vmax.f32 %v2191, 0.0
  %v2669 = vmax.f32 %v2529, 0.0
  %v2670 = vmax.f32 %v2193, 0.0
  %v2671 = vmax.f32 %v2531, 0.0
  %v2672 = vmax.f32 %v2196, 0.0
  %v2673 = vmax.f32 %v2534, 0.0
  %v2674 = vmax.f32 %v2198, 0.0
  %v2675 = vmax.f32 %v2536, 0.0
  %v2676 = vmax.f32 %v2201, 0.0
  %v2677 = vmax.f32 %v2539, 0.0
  %v2678 = vmax.f32 %v2203, 0.0
  %v2679 = vmax.f32 %v2541, 0.0
  %v2680 = vmax.f32 %v2206, 0.0
  %v2681 = vmax.f32 %v2544, 0.0
  %v2682 = vmax.f32 %v2208, 0.0
  %v2683 = vmax.f32 %v2546, 0.0
  %v2684 = vmax.f32 %v2211, 0.0
  %v2685 = vmax.f32 %v2549, 0.0
  %v2686 = vmax.f32 %v2213, 0.0
  %v2687 = vmax.f32 %v2551, 0.0
  %v2688 = vmax.f32 %v2216, 0.0
  %v2689 = vmax.f32 %v2554, 0.0
  %v2690 = vmax.f32 %v2218, 0.0
  %v2691 = vmax.f32 %v2556, 0.0
  %v2692 = vmax.f32 %v2221, 0.0
  %v2693 = vmax.f32 %v2559, 0.0
  %v2694 = vmax.f32 %v2223, 0.0
  %v2695 = vmax.f32 %v2561, 0.0
  %v2696 = vmax.f32 %v2226, 0.0
  %v2697 = vmax.f32 %v2564, 0.0
  %v2698 = vmax.f32 %v2228, 0.0
  %v2699 = vmax.f32 %v2566, 0.0
  %v2700 = vmax.f32 %v2231, 0.0
  %v2701 = vmax.f32 %v2569, 0.0
  %v2702 = vmax.f32 %v2233, 0.0
  %v2703 = vmax.f32 %v2571, 0.0
  %v2704 = vmax.f32 %v2236, 0.0
  %v2705 = vmax.f32 %v2574, 0.0
  %v2706 = vmax.f32 %v2238, 0.0
  %v2707 = vmax.f32 %v2576, 0.0
  %v2708 = vmax.f32 %v2241, 0.0
  %v2709 = vmax.f32 %v2579, 0.0
  %v2710 = vmax.f32 %v2243, 0.0
  %v2711 = vmax.f32 %v2581, 0.0
  %v2712 = vmax.f32 %v2246, 0.0
  %v2713 = vmax.f32 %v2584, 0.0
  %v2714 = vmax.f32 %v2248, 0.0
  %v2715 = vmax.f32 %v2586, 0.0
  %v2716 = vpack.c.bf16 %v2590, %v2588
  %v2717 = vpack.c.bf16 %v2591, %v2589
  %v2718 = vpack.c.bf16 %v2594, %v2592
  %v2719 = vpack.c.bf16 %v2595, %v2593
  %v2720 = vpack.c.bf16 %v2598, %v2596
  %v2721 = vpack.c.bf16 %v2599, %v2597
  %v2722 = vpack.c.bf16 %v2602, %v2600
  %v2723 = vpack.c.bf16 %v2603, %v2601
  %v2724 = vpack.c.bf16 %v2606, %v2604
  %v2725 = vpack.c.bf16 %v2607, %v2605
  %v2726 = vpack.c.bf16 %v2610, %v2608
  %v2727 = vpack.c.bf16 %v2611, %v2609
  %v2728 = vpack.c.bf16 %v2614, %v2612
  %v2729 = vpack.c.bf16 %v2615, %v2613
  %v2730 = vpack.c.bf16 %v2618, %v2616
  %v2731 = vpack.c.bf16 %v2619, %v2617
  %v2732 = vpack.c.bf16 %v2622, %v2620
  %v2733 = vpack.c.bf16 %v2623, %v2621
  %v2734 = vpack.c.bf16 %v2626, %v2624
  %v2735 = vpack.c.bf16 %v2627, %v2625
  %v2736 = vpack.c.bf16 %v2630, %v2628
  %v2737 = vpack.c.bf16 %v2631, %v2629
  %v2738 = vpack.c.bf16 %v2634, %v2632
  %v2739 = vpack.c.bf16 %v2635, %v2633
  %v2740 = vpack.c.bf16 %v2638, %v2636
  %v2741 = vpack.c.bf16 %v2639, %v2637
  %v2742 = vpack.c.bf16 %v2642, %v2640
  %v2743 = vpack.c.bf16 %v2643, %v2641
  %v2744 = vpack.c.bf16 %v2646, %v2644
  %v2745 = vpack.c.bf16 %v2647, %v2645
  %v2746 = vpack.c.bf16 %v2650, %v2648
  %v2747 = vpack.c.bf16 %v2651, %v2649
  %v2748 = vpack.c.bf16 %v2654, %v2652
  %v2749 = vpack.c.bf16 %v2655, %v2653
  %v2750 = vpack.c.bf16 %v2658, %v2656
  %v2751 = vpack.c.bf16 %v2659, %v2657
  %v2752 = vpack.c.bf16 %v2662, %v2660
  %v2753 = vpack.c.bf16 %v2663, %v2661
  %v2754 = vpack.c.bf16 %v2666, %v2664
  %v2755 = vpack.c.bf16 %v2667, %v2665
  %v2756 = vpack.c.bf16 %v2670, %v2668
  %v2757 = vpack.c.bf16 %v2671, %v2669
  %v2758 = vpack.c.bf16 %v2674, %v2672
  %v2759 = vpack.c.bf16 %v2675, %v2673
  %v2760 = vpack.c.bf16 %v2678, %v2676
  %v2761 = vpack.c.bf16 %v2679, %v2677
  %v2762 = vpack.c.bf16 %v2682, %v2680
  %v2763 = vpack.c.bf16 %v2683, %v2681
  %v2764 = vpack.c.bf16 %v2686, %v2684
  %v2765 = vpack.c.bf16 %v2687, %v2685
  %v2766 = vpack.c.bf16 %v2690, %v2688
  %v2767 = vpack.c.bf16 %v2691, %v2689
  %v2768 = vpack.c.bf16 %v2694, %v2692
  %v2769 = vpack.c.bf16 %v2695, %v2693
  %v2770 = vpack.c.bf16 %v2698, %v2696
  %v2771 = vpack.c.bf16 %v2699, %v2697
  %v2772 = vpack.c.bf16 %v2702, %v2700
  %v2773 = vpack.c.bf16 %v2703, %v2701
  %v2774 = vpack.c.bf16 %v2706, %v2704
  %v2775 = vpack.c.bf16 %v2707, %v2705
  %v2776 = vpack.c.bf16 %v2710, %v2708
  %v2777 = vpack.c.bf16 %v2711, %v2709
  %v2778 = vpack.c.bf16 %v2714, %v2712
  %v2779 = vpack.c.bf16 %v2715, %v2713
  %v2780 = vld [vmem:[%s7] sm:$0xff]
  %v2781 = vld [vmem:[%s7 + $0x8] sm:$0xff]
  %v2782 = vld [vmem:[%s7 + $0x10] sm:$0xff]
  %v2783 = vld [vmem:[%s7 + $0x18] sm:$0xff]
  %v2784 = vld [vmem:[%s7 + $0x20] sm:$0xff]
  %v2785 = vld [vmem:[%s7 + $0x28] sm:$0xff]
  %v2786 = vld [vmem:[%s7 + $0x30] sm:$0xff]
  %v2787 = vld [vmem:[%s7 + $0x38] sm:$0xff]
  %v2788 = vld [vmem:[%s7 + $0x40] sm:$0xff]
  %v2789 = vld [vmem:[%s7 + $0x48] sm:$0xff]
  %v2790 = vld [vmem:[%s7 + $0x50] sm:$0xff]
  %v2791 = vld [vmem:[%s7 + $0x58] sm:$0xff]
  %v2792 = vld [vmem:[%s7 + $0x60] sm:$0xff]
  %v2793 = vld [vmem:[%s7 + $0x68] sm:$0xff]
  %v2794 = vld [vmem:[%s7 + $0x70] sm:$0xff]
  %v2795 = vld [vmem:[%s7 + $0x78] sm:$0xff]
  %v2796 = vld [vmem:[%s7 + $0x80] sm:$0xff]
  %v2797 = vld [vmem:[%s7 + $0x88] sm:$0xff]
  %v2798 = vld [vmem:[%s7 + $0x90] sm:$0xff]
  %v2799 = vld [vmem:[%s7 + $0x98] sm:$0xff]
  %v2800 = vld [vmem:[%s7 + $0xa0] sm:$0xff]
  %v2801 = vld [vmem:[%s7 + $0xa8] sm:$0xff]
  %v2802 = vld [vmem:[%s7 + $0xb0] sm:$0xff]
  %v2803 = vld [vmem:[%s7 + $0xb8] sm:$0xff]
  %v2804 = vld [vmem:[%s7 + $0xc0] sm:$0xff]
  %v2805 = vld [vmem:[%s7 + $0xc8] sm:$0xff]
  %v2806 = vld [vmem:[%s7 + $0xd0] sm:$0xff]
  %v2807 = vld [vmem:[%s7 + $0xd8] sm:$0xff]
  %v2808 = vld [vmem:[%s7 + $0xe0] sm:$0xff]
  %v2809 = vld [vmem:[%s7 + $0xe8] sm:$0xff]
  %v2810 = vld [vmem:[%s7 + $0xf0] sm:$0xff]
  %v2811 = vld [vmem:[%s7 + $0xf8] sm:$0xff]
  %v2812 = vld [vmem:[%s8] sm:$0x3]
  %v2814 = vperm.slane %v2812, 0
  %v2815 = vperm.slane %v2812, 1
  %v2850 = vunpack.c.l.b16 %v2780
  %v2851 = vunpack.c.h.b16 %v2780
  %v2852 = vunpack.c.l.b16 %v2781
  %v2853 = vunpack.c.h.b16 %v2781
  %v2854 = vunpack.c.l.b16 %v2782
  %v2855 = vunpack.c.h.b16 %v2782
  %v2856 = vunpack.c.l.b16 %v2783
  %v2857 = vunpack.c.h.b16 %v2783
  %v2858 = vunpack.c.l.b16 %v2784
  %v2859 = vunpack.c.h.b16 %v2784
  %v2860 = vunpack.c.l.b16 %v2785
  %v2861 = vunpack.c.h.b16 %v2785
  %v2862 = vunpack.c.l.b16 %v2786
  %v2863 = vunpack.c.h.b16 %v2786
  %v2864 = vunpack.c.l.b16 %v2787
  %v2865 = vunpack.c.h.b16 %v2787
  %v2866 = vunpack.c.l.b16 %v2788
  %v2867 = vunpack.c.h.b16 %v2788
  %v2868 = vunpack.c.l.b16 %v2789
  %v2869 = vunpack.c.h.b16 %v2789
  %v2870 = vunpack.c.l.b16 %v2790
  %v2871 = vunpack.c.h.b16 %v2790
  %v2872 = vunpack.c.l.b16 %v2791
  %v2873 = vunpack.c.h.b16 %v2791
  %v2874 = vunpack.c.l.b16 %v2792
  %v2875 = vunpack.c.h.b16 %v2792
  %v2876 = vunpack.c.l.b16 %v2793
  %v2877 = vunpack.c.h.b16 %v2793
  %v2878 = vunpack.c.l.b16 %v2794
  %v2879 = vunpack.c.h.b16 %v2794
  %v2880 = vunpack.c.l.b16 %v2795
  %v2881 = vunpack.c.h.b16 %v2795
  %v2882 = vunpack.c.l.b16 %v2796
  %v2883 = vunpack.c.h.b16 %v2796
  %v2884 = vunpack.c.l.b16 %v2797
  %v2885 = vunpack.c.h.b16 %v2797
  %v2886 = vunpack.c.l.b16 %v2798
  %v2887 = vunpack.c.h.b16 %v2798
  %v2888 = vunpack.c.l.b16 %v2799
  %v2889 = vunpack.c.h.b16 %v2799
  %v2890 = vunpack.c.l.b16 %v2800
  %v2891 = vunpack.c.h.b16 %v2800
  %v2892 = vunpack.c.l.b16 %v2801
  %v2893 = vunpack.c.h.b16 %v2801
  %v2894 = vunpack.c.l.b16 %v2802
  %v2895 = vunpack.c.h.b16 %v2802
  %v2896 = vunpack.c.l.b16 %v2803
  %v2897 = vunpack.c.h.b16 %v2803
  %v2898 = vunpack.c.l.b16 %v2804
  %v2899 = vunpack.c.h.b16 %v2804
  %v2900 = vunpack.c.l.b16 %v2805
  %v2901 = vunpack.c.h.b16 %v2805
  %v2902 = vunpack.c.l.b16 %v2806
  %v2903 = vunpack.c.h.b16 %v2806
  %v2904 = vunpack.c.l.b16 %v2807
  %v2905 = vunpack.c.h.b16 %v2807
  %v2906 = vunpack.c.l.b16 %v2808
  %v2907 = vunpack.c.h.b16 %v2808
  %v2908 = vunpack.c.l.b16 %v2809
  %v2909 = vunpack.c.h.b16 %v2809
  %v2910 = vunpack.c.l.b16 %v2810
  %v2911 = vunpack.c.h.b16 %v2810
  %v2912 = vunpack.c.l.b16 %v2811
  %v2913 = vunpack.c.h.b16 %v2811
  %v2914 = vpack.c.b16 %v2852, %v2850
  %v2915 = vpack.c.b16 %v2853, %v2851
  %v2916 = vpack.c.b16 %v2856, %v2854
  %v2917 = vpack.c.b16 %v2857, %v2855
  %v2918 = vpack.c.b16 %v2860, %v2858
  %v2919 = vpack.c.b16 %v2861, %v2859
  %v2920 = vpack.c.b16 %v2864, %v2862
  %v2921 = vpack.c.b16 %v2865, %v2863
  %v2922 = vpack.c.b16 %v2868, %v2866
  %v2923 = vpack.c.b16 %v2869, %v2867
  %v2924 = vpack.c.b16 %v2872, %v2870
  %v2925 = vpack.c.b16 %v2873, %v2871
  %v2926 = vpack.c.b16 %v2876, %v2874
  %v2927 = vpack.c.b16 %v2877, %v2875
  %v2928 = vpack.c.b16 %v2880, %v2878
  %v2929 = vpack.c.b16 %v2881, %v2879
  %v2930 = vpack.c.b16 %v2884, %v2882
  %v2931 = vpack.c.b16 %v2885, %v2883
  %v2932 = vpack.c.b16 %v2888, %v2886
  %v2933 = vpack.c.b16 %v2889, %v2887
  %v2934 = vpack.c.b16 %v2892, %v2890
  %v2935 = vpack.c.b16 %v2893, %v2891
  %v2936 = vpack.c.b16 %v2896, %v2894
  %v2937 = vpack.c.b16 %v2897, %v2895
  %v2938 = vpack.c.b16 %v2900, %v2898
  %v2939 = vpack.c.b16 %v2901, %v2899
  %v2940 = vpack.c.b16 %v2904, %v2902
  %v2941 = vpack.c.b16 %v2905, %v2903
  %v2942 = vpack.c.b16 %v2908, %v2906
  %v2943 = vpack.c.b16 %v2909, %v2907
  %v2944 = vpack.c.b16 %v2912, %v2910
  %v2945 = vpack.c.b16 %v2913, %v2911
  %2978 = vmatpush.bf16.msra.mxu0 %v2928
  %2979 = vmatpush.bf16.msra.mxu0 %v2926
  %2980 = vmatpush.bf16.msra.mxu0 %v2924
  %2981 = vmatpush.bf16.msra.mxu0 %v2922
  %2982 = vmatpush.bf16.msra.mxu0 %v2920
  %2983 = vmatpush.bf16.msra.mxu0 %v2918
  %2984 = vmatpush.bf16.msra.mxu0 %v2916
  %2985 = vmatpush.bf16.msra.mxu0 %v2914
  %2986 = vmatmul.bf16.gmra.mxu0 %v2716
  %v2987 = vpop.f32.mrf.mxu0
  %v2988 = vadd.f32 %v2814, %v2987
  %v2989 = vpop.f32.mrf.mxu0
  %v2990 = vadd.f32 %v2814, %v2989
  %2991 = vmatmul.bf16.gmra.mxu0 %v2718
  %v2992 = vpop.f32.mrf.mxu0
  %v2993 = vadd.f32 %v2814, %v2992
  %v2994 = vpop.f32.mrf.mxu0
  %v2995 = vadd.f32 %v2814, %v2994
  %2996 = vmatmul.bf16.gmra.mxu0 %v2720
  %v2997 = vpop.f32.mrf.mxu0
  %v2998 = vadd.f32 %v2814, %v2997
  %v2999 = vpop.f32.mrf.mxu0
  %v3000 = vadd.f32 %v2814, %v2999
  %3001 = vmatmul.bf16.gmra.mxu0 %v2722
  %v3002 = vpop.f32.mrf.mxu0
  %v3003 = vadd.f32 %v2814, %v3002
  %v3004 = vpop.f32.mrf.mxu0
  %v3005 = vadd.f32 %v2814, %v3004
  %3006 = vmatmul.bf16.gmra.mxu0 %v2724
  %v3007 = vpop.f32.mrf.mxu0
  %v3008 = vadd.f32 %v2814, %v3007
  %v3009 = vpop.f32.mrf.mxu0
  %v3010 = vadd.f32 %v2814, %v3009
  %3011 = vmatmul.bf16.gmra.mxu0 %v2726
  %v3012 = vpop.f32.mrf.mxu0
  %v3013 = vadd.f32 %v2814, %v3012
  %v3014 = vpop.f32.mrf.mxu0
  %v3015 = vadd.f32 %v2814, %v3014
  %3016 = vmatmul.bf16.gmra.mxu0 %v2728
  %v3017 = vpop.f32.mrf.mxu0
  %v3018 = vadd.f32 %v2814, %v3017
  %v3019 = vpop.f32.mrf.mxu0
  %v3020 = vadd.f32 %v2814, %v3019
  %3021 = vmatmul.bf16.gmra.mxu0 %v2730
  %v3022 = vpop.f32.mrf.mxu0
  %v3023 = vadd.f32 %v2814, %v3022
  %v3024 = vpop.f32.mrf.mxu0
  %v3025 = vadd.f32 %v2814, %v3024
  %3026 = vmatmul.bf16.gmra.mxu0 %v2732
  %v3027 = vpop.f32.mrf.mxu0
  %v3028 = vadd.f32 %v2814, %v3027
  %v3029 = vpop.f32.mrf.mxu0
  %v3030 = vadd.f32 %v2814, %v3029
  %3031 = vmatmul.bf16.gmra.mxu0 %v2734
  %v3032 = vpop.f32.mrf.mxu0
  %v3033 = vadd.f32 %v2814, %v3032
  %v3034 = vpop.f32.mrf.mxu0
  %v3035 = vadd.f32 %v2814, %v3034
  %3036 = vmatmul.bf16.gmra.mxu0 %v2736
  %v3037 = vpop.f32.mrf.mxu0
  %v3038 = vadd.f32 %v2814, %v3037
  %v3039 = vpop.f32.mrf.mxu0
  %v3040 = vadd.f32 %v2814, %v3039
  %3041 = vmatmul.bf16.gmra.mxu0 %v2738
  %v3042 = vpop.f32.mrf.mxu0
  %v3043 = vadd.f32 %v2814, %v3042
  %v3044 = vpop.f32.mrf.mxu0
  %v3045 = vadd.f32 %v2814, %v3044
  %3046 = vmatmul.bf16.gmra.mxu0 %v2740
  %v3047 = vpop.f32.mrf.mxu0
  %v3048 = vadd.f32 %v2814, %v3047
  %v3049 = vpop.f32.mrf.mxu0
  %v3050 = vadd.f32 %v2814, %v3049
  %3051 = vmatmul.bf16.gmra.mxu0 %v2742
  %v3052 = vpop.f32.mrf.mxu0
  %v3053 = vadd.f32 %v2814, %v3052
  %v3054 = vpop.f32.mrf.mxu0
  %v3055 = vadd.f32 %v2814, %v3054
  %3056 = vmatmul.bf16.gmra.mxu0 %v2744
  %v3057 = vpop.f32.mrf.mxu0
  %v3058 = vadd.f32 %v2814, %v3057
  %v3059 = vpop.f32.mrf.mxu0
  %v3060 = vadd.f32 %v2814, %v3059
  %3061 = vmatmul.bf16.gmra.mxu0 %v2746
  %v3062 = vpop.f32.mrf.mxu0
  %v3063 = vadd.f32 %v2814, %v3062
  %v3064 = vpop.f32.mrf.mxu0
  %v3065 = vadd.f32 %v2814, %v3064
  %3066 = vmatmul.bf16.gmra.mxu0 %v2748
  %v3067 = vpop.f32.mrf.mxu0
  %v3068 = vadd.f32 %v2814, %v3067
  %v3069 = vpop.f32.mrf.mxu0
  %v3070 = vadd.f32 %v2814, %v3069
  %3071 = vmatmul.bf16.gmra.mxu0 %v2750
  %v3072 = vpop.f32.mrf.mxu0
  %v3073 = vadd.f32 %v2814, %v3072
  %v3074 = vpop.f32.mrf.mxu0
  %v3075 = vadd.f32 %v2814, %v3074
  %3076 = vmatmul.bf16.gmra.mxu0 %v2752
  %v3077 = vpop.f32.mrf.mxu0
  %v3078 = vadd.f32 %v2814, %v3077
  %v3079 = vpop.f32.mrf.mxu0
  %v3080 = vadd.f32 %v2814, %v3079
  %3081 = vmatmul.bf16.gmra.mxu0 %v2754
  %v3082 = vpop.f32.mrf.mxu0
  %v3083 = vadd.f32 %v2814, %v3082
  %v3084 = vpop.f32.mrf.mxu0
  %v3085 = vadd.f32 %v2814, %v3084
  %3086 = vmatmul.bf16.gmra.mxu0 %v2756
  %v3087 = vpop.f32.mrf.mxu0
  %v3088 = vadd.f32 %v2814, %v3087
  %v3089 = vpop.f32.mrf.mxu0
  %v3090 = vadd.f32 %v2814, %v3089
  %3091 = vmatmul.bf16.gmra.mxu0 %v2758
  %v3092 = vpop.f32.mrf.mxu0
  %v3093 = vadd.f32 %v2814, %v3092
  %v3094 = vpop.f32.mrf.mxu0
  %v3095 = vadd.f32 %v2814, %v3094
  %3096 = vmatmul.bf16.gmra.mxu0 %v2760
  %v3097 = vpop.f32.mrf.mxu0
  %v3098 = vadd.f32 %v2814, %v3097
  %v3099 = vpop.f32.mrf.mxu0
  %v3100 = vadd.f32 %v2814, %v3099
  %3101 = vmatmul.bf16.gmra.mxu0 %v2762
  %v3102 = vpop.f32.mrf.mxu0
  %v3103 = vadd.f32 %v2814, %v3102
  %v3104 = vpop.f32.mrf.mxu0
  %v3105 = vadd.f32 %v2814, %v3104
  %3106 = vmatmul.bf16.gmra.mxu0 %v2764
  %v3107 = vpop.f32.mrf.mxu0
  %v3108 = vadd.f32 %v2814, %v3107
  %v3109 = vpop.f32.mrf.mxu0
  %v3110 = vadd.f32 %v2814, %v3109
  %3111 = vmatmul.bf16.gmra.mxu0 %v2766
  %v3112 = vpop.f32.mrf.mxu0
  %v3113 = vadd.f32 %v2814, %v3112
  %v3114 = vpop.f32.mrf.mxu0
  %v3115 = vadd.f32 %v2814, %v3114
  %3116 = vmatmul.bf16.gmra.mxu0 %v2768
  %v3117 = vpop.f32.mrf.mxu0
  %v3118 = vadd.f32 %v2814, %v3117
  %v3119 = vpop.f32.mrf.mxu0
  %v3120 = vadd.f32 %v2814, %v3119
  %3121 = vmatmul.bf16.gmra.mxu0 %v2770
  %v3122 = vpop.f32.mrf.mxu0
  %v3123 = vadd.f32 %v2814, %v3122
  %v3124 = vpop.f32.mrf.mxu0
  %v3125 = vadd.f32 %v2814, %v3124
  %3126 = vmatmul.bf16.gmra.mxu0 %v2772
  %v3127 = vpop.f32.mrf.mxu0
  %v3128 = vadd.f32 %v2814, %v3127
  %v3129 = vpop.f32.mrf.mxu0
  %v3130 = vadd.f32 %v2814, %v3129
  %3131 = vmatmul.bf16.gmra.mxu0 %v2774
  %v3132 = vpop.f32.mrf.mxu0
  %v3133 = vadd.f32 %v2814, %v3132
  %v3134 = vpop.f32.mrf.mxu0
  %v3135 = vadd.f32 %v2814, %v3134
  %3136 = vmatmul.bf16.gmra.mxu0 %v2776
  %v3137 = vpop.f32.mrf.mxu0
  %v3138 = vadd.f32 %v2814, %v3137
  %v3139 = vpop.f32.mrf.mxu0
  %v3140 = vadd.f32 %v2814, %v3139
  %3141 = vmatmul.bf16.gmra.mxu0 %v2778
  %v3142 = vpop.f32.mrf.mxu0
  %v3143 = vadd.f32 %v2814, %v3142
  %v3144 = vpop.f32.mrf.mxu0
  %v3145 = vadd.f32 %v2814, %v3144
  %3146 = vdwg.mxu0
  %3147 = vmatpush.bf16.msra.mxu0 %v2944
  %3148 = vmatpush.bf16.msra.mxu0 %v2942
  %3149 = vmatpush.bf16.msra.mxu0 %v2940
  %3150 = vmatpush.bf16.msra.mxu0 %v2938
  %3151 = vmatpush.bf16.msra.mxu0 %v2936
  %3152 = vmatpush.bf16.msra.mxu0 %v2934
  %3153 = vmatpush.bf16.msra.mxu0 %v2932
  %3154 = vmatpush.bf16.msra.mxu0 %v2930
  %3155 = vmatmul.bf16.gmra.mxu0 %v2717
  %v3156 = vpop.f32.mrf.mxu0
  %v3157 = vadd.f32 %v2988, %v3156
  %v3158 = vpop.f32.mrf.mxu0
  %v3159 = vadd.f32 %v2990, %v3158
  %3160 = vmatmul.bf16.gmra.mxu0 %v2719
  %v3161 = vpop.f32.mrf.mxu0
  %v3162 = vadd.f32 %v2993, %v3161
  %v3163 = vpop.f32.mrf.mxu0
  %v3164 = vadd.f32 %v2995, %v3163
  %3165 = vmatmul.bf16.gmra.mxu0 %v2721
  %v3166 = vpop.f32.mrf.mxu0
  %v3167 = vadd.f32 %v2998, %v3166
  %v3168 = vpop.f32.mrf.mxu0
  %v3169 = vadd.f32 %v3000, %v3168
  %3170 = vmatmul.bf16.gmra.mxu0 %v2723
  %v3171 = vpop.f32.mrf.mxu0
  %v3172 = vadd.f32 %v3003, %v3171
  %v3173 = vpop.f32.mrf.mxu0
  %v3174 = vadd.f32 %v3005, %v3173
  %3175 = vmatmul.bf16.gmra.mxu0 %v2725
  %v3176 = vpop.f32.mrf.mxu0
  %v3177 = vadd.f32 %v3008, %v3176
  %v3178 = vpop.f32.mrf.mxu0
  %v3179 = vadd.f32 %v3010, %v3178
  %3180 = vmatmul.bf16.gmra.mxu0 %v2727
  %v3181 = vpop.f32.mrf.mxu0
  %v3182 = vadd.f32 %v3013, %v3181
  %v3183 = vpop.f32.mrf.mxu0
  %v3184 = vadd.f32 %v3015, %v3183
  %3185 = vmatmul.bf16.gmra.mxu0 %v2729
  %v3186 = vpop.f32.mrf.mxu0
  %v3187 = vadd.f32 %v3018, %v3186
  %v3188 = vpop.f32.mrf.mxu0
  %v3189 = vadd.f32 %v3020, %v3188
  %3190 = vmatmul.bf16.gmra.mxu0 %v2731
  %v3191 = vpop.f32.mrf.mxu0
  %v3192 = vadd.f32 %v3023, %v3191
  %v3193 = vpop.f32.mrf.mxu0
  %v3194 = vadd.f32 %v3025, %v3193
  %3195 = vmatmul.bf16.gmra.mxu0 %v2733
  %v3196 = vpop.f32.mrf.mxu0
  %v3197 = vadd.f32 %v3028, %v3196
  %v3198 = vpop.f32.mrf.mxu0
  %v3199 = vadd.f32 %v3030, %v3198
  %3200 = vmatmul.bf16.gmra.mxu0 %v2735
  %v3201 = vpop.f32.mrf.mxu0
  %v3202 = vadd.f32 %v3033, %v3201
  %v3203 = vpop.f32.mrf.mxu0
  %v3204 = vadd.f32 %v3035, %v3203
  %3205 = vmatmul.bf16.gmra.mxu0 %v2737
  %v3206 = vpop.f32.mrf.mxu0
  %v3207 = vadd.f32 %v3038, %v3206
  %v3208 = vpop.f32.mrf.mxu0
  %v3209 = vadd.f32 %v3040, %v3208
  %3210 = vmatmul.bf16.gmra.mxu0 %v2739
  %v3211 = vpop.f32.mrf.mxu0
  %v3212 = vadd.f32 %v3043, %v3211
  %v3213 = vpop.f32.mrf.mxu0
  %v3214 = vadd.f32 %v3045, %v3213
  %3215 = vmatmul.bf16.gmra.mxu0 %v2741
  %v3216 = vpop.f32.mrf.mxu0
  %v3217 = vadd.f32 %v3048, %v3216
  %v3218 = vpop.f32.mrf.mxu0
  %v3219 = vadd.f32 %v3050, %v3218
  %3220 = vmatmul.bf16.gmra.mxu0 %v2743
  %v3221 = vpop.f32.mrf.mxu0
  %v3222 = vadd.f32 %v3053, %v3221
  %v3223 = vpop.f32.mrf.mxu0
  %v3224 = vadd.f32 %v3055, %v3223
  %3225 = vmatmul.bf16.gmra.mxu0 %v2745
  %v3226 = vpop.f32.mrf.mxu0
  %v3227 = vadd.f32 %v3058, %v3226
  %v3228 = vpop.f32.mrf.mxu0
  %v3229 = vadd.f32 %v3060, %v3228
  %3230 = vmatmul.bf16.gmra.mxu0 %v2747
  %v3231 = vpop.f32.mrf.mxu0
  %v3232 = vadd.f32 %v3063, %v3231
  %v3233 = vpop.f32.mrf.mxu0
  %v3234 = vadd.f32 %v3065, %v3233
  %3235 = vmatmul.bf16.gmra.mxu0 %v2749
  %v3236 = vpop.f32.mrf.mxu0
  %v3237 = vadd.f32 %v3068, %v3236
  %v3238 = vpop.f32.mrf.mxu0
  %v3239 = vadd.f32 %v3070, %v3238
  %3240 = vmatmul.bf16.gmra.mxu0 %v2751
  %v3241 = vpop.f32.mrf.mxu0
  %v3242 = vadd.f32 %v3073, %v3241
  %v3243 = vpop.f32.mrf.mxu0
  %v3244 = vadd.f32 %v3075, %v3243
  %3245 = vmatmul.bf16.gmra.mxu0 %v2753
  %v3246 = vpop.f32.mrf.mxu0
  %v3247 = vadd.f32 %v3078, %v3246
  %v3248 = vpop.f32.mrf.mxu0
  %v3249 = vadd.f32 %v3080, %v3248
  %3250 = vmatmul.bf16.gmra.mxu0 %v2755
  %v3251 = vpop.f32.mrf.mxu0
  %v3252 = vadd.f32 %v3083, %v3251
  %v3253 = vpop.f32.mrf.mxu0
  %v3254 = vadd.f32 %v3085, %v3253
  %3255 = vmatmul.bf16.gmra.mxu0 %v2757
  %v3256 = vpop.f32.mrf.mxu0
  %v3257 = vadd.f32 %v3088, %v3256
  %v3258 = vpop.f32.mrf.mxu0
  %v3259 = vadd.f32 %v3090, %v3258
  %3260 = vmatmul.bf16.gmra.mxu0 %v2759
  %v3261 = vpop.f32.mrf.mxu0
  %v3262 = vadd.f32 %v3093, %v3261
  %v3263 = vpop.f32.mrf.mxu0
  %v3264 = vadd.f32 %v3095, %v3263
  %3265 = vmatmul.bf16.gmra.mxu0 %v2761
  %v3266 = vpop.f32.mrf.mxu0
  %v3267 = vadd.f32 %v3098, %v3266
  %v3268 = vpop.f32.mrf.mxu0
  %v3269 = vadd.f32 %v3100, %v3268
  %3270 = vmatmul.bf16.gmra.mxu0 %v2763
  %v3271 = vpop.f32.mrf.mxu0
  %v3272 = vadd.f32 %v3103, %v3271
  %v3273 = vpop.f32.mrf.mxu0
  %v3274 = vadd.f32 %v3105, %v3273
  %3275 = vmatmul.bf16.gmra.mxu0 %v2765
  %v3276 = vpop.f32.mrf.mxu0
  %v3277 = vadd.f32 %v3108, %v3276
  %v3278 = vpop.f32.mrf.mxu0
  %v3279 = vadd.f32 %v3110, %v3278
  %3280 = vmatmul.bf16.gmra.mxu0 %v2767
  %v3281 = vpop.f32.mrf.mxu0
  %v3282 = vadd.f32 %v3113, %v3281
  %v3283 = vpop.f32.mrf.mxu0
  %v3284 = vadd.f32 %v3115, %v3283
  %3285 = vmatmul.bf16.gmra.mxu0 %v2769
  %v3286 = vpop.f32.mrf.mxu0
  %v3287 = vadd.f32 %v3118, %v3286
  %v3288 = vpop.f32.mrf.mxu0
  %v3289 = vadd.f32 %v3120, %v3288
  %3290 = vmatmul.bf16.gmra.mxu0 %v2771
  %v3291 = vpop.f32.mrf.mxu0
  %v3292 = vadd.f32 %v3123, %v3291
  %v3293 = vpop.f32.mrf.mxu0
  %v3294 = vadd.f32 %v3125, %v3293
  %3295 = vmatmul.bf16.gmra.mxu0 %v2773
  %v3296 = vpop.f32.mrf.mxu0
  %v3297 = vadd.f32 %v3128, %v3296
  %v3298 = vpop.f32.mrf.mxu0
  %v3299 = vadd.f32 %v3130, %v3298
  %3300 = vmatmul.bf16.gmra.mxu0 %v2775
  %v3301 = vpop.f32.mrf.mxu0
  %v3302 = vadd.f32 %v3133, %v3301
  %v3303 = vpop.f32.mrf.mxu0
  %v3304 = vadd.f32 %v3135, %v3303
  %3305 = vmatmul.bf16.gmra.mxu0 %v2777
  %v3306 = vpop.f32.mrf.mxu0
  %v3307 = vadd.f32 %v3138, %v3306
  %v3308 = vpop.f32.mrf.mxu0
  %v3309 = vadd.f32 %v3140, %v3308
  %3310 = vmatmul.bf16.gmra.mxu0 %v2779
  %v3311 = vpop.f32.mrf.mxu0
  %v3312 = vadd.f32 %v3143, %v3311
  %v3313 = vpop.f32.mrf.mxu0
  %v3314 = vadd.f32 %v3145, %v3313
  %3315 = vdwg.mxu0
  %3316 = vmatpush.bf16.msra.mxu0 %v2929
  %3317 = vmatpush.bf16.msra.mxu0 %v2927
  %3318 = vmatpush.bf16.msra.mxu0 %v2925
  %3319 = vmatpush.bf16.msra.mxu0 %v2923
  %3320 = vmatpush.bf16.msra.mxu0 %v2921
  %3321 = vmatpush.bf16.msra.mxu0 %v2919
  %3322 = vmatpush.bf16.msra.mxu0 %v2917
  %3323 = vmatpush.bf16.msra.mxu0 %v2915
  %3324 = vmatmul.bf16.gmra.mxu0 %v2716
  %v3325 = vpop.f32.mrf.mxu0
  %v3326 = vadd.f32 %v2815, %v3325
  %v3327 = vpop.f32.mrf.mxu0
  %v3328 = vadd.f32 %v2815, %v3327
  %3329 = vmatmul.bf16.gmra.mxu0 %v2718
  %v3330 = vpop.f32.mrf.mxu0
  %v3331 = vadd.f32 %v2815, %v3330
  %v3332 = vpop.f32.mrf.mxu0
  %v3333 = vadd.f32 %v2815, %v3332
  %3334 = vmatmul.bf16.gmra.mxu0 %v2720
  %v3335 = vpop.f32.mrf.mxu0
  %v3336 = vadd.f32 %v2815, %v3335
  %v3337 = vpop.f32.mrf.mxu0
  %v3338 = vadd.f32 %v2815, %v3337
  %3339 = vmatmul.bf16.gmra.mxu0 %v2722
  %v3340 = vpop.f32.mrf.mxu0
  %v3341 = vadd.f32 %v2815, %v3340
  %v3342 = vpop.f32.mrf.mxu0
  %v3343 = vadd.f32 %v2815, %v3342
  %3344 = vmatmul.bf16.gmra.mxu0 %v2724
  %v3345 = vpop.f32.mrf.mxu0
  %v3346 = vadd.f32 %v2815, %v3345
  %v3347 = vpop.f32.mrf.mxu0
  %v3348 = vadd.f32 %v2815, %v3347
  %3349 = vmatmul.bf16.gmra.mxu0 %v2726
  %v3350 = vpop.f32.mrf.mxu0
  %v3351 = vadd.f32 %v2815, %v3350
  %v3352 = vpop.f32.mrf.mxu0
  %v3353 = vadd.f32 %v2815, %v3352
  %3354 = vmatmul.bf16.gmra.mxu0 %v2728
  %v3355 = vpop.f32.mrf.mxu0
  %v3356 = vadd.f32 %v2815, %v3355
  %v3357 = vpop.f32.mrf.mxu0
  %v3358 = vadd.f32 %v2815, %v3357
  %3359 = vmatmul.bf16.gmra.mxu0 %v2730
  %v3360 = vpop.f32.mrf.mxu0
  %v3361 = vadd.f32 %v2815, %v3360
  %v3362 = vpop.f32.mrf.mxu0
  %v3363 = vadd.f32 %v2815, %v3362
  %3364 = vmatmul.bf16.gmra.mxu0 %v2732
  %v3365 = vpop.f32.mrf.mxu0
  %v3366 = vadd.f32 %v2815, %v3365
  %v3367 = vpop.f32.mrf.mxu0
  %v3368 = vadd.f32 %v2815, %v3367
  %3369 = vmatmul.bf16.gmra.mxu0 %v2734
  %v3370 = vpop.f32.mrf.mxu0
  %v3371 = vadd.f32 %v2815, %v3370
  %v3372 = vpop.f32.mrf.mxu0
  %v3373 = vadd.f32 %v2815, %v3372
  %3374 = vmatmul.bf16.gmra.mxu0 %v2736
  %v3375 = vpop.f32.mrf.mxu0
  %v3376 = vadd.f32 %v2815, %v3375
  %v3377 = vpop.f32.mrf.mxu0
  %v3378 = vadd.f32 %v2815, %v3377
  %3379 = vmatmul.bf16.gmra.mxu0 %v2738
  %v3380 = vpop.f32.mrf.mxu0
  %v3381 = vadd.f32 %v2815, %v3380
  %v3382 = vpop.f32.mrf.mxu0
  %v3383 = vadd.f32 %v2815, %v3382
  %3384 = vmatmul.bf16.gmra.mxu0 %v2740
  %v3385 = vpop.f32.mrf.mxu0
  %v3386 = vadd.f32 %v2815, %v3385
  %v3387 = vpop.f32.mrf.mxu0
  %v3388 = vadd.f32 %v2815, %v3387
  %3389 = vmatmul.bf16.gmra.mxu0 %v2742
  %v3390 = vpop.f32.mrf.mxu0
  %v3391 = vadd.f32 %v2815, %v3390
  %v3392 = vpop.f32.mrf.mxu0
  %v3393 = vadd.f32 %v2815, %v3392
  %3394 = vmatmul.bf16.gmra.mxu0 %v2744
  %v3395 = vpop.f32.mrf.mxu0
  %v3396 = vadd.f32 %v2815, %v3395
  %v3397 = vpop.f32.mrf.mxu0
  %v3398 = vadd.f32 %v2815, %v3397
  %3399 = vmatmul.bf16.gmra.mxu0 %v2746
  %v3400 = vpop.f32.mrf.mxu0
  %v3401 = vadd.f32 %v2815, %v3400
  %v3402 = vpop.f32.mrf.mxu0
  %v3403 = vadd.f32 %v2815, %v3402
  %3404 = vmatmul.bf16.gmra.mxu0 %v2748
  %v3405 = vpop.f32.mrf.mxu0
  %v3406 = vadd.f32 %v2815, %v3405
  %v3407 = vpop.f32.mrf.mxu0
  %v3408 = vadd.f32 %v2815, %v3407
  %3409 = vmatmul.bf16.gmra.mxu0 %v2750
  %v3410 = vpop.f32.mrf.mxu0
  %v3411 = vadd.f32 %v2815, %v3410
  %v3412 = vpop.f32.mrf.mxu0
  %v3413 = vadd.f32 %v2815, %v3412
  %3414 = vmatmul.bf16.gmra.mxu0 %v2752
  %v3415 = vpop.f32.mrf.mxu0
  %v3416 = vadd.f32 %v2815, %v3415
  %v3417 = vpop.f32.mrf.mxu0
  %v3418 = vadd.f32 %v2815, %v3417
  %3419 = vmatmul.bf16.gmra.mxu0 %v2754
  %v3420 = vpop.f32.mrf.mxu0
  %v3421 = vadd.f32 %v2815, %v3420
  %v3422 = vpop.f32.mrf.mxu0
  %v3423 = vadd.f32 %v2815, %v3422
  %3424 = vmatmul.bf16.gmra.mxu0 %v2756
  %v3425 = vpop.f32.mrf.mxu0
  %v3426 = vadd.f32 %v2815, %v3425
  %v3427 = vpop.f32.mrf.mxu0
  %v3428 = vadd.f32 %v2815, %v3427
  %3429 = vmatmul.bf16.gmra.mxu0 %v2758
  %v3430 = vpop.f32.mrf.mxu0
  %v3431 = vadd.f32 %v2815, %v3430
  %v3432 = vpop.f32.mrf.mxu0
  %v3433 = vadd.f32 %v2815, %v3432
  %3434 = vmatmul.bf16.gmra.mxu0 %v2760
  %v3435 = vpop.f32.mrf.mxu0
  %v3436 = vadd.f32 %v2815, %v3435
  %v3437 = vpop.f32.mrf.mxu0
  %v3438 = vadd.f32 %v2815, %v3437
  %3439 = vmatmul.bf16.gmra.mxu0 %v2762
  %v3440 = vpop.f32.mrf.mxu0
  %v3441 = vadd.f32 %v2815, %v3440
  %v3442 = vpop.f32.mrf.mxu0
  %v3443 = vadd.f32 %v2815, %v3442
  %3444 = vmatmul.bf16.gmra.mxu0 %v2764
  %v3445 = vpop.f32.mrf.mxu0
  %v3446 = vadd.f32 %v2815, %v3445
  %v3447 = vpop.f32.mrf.mxu0
  %v3448 = vadd.f32 %v2815, %v3447
  %3449 = vmatmul.bf16.gmra.mxu0 %v2766
  %v3450 = vpop.f32.mrf.mxu0
  %v3451 = vadd.f32 %v2815, %v3450
  %v3452 = vpop.f32.mrf.mxu0
  %v3453 = vadd.f32 %v2815, %v3452
  %3454 = vmatmul.bf16.gmra.mxu0 %v2768
  %v3455 = vpop.f32.mrf.mxu0
  %v3456 = vadd.f32 %v2815, %v3455
  %v3457 = vpop.f32.mrf.mxu0
  %v3458 = vadd.f32 %v2815, %v3457
  %3459 = vmatmul.bf16.gmra.mxu0 %v2770
  %v3460 = vpop.f32.mrf.mxu0
  %v3461 = vadd.f32 %v2815, %v3460
  %v3462 = vpop.f32.mrf.mxu0
  %v3463 = vadd.f32 %v2815, %v3462
  %3464 = vmatmul.bf16.gmra.mxu0 %v2772
  %v3465 = vpop.f32.mrf.mxu0
  %v3466 = vadd.f32 %v2815, %v3465
  %v3467 = vpop.f32.mrf.mxu0
  %v3468 = vadd.f32 %v2815, %v3467
  %3469 = vmatmul.bf16.gmra.mxu0 %v2774
  %v3470 = vpop.f32.mrf.mxu0
  %v3471 = vadd.f32 %v2815, %v3470
  %v3472 = vpop.f32.mrf.mxu0
  %v3473 = vadd.f32 %v2815, %v3472
  %3474 = vmatmul.bf16.gmra.mxu0 %v2776
  %v3475 = vpop.f32.mrf.mxu0
  %v3476 = vadd.f32 %v2815, %v3475
  %v3477 = vpop.f32.mrf.mxu0
  %v3478 = vadd.f32 %v2815, %v3477
  %3479 = vmatmul.bf16.gmra.mxu0 %v2778
  %v3480 = vpop.f32.mrf.mxu0
  %v3481 = vadd.f32 %v2815, %v3480
  %v3482 = vpop.f32.mrf.mxu0
  %v3483 = vadd.f32 %v2815, %v3482
  %3484 = vdwg.mxu0
  %3485 = vmatpush.bf16.msra.mxu0 %v2945
  %3486 = vmatpush.bf16.msra.mxu0 %v2943
  %3487 = vmatpush.bf16.msra.mxu0 %v2941
  %3488 = vmatpush.bf16.msra.mxu0 %v2939
  %3489 = vmatpush.bf16.msra.mxu0 %v2937
  %3490 = vmatpush.bf16.msra.mxu0 %v2935
  %3491 = vmatpush.bf16.msra.mxu0 %v2933
  %3492 = vmatpush.bf16.msra.mxu0 %v2931
  %3493 = vmatmul.bf16.gmra.mxu0 %v2717
  %v3494 = vpop.f32.mrf.mxu0
  %v3495 = vadd.f32 %v3326, %v3494
  %v3496 = vpop.f32.mrf.mxu0
  %v3497 = vadd.f32 %v3328, %v3496
  %3498 = vmatmul.bf16.gmra.mxu0 %v2719
  %v3499 = vpop.f32.mrf.mxu0
  %v3500 = vadd.f32 %v3331, %v3499
  %v3501 = vpop.f32.mrf.mxu0
  %v3502 = vadd.f32 %v3333, %v3501
  %3503 = vmatmul.bf16.gmra.mxu0 %v2721
  %v3504 = vpop.f32.mrf.mxu0
  %v3505 = vadd.f32 %v3336, %v3504
  %v3506 = vpop.f32.mrf.mxu0
  %v3507 = vadd.f32 %v3338, %v3506
  %3508 = vmatmul.bf16.gmra.mxu0 %v2723
  %v3509 = vpop.f32.mrf.mxu0
  %v3510 = vadd.f32 %v3341, %v3509
  %v3511 = vpop.f32.mrf.mxu0
  %v3512 = vadd.f32 %v3343, %v3511
  %3513 = vmatmul.bf16.gmra.mxu0 %v2725
  %v3514 = vpop.f32.mrf.mxu0
  %v3515 = vadd.f32 %v3346, %v3514
  %v3516 = vpop.f32.mrf.mxu0
  %v3517 = vadd.f32 %v3348, %v3516
  %3518 = vmatmul.bf16.gmra.mxu0 %v2727
  %v3519 = vpop.f32.mrf.mxu0
  %v3520 = vadd.f32 %v3351, %v3519
  %v3521 = vpop.f32.mrf.mxu0
  %v3522 = vadd.f32 %v3353, %v3521
  %3523 = vmatmul.bf16.gmra.mxu0 %v2729
  %v3524 = vpop.f32.mrf.mxu0
  %v3525 = vadd.f32 %v3356, %v3524
  %v3526 = vpop.f32.mrf.mxu0
  %v3527 = vadd.f32 %v3358, %v3526
  %3528 = vmatmul.bf16.gmra.mxu0 %v2731
  %v3529 = vpop.f32.mrf.mxu0
  %v3530 = vadd.f32 %v3361, %v3529
  %v3531 = vpop.f32.mrf.mxu0
  %v3532 = vadd.f32 %v3363, %v3531
  %3533 = vmatmul.bf16.gmra.mxu0 %v2733
  %v3534 = vpop.f32.mrf.mxu0
  %v3535 = vadd.f32 %v3366, %v3534
  %v3536 = vpop.f32.mrf.mxu0
  %v3537 = vadd.f32 %v3368, %v3536
  %3538 = vmatmul.bf16.gmra.mxu0 %v2735
  %v3539 = vpop.f32.mrf.mxu0
  %v3540 = vadd.f32 %v3371, %v3539
  %v3541 = vpop.f32.mrf.mxu0
  %v3542 = vadd.f32 %v3373, %v3541
  %3543 = vmatmul.bf16.gmra.mxu0 %v2737
  %v3544 = vpop.f32.mrf.mxu0
  %v3545 = vadd.f32 %v3376, %v3544
  %v3546 = vpop.f32.mrf.mxu0
  %v3547 = vadd.f32 %v3378, %v3546
  %3548 = vmatmul.bf16.gmra.mxu0 %v2739
  %v3549 = vpop.f32.mrf.mxu0
  %v3550 = vadd.f32 %v3381, %v3549
  %v3551 = vpop.f32.mrf.mxu0
  %v3552 = vadd.f32 %v3383, %v3551
  %3553 = vmatmul.bf16.gmra.mxu0 %v2741
  %v3554 = vpop.f32.mrf.mxu0
  %v3555 = vadd.f32 %v3386, %v3554
  %v3556 = vpop.f32.mrf.mxu0
  %v3557 = vadd.f32 %v3388, %v3556
  %3558 = vmatmul.bf16.gmra.mxu0 %v2743
  %v3559 = vpop.f32.mrf.mxu0
  %v3560 = vadd.f32 %v3391, %v3559
  %v3561 = vpop.f32.mrf.mxu0
  %v3562 = vadd.f32 %v3393, %v3561
  %3563 = vmatmul.bf16.gmra.mxu0 %v2745
  %v3564 = vpop.f32.mrf.mxu0
  %v3565 = vadd.f32 %v3396, %v3564
  %v3566 = vpop.f32.mrf.mxu0
  %v3567 = vadd.f32 %v3398, %v3566
  %3568 = vmatmul.bf16.gmra.mxu0 %v2747
  %v3569 = vpop.f32.mrf.mxu0
  %v3570 = vadd.f32 %v3401, %v3569
  %v3571 = vpop.f32.mrf.mxu0
  %v3572 = vadd.f32 %v3403, %v3571
  %3573 = vmatmul.bf16.gmra.mxu0 %v2749
  %v3574 = vpop.f32.mrf.mxu0
  %v3575 = vadd.f32 %v3406, %v3574
  %v3576 = vpop.f32.mrf.mxu0
  %v3577 = vadd.f32 %v3408, %v3576
  %3578 = vmatmul.bf16.gmra.mxu0 %v2751
  %v3579 = vpop.f32.mrf.mxu0
  %v3580 = vadd.f32 %v3411, %v3579
  %v3581 = vpop.f32.mrf.mxu0
  %v3582 = vadd.f32 %v3413, %v3581
  %3583 = vmatmul.bf16.gmra.mxu0 %v2753
  %v3584 = vpop.f32.mrf.mxu0
  %v3585 = vadd.f32 %v3416, %v3584
  %v3586 = vpop.f32.mrf.mxu0
  %v3587 = vadd.f32 %v3418, %v3586
  %3588 = vmatmul.bf16.gmra.mxu0 %v2755
  %v3589 = vpop.f32.mrf.mxu0
  %v3590 = vadd.f32 %v3421, %v3589
  %v3591 = vpop.f32.mrf.mxu0
  %v3592 = vadd.f32 %v3423, %v3591
  %3593 = vmatmul.bf16.gmra.mxu0 %v2757
  %v3594 = vpop.f32.mrf.mxu0
  %v3595 = vadd.f32 %v3426, %v3594
  %v3596 = vpop.f32.mrf.mxu0
  %v3597 = vadd.f32 %v3428, %v3596
  %3598 = vmatmul.bf16.gmra.mxu0 %v2759
  %v3599 = vpop.f32.mrf.mxu0
  %v3600 = vadd.f32 %v3431, %v3599
  %v3601 = vpop.f32.mrf.mxu0
  %v3602 = vadd.f32 %v3433, %v3601
  %3603 = vmatmul.bf16.gmra.mxu0 %v2761
  %v3604 = vpop.f32.mrf.mxu0
  %v3605 = vadd.f32 %v3436, %v3604
  %v3606 = vpop.f32.mrf.mxu0
  %v3607 = vadd.f32 %v3438, %v3606
  %3608 = vmatmul.bf16.gmra.mxu0 %v2763
  %v3609 = vpop.f32.mrf.mxu0
  %v3610 = vadd.f32 %v3441, %v3609
  %v3611 = vpop.f32.mrf.mxu0
  %v3612 = vadd.f32 %v3443, %v3611
  %3613 = vmatmul.bf16.gmra.mxu0 %v2765
  %v3614 = vpop.f32.mrf.mxu0
  %v3615 = vadd.f32 %v3446, %v3614
  %v3616 = vpop.f32.mrf.mxu0
  %v3617 = vadd.f32 %v3448, %v3616
  %3618 = vmatmul.bf16.gmra.mxu0 %v2767
  %v3619 = vpop.f32.mrf.mxu0
  %v3620 = vadd.f32 %v3451, %v3619
  %v3621 = vpop.f32.mrf.mxu0
  %v3622 = vadd.f32 %v3453, %v3621
  %3623 = vmatmul.bf16.gmra.mxu0 %v2769
  %v3624 = vpop.f32.mrf.mxu0
  %v3625 = vadd.f32 %v3456, %v3624
  %v3626 = vpop.f32.mrf.mxu0
  %v3627 = vadd.f32 %v3458, %v3626
  %3628 = vmatmul.bf16.gmra.mxu0 %v2771
  %v3629 = vpop.f32.mrf.mxu0
  %v3630 = vadd.f32 %v3461, %v3629
  %v3631 = vpop.f32.mrf.mxu0
  %v3632 = vadd.f32 %v3463, %v3631
  %3633 = vmatmul.bf16.gmra.mxu0 %v2773
  %v3634 = vpop.f32.mrf.mxu0
  %v3635 = vadd.f32 %v3466, %v3634
  %v3636 = vpop.f32.mrf.mxu0
  %v3637 = vadd.f32 %v3468, %v3636
  %3638 = vmatmul.bf16.gmra.mxu0 %v2775
  %v3639 = vpop.f32.mrf.mxu0
  %v3640 = vadd.f32 %v3471, %v3639
  %v3641 = vpop.f32.mrf.mxu0
  %v3642 = vadd.f32 %v3473, %v3641
  %3643 = vmatmul.bf16.gmra.mxu0 %v2777
  %v3644 = vpop.f32.mrf.mxu0
  %v3645 = vadd.f32 %v3476, %v3644
  %v3646 = vpop.f32.mrf.mxu0
  %v3647 = vadd.f32 %v3478, %v3646
  %3648 = vmatmul.bf16.gmra.mxu0 %v2779
  %v3649 = vpop.f32.mrf.mxu0
  %v3650 = vadd.f32 %v3481, %v3649
  %v3651 = vpop.f32.mrf.mxu0
  %v3652 = vadd.f32 %v3483, %v3651
  %3653 = vdwg.mxu0
  %v3654 = vmax.f32 %v3157, 0.0
  %v3655 = vmax.f32 %v3495, 0.0
  %v3656 = vmax.f32 %v3159, 0.0
  %v3657 = vmax.f32 %v3497, 0.0
  %v3658 = vmax.f32 %v3162, 0.0
  %v3659 = vmax.f32 %v3500, 0.0
  %v3660 = vmax.f32 %v3164, 0.0
  %v3661 = vmax.f32 %v3502, 0.0
  %v3662 = vmax.f32 %v3167, 0.0
  %v3663 = vmax.f32 %v3505, 0.0
  %v3664 = vmax.f32 %v3169, 0.0
  %v3665 = vmax.f32 %v3507, 0.0
  %v3666 = vmax.f32 %v3172, 0.0
  %v3667 = vmax.f32 %v3510, 0.0
  %v3668 = vmax.f32 %v3174, 0.0
  %v3669 = vmax.f32 %v3512, 0.0
  %v3670 = vmax.f32 %v3177, 0.0
  %v3671 = vmax.f32 %v3515, 0.0
  %v3672 = vmax.f32 %v3179, 0.0
  %v3673 = vmax.f32 %v3517, 0.0
  %v3674 = vmax.f32 %v3182, 0.0
  %v3675 = vmax.f32 %v3520, 0.0
  %v3676 = vmax.f32 %v3184, 0.0
  %v3677 = vmax.f32 %v3522, 0.0
  %v3678 = vmax.f32 %v3187, 0.0
  %v3679 = vmax.f32 %v3525, 0.0
  %v3680 = vmax.f32 %v3189, 0.0
  %v3681 = vmax.f32 %v3527, 0.0
  %v3682 = vmax.f32 %v3192, 0.0
  %v3683 = vmax.f32 %v3530, 0.0
  %v3684 = vmax.f32 %v3194, 0.0
  %v3685 = vmax.f32 %v3532, 0.0
  %v3686 = vmax.f32 %v3197, 0.0
  %v3687 = vmax.f32 %v3535, 0.0
  %v3688 = vmax.f32 %v3199, 0.0
  %v3689 = vmax.f32 %v3537, 0.0
  %v3690 = vmax.f32 %v3202, 0.0
  %v3691 = vmax.f32 %v3540, 0.0
  %v3692 = vmax.f32 %v3204, 0.0
  %v3693 = vmax.f32 %v3542, 0.0
  %v3694 = vmax.f32 %v3207, 0.0
  %v3695 = vmax.f32 %v3545, 0.0
  %v3696 = vmax.f32 %v3209, 0.0
  %v3697 = vmax.f32 %v3547, 0.0
  %v3698 = vmax.f32 %v3212, 0.0
  %v3699 = vmax.f32 %v3550, 0.0
  %v3700 = vmax.f32 %v3214, 0.0
  %v3701 = vmax.f32 %v3552, 0.0
  %v3702 = vmax.f32 %v3217, 0.0
  %v3703 = vmax.f32 %v3555, 0.0
  %v3704 = vmax.f32 %v3219, 0.0
  %v3705 = vmax.f32 %v3557, 0.0
  %v3706 = vmax.f32 %v3222, 0.0
  %v3707 = vmax.f32 %v3560, 0.0
  %v3708 = vmax.f32 %v3224, 0.0
  %v3709 = vmax.f32 %v3562, 0.0
  %v3710 = vmax.f32 %v3227, 0.0
  %v3711 = vmax.f32 %v3565, 0.0
  %v3712 = vmax.f32 %v3229, 0.0
  %v3713 = vmax.f32 %v3567, 0.0
  %v3714 = vmax.f32 %v3232, 0.0
  %v3715 = vmax.f32 %v3570, 0.0
  %v3716 = vmax.f32 %v3234, 0.0
  %v3717 = vmax.f32 %v3572, 0.0
  %v3718 = vmax.f32 %v3237, 0.0
  %v3719 = vmax.f32 %v3575, 0.0
  %v3720 = vmax.f32 %v3239, 0.0
  %v3721 = vmax.f32 %v3577, 0.0
  %v3722 = vmax.f32 %v3242, 0.0
  %v3723 = vmax.f32 %v3580, 0.0
  %v3724 = vmax.f32 %v3244, 0.0
  %v3725 = vmax.f32 %v3582, 0.0
  %v3726 = vmax.f32 %v3247, 0.0
  %v3727 = vmax.f32 %v3585, 0.0
  %v3728 = vmax.f32 %v3249, 0.0
  %v3729 = vmax.f32 %v3587, 0.0
  %v3730 = vmax.f32 %v3252, 0.0
  %v3731 = vmax.f32 %v3590, 0.0
  %v3732 = vmax.f32 %v3254, 0.0
  %v3733 = vmax.f32 %v3592, 0.0
  %v3734 = vmax.f32 %v3257, 0.0
  %v3735 = vmax.f32 %v3595, 0.0
  %v3736 = vmax.f32 %v3259, 0.0
  %v3737 = vmax.f32 %v3597, 0.0
  %v3738 = vmax.f32 %v3262, 0.0
  %v3739 = vmax.f32 %v3600, 0.0
  %v3740 = vmax.f32 %v3264, 0.0
  %v3741 = vmax.f32 %v3602, 0.0
  %v3742 = vmax.f32 %v3267, 0.0
  %v3743 = vmax.f32 %v3605, 0.0
  %v3744 = vmax.f32 %v3269, 0.0
  %v3745 = vmax.f32 %v3607, 0.0
  %v3746 = vmax.f32 %v3272, 0.0
  %v3747 = vmax.f32 %v3610, 0.0
  %v3748 = vmax.f32 %v3274, 0.0
  %v3749 = vmax.f32 %v3612, 0.0
  %v3750 = vmax.f32 %v3277, 0.0
  %v3751 = vmax.f32 %v3615, 0.0
  %v3752 = vmax.f32 %v3279, 0.0
  %v3753 = vmax.f32 %v3617, 0.0
  %v3754 = vmax.f32 %v3282, 0.0
  %v3755 = vmax.f32 %v3620, 0.0
  %v3756 = vmax.f32 %v3284, 0.0
  %v3757 = vmax.f32 %v3622, 0.0
  %v3758 = vmax.f32 %v3287, 0.0
  %v3759 = vmax.f32 %v3625, 0.0
  %v3760 = vmax.f32 %v3289, 0.0
  %v3761 = vmax.f32 %v3627, 0.0
  %v3762 = vmax.f32 %v3292, 0.0
  %v3763 = vmax.f32 %v3630, 0.0
  %v3764 = vmax.f32 %v3294, 0.0
  %v3765 = vmax.f32 %v3632, 0.0
  %v3766 = vmax.f32 %v3297, 0.0
  %v3767 = vmax.f32 %v3635, 0.0
  %v3768 = vmax.f32 %v3299, 0.0
  %v3769 = vmax.f32 %v3637, 0.0
  %v3770 = vmax.f32 %v3302, 0.0
  %v3771 = vmax.f32 %v3640, 0.0
  %v3772 = vmax.f32 %v3304, 0.0
  %v3773 = vmax.f32 %v3642, 0.0
  %v3774 = vmax.f32 %v3307, 0.0
  %v3775 = vmax.f32 %v3645, 0.0
  %v3776 = vmax.f32 %v3309, 0.0
  %v3777 = vmax.f32 %v3647, 0.0
  %v3778 = vmax.f32 %v3312, 0.0
  %v3779 = vmax.f32 %v3650, 0.0
  %v3780 = vmax.f32 %v3314, 0.0
  %v3781 = vmax.f32 %v3652, 0.0
  %v3782 = vpack.c.bf16 %v3656, %v3654
  %v3783 = vpack.c.bf16 %v3657, %v3655
  %v3784 = vpack.c.bf16 %v3660, %v3658
  %v3785 = vpack.c.bf16 %v3661, %v3659
  %v3786 = vpack.c.bf16 %v3664, %v3662
  %v3787 = vpack.c.bf16 %v3665, %v3663
  %v3788 = vpack.c.bf16 %v3668, %v3666
  %v3789 = vpack.c.bf16 %v3669, %v3667
  %v3790 = vpack.c.bf16 %v3672, %v3670
  %v3791 = vpack.c.bf16 %v3673, %v3671
  %v3792 = vpack.c.bf16 %v3676, %v3674
  %v3793 = vpack.c.bf16 %v3677, %v3675
  %v3794 = vpack.c.bf16 %v3680, %v3678
  %v3795 = vpack.c.bf16 %v3681, %v3679
  %v3796 = vpack.c.bf16 %v3684, %v3682
  %v3797 = vpack.c.bf16 %v3685, %v3683
  %v3798 = vpack.c.bf16 %v3688, %v3686
  %v3799 = vpack.c.bf16 %v3689, %v3687
  %v3800 = vpack.c.bf16 %v3692, %v3690
  %v3801 = vpack.c.bf16 %v3693, %v3691
  %v3802 = vpack.c.bf16 %v3696, %v3694
  %v3803 = vpack.c.bf16 %v3697, %v3695
  %v3804 = vpack.c.bf16 %v3700, %v3698
  %v3805 = vpack.c.bf16 %v3701, %v3699
  %v3806 = vpack.c.bf16 %v3704, %v3702
  %v3807 = vpack.c.bf16 %v3705, %v3703
  %v3808 = vpack.c.bf16 %v3708, %v3706
  %v3809 = vpack.c.bf16 %v3709, %v3707
  %v3810 = vpack.c.bf16 %v3712, %v3710
  %v3811 = vpack.c.bf16 %v3713, %v3711
  %v3812 = vpack.c.bf16 %v3716, %v3714
  %v3813 = vpack.c.bf16 %v3717, %v3715
  %v3814 = vpack.c.bf16 %v3720, %v3718
  %v3815 = vpack.c.bf16 %v3721, %v3719
  %v3816 = vpack.c.bf16 %v3724, %v3722
  %v3817 = vpack.c.bf16 %v3725, %v3723
  %v3818 = vpack.c.bf16 %v3728, %v3726
  %v3819 = vpack.c.bf16 %v3729, %v3727
  %v3820 = vpack.c.bf16 %v3732, %v3730
  %v3821 = vpack.c.bf16 %v3733, %v3731
  %v3822 = vpack.c.bf16 %v3736, %v3734
  %v3823 = vpack.c.bf16 %v3737, %v3735
  %v3824 = vpack.c.bf16 %v3740, %v3738
  %v3825 = vpack.c.bf16 %v3741, %v3739
  %v3826 = vpack.c.bf16 %v3744, %v3742
  %v3827 = vpack.c.bf16 %v3745, %v3743
  %v3828 = vpack.c.bf16 %v3748, %v3746
  %v3829 = vpack.c.bf16 %v3749, %v3747
  %v3830 = vpack.c.bf16 %v3752, %v3750
  %v3831 = vpack.c.bf16 %v3753, %v3751
  %v3832 = vpack.c.bf16 %v3756, %v3754
  %v3833 = vpack.c.bf16 %v3757, %v3755
  %v3834 = vpack.c.bf16 %v3760, %v3758
  %v3835 = vpack.c.bf16 %v3761, %v3759
  %v3836 = vpack.c.bf16 %v3764, %v3762
  %v3837 = vpack.c.bf16 %v3765, %v3763
  %v3838 = vpack.c.bf16 %v3768, %v3766
  %v3839 = vpack.c.bf16 %v3769, %v3767
  %v3840 = vpack.c.bf16 %v3772, %v3770
  %v3841 = vpack.c.bf16 %v3773, %v3771
  %v3842 = vpack.c.bf16 %v3776, %v3774
  %v3843 = vpack.c.bf16 %v3777, %v3775
  %v3844 = vpack.c.bf16 %v3780, %v3778
  %v3845 = vpack.c.bf16 %v3781, %v3779
  %v3846 = vld [vmem:[%s9] sm:$0xf]
  %v3847 = vld [vmem:[%s9 + $0x4] sm:$0xf]
  %v3848 = vld [vmem:[%s9 + $0x8] sm:$0xf]
  %v3849 = vld [vmem:[%s9 + $0xc] sm:$0xf]
  %v3850 = vld [vmem:[%s9 + $0x10] sm:$0xf]
  %v3851 = vld [vmem:[%s9 + $0x14] sm:$0xf]
  %v3852 = vld [vmem:[%s9 + $0x18] sm:$0xf]
  %v3853 = vld [vmem:[%s9 + $0x1c] sm:$0xf]
  %v3854 = vld [vmem:[%s9 + $0x20] sm:$0xf]
  %v3855 = vld [vmem:[%s9 + $0x24] sm:$0xf]
  %v3856 = vld [vmem:[%s9 + $0x28] sm:$0xf]
  %v3857 = vld [vmem:[%s9 + $0x2c] sm:$0xf]
  %v3858 = vld [vmem:[%s9 + $0x30] sm:$0xf]
  %v3859 = vld [vmem:[%s9 + $0x34] sm:$0xf]
  %v3860 = vld [vmem:[%s9 + $0x38] sm:$0xf]
  %v3861 = vld [vmem:[%s9 + $0x3c] sm:$0xf]
  %v3862 = vld [vmem:[%s9 + $0x40] sm:$0xf]
  %v3863 = vld [vmem:[%s9 + $0x44] sm:$0xf]
  %v3864 = vld [vmem:[%s9 + $0x48] sm:$0xf]
  %v3865 = vld [vmem:[%s9 + $0x4c] sm:$0xf]
  %v3866 = vld [vmem:[%s9 + $0x50] sm:$0xf]
  %v3867 = vld [vmem:[%s9 + $0x54] sm:$0xf]
  %v3868 = vld [vmem:[%s9 + $0x58] sm:$0xf]
  %v3869 = vld [vmem:[%s9 + $0x5c] sm:$0xf]
  %v3870 = vld [vmem:[%s9 + $0x60] sm:$0xf]
  %v3871 = vld [vmem:[%s9 + $0x64] sm:$0xf]
  %v3872 = vld [vmem:[%s9 + $0x68] sm:$0xf]
  %v3873 = vld [vmem:[%s9 + $0x6c] sm:$0xf]
  %v3874 = vld [vmem:[%s9 + $0x70] sm:$0xf]
  %v3875 = vld [vmem:[%s9 + $0x74] sm:$0xf]
  %v3876 = vld [vmem:[%s9 + $0x78] sm:$0xf]
  %v3877 = vld [vmem:[%s9 + $0x7c] sm:$0xf]
  %v3878 = vld [vmem:[%s10] sm:$0x1]
  %v3880 = vperm.slane %v3878, 0
  %v3914 = vunpack.c.l.b16 %v3846
  %v3915 = vunpack.c.l.b16 %v3847
  %v3916 = vunpack.c.l.b16 %v3848
  %v3917 = vunpack.c.l.b16 %v3849
  %v3918 = vunpack.c.l.b16 %v3850
  %v3919 = vunpack.c.l.b16 %v3851
  %v3920 = vunpack.c.l.b16 %v3852
  %v3921 = vunpack.c.l.b16 %v3853
  %v3922 = vunpack.c.l.b16 %v3854
  %v3923 = vunpack.c.l.b16 %v3855
  %v3924 = vunpack.c.l.b16 %v3856
  %v3925 = vunpack.c.l.b16 %v3857
  %v3926 = vunpack.c.l.b16 %v3858
  %v3927 = vunpack.c.l.b16 %v3859
  %v3928 = vunpack.c.l.b16 %v3860
  %v3929 = vunpack.c.l.b16 %v3861
  %v3930 = vunpack.c.l.b16 %v3862
  %v3931 = vunpack.c.l.b16 %v3863
  %v3932 = vunpack.c.l.b16 %v3864
  %v3933 = vunpack.c.l.b16 %v3865
  %v3934 = vunpack.c.l.b16 %v3866
  %v3935 = vunpack.c.l.b16 %v3867
  %v3936 = vunpack.c.l.b16 %v3868
  %v3937 = vunpack.c.l.b16 %v3869
  %v3938 = vunpack.c.l.b16 %v3870
  %v3939 = vunpack.c.l.b16 %v3871
  %v3940 = vunpack.c.l.b16 %v3872
  %v3941 = vunpack.c.l.b16 %v3873
  %v3942 = vunpack.c.l.b16 %v3874
  %v3943 = vunpack.c.l.b16 %v3875
  %v3944 = vunpack.c.l.b16 %v3876
  %v3945 = vunpack.c.l.b16 %v3877
  %v3946 = vpack.c.b16 %v3915, %v3914
  %v3947 = vpack.c.b16 %v3917, %v3916
  %v3948 = vpack.c.b16 %v3919, %v3918
  %v3949 = vpack.c.b16 %v3921, %v3920
  %v3950 = vpack.c.b16 %v3923, %v3922
  %v3951 = vpack.c.b16 %v3925, %v3924
  %v3952 = vpack.c.b16 %v3927, %v3926
  %v3953 = vpack.c.b16 %v3929, %v3928
  %v3954 = vpack.c.b16 %v3931, %v3930
  %v3955 = vpack.c.b16 %v3933, %v3932
  %v3956 = vpack.c.b16 %v3935, %v3934
  %v3957 = vpack.c.b16 %v3937, %v3936
  %v3958 = vpack.c.b16 %v3939, %v3938
  %v3959 = vpack.c.b16 %v3941, %v3940
  %v3960 = vpack.c.b16 %v3943, %v3942
  %v3961 = vpack.c.b16 %v3945, %v3944
  %3978 = vmatpush.bf16.msra.mxu0 %v3953
  %3979 = vmatpush.bf16.msra.mxu0 %v3952
  %3980 = vmatpush.bf16.msra.mxu0 %v3951
  %3981 = vmatpush.bf16.msra.mxu0 %v3950
  %3982 = vmatpush.bf16.msra.mxu0 %v3949
  %3983 = vmatpush.bf16.msra.mxu0 %v3948
  %3984 = vmatpush.bf16.msra.mxu0 %v3947
  %3985 = vmatpush.bf16.msra.mxu0 %v3946
  %3986 = vmatmul.bf16.gmra.mxu0 %v3782
  %v3987 = vpop.f32.mrf.mxu0
  %v3988 = vadd.f32 %v3880, %v3987
  %v3989 = vpop.f32.mrf.mxu0
  %v3990 = vadd.f32 %v3880, %v3989
  %3991 = vmatmul.bf16.gmra.mxu0 %v3784
  %v3992 = vpop.f32.mrf.mxu0
  %v3993 = vadd.f32 %v3880, %v3992
  %v3994 = vpop.f32.mrf.mxu0
  %v3995 = vadd.f32 %v3880, %v3994
  %3996 = vmatmul.bf16.gmra.mxu0 %v3786
  %v3997 = vpop.f32.mrf.mxu0
  %v3998 = vadd.f32 %v3880, %v3997
  %v3999 = vpop.f32.mrf.mxu0
  %v4000 = vadd.f32 %v3880, %v3999
  %4001 = vmatmul.bf16.gmra.mxu0 %v3788
  %v4002 = vpop.f32.mrf.mxu0
  %v4003 = vadd.f32 %v3880, %v4002
  %v4004 = vpop.f32.mrf.mxu0
  %v4005 = vadd.f32 %v3880, %v4004
  %4006 = vmatmul.bf16.gmra.mxu0 %v3790
  %v4007 = vpop.f32.mrf.mxu0
  %v4008 = vadd.f32 %v3880, %v4007
  %v4009 = vpop.f32.mrf.mxu0
  %v4010 = vadd.f32 %v3880, %v4009
  %4011 = vmatmul.bf16.gmra.mxu0 %v3792
  %v4012 = vpop.f32.mrf.mxu0
  %v4013 = vadd.f32 %v3880, %v4012
  %v4014 = vpop.f32.mrf.mxu0
  %v4015 = vadd.f32 %v3880, %v4014
  %4016 = vmatmul.bf16.gmra.mxu0 %v3794
  %v4017 = vpop.f32.mrf.mxu0
  %v4018 = vadd.f32 %v3880, %v4017
  %v4019 = vpop.f32.mrf.mxu0
  %v4020 = vadd.f32 %v3880, %v4019
  %4021 = vmatmul.bf16.gmra.mxu0 %v3796
  %v4022 = vpop.f32.mrf.mxu0
  %v4023 = vadd.f32 %v3880, %v4022
  %v4024 = vpop.f32.mrf.mxu0
  %v4025 = vadd.f32 %v3880, %v4024
  %4026 = vmatmul.bf16.gmra.mxu0 %v3798
  %v4027 = vpop.f32.mrf.mxu0
  %v4028 = vadd.f32 %v3880, %v4027
  %v4029 = vpop.f32.mrf.mxu0
  %v4030 = vadd.f32 %v3880, %v4029
  %4031 = vmatmul.bf16.gmra.mxu0 %v3800
  %v4032 = vpop.f32.mrf.mxu0
  %v4033 = vadd.f32 %v3880, %v4032
  %v4034 = vpop.f32.mrf.mxu0
  %v4035 = vadd.f32 %v3880, %v4034
  %4036 = vmatmul.bf16.gmra.mxu0 %v3802
  %v4037 = vpop.f32.mrf.mxu0
  %v4038 = vadd.f32 %v3880, %v4037
  %v4039 = vpop.f32.mrf.mxu0
  %v4040 = vadd.f32 %v3880, %v4039
  %4041 = vmatmul.bf16.gmra.mxu0 %v3804
  %v4042 = vpop.f32.mrf.mxu0
  %v4043 = vadd.f32 %v3880, %v4042
  %v4044 = vpop.f32.mrf.mxu0
  %v4045 = vadd.f32 %v3880, %v4044
  %4046 = vmatmul.bf16.gmra.mxu0 %v3806
  %v4047 = vpop.f32.mrf.mxu0
  %v4048 = vadd.f32 %v3880, %v4047
  %v4049 = vpop.f32.mrf.mxu0
  %v4050 = vadd.f32 %v3880, %v4049
  %4051 = vmatmul.bf16.gmra.mxu0 %v3808
  %v4052 = vpop.f32.mrf.mxu0
  %v4053 = vadd.f32 %v3880, %v4052
  %v4054 = vpop.f32.mrf.mxu0
  %v4055 = vadd.f32 %v3880, %v4054
  %4056 = vmatmul.bf16.gmra.mxu0 %v3810
  %v4057 = vpop.f32.mrf.mxu0
  %v4058 = vadd.f32 %v3880, %v4057
  %v4059 = vpop.f32.mrf.mxu0
  %v4060 = vadd.f32 %v3880, %v4059
  %4061 = vmatmul.bf16.gmra.mxu0 %v3812
  %v4062 = vpop.f32.mrf.mxu0
  %v4063 = vadd.f32 %v3880, %v4062
  %v4064 = vpop.f32.mrf.mxu0
  %v4065 = vadd.f32 %v3880, %v4064
  %4066 = vmatmul.bf16.gmra.mxu0 %v3814
  %v4067 = vpop.f32.mrf.mxu0
  %v4068 = vadd.f32 %v3880, %v4067
  %v4069 = vpop.f32.mrf.mxu0
  %v4070 = vadd.f32 %v3880, %v4069
  %4071 = vmatmul.bf16.gmra.mxu0 %v3816
  %v4072 = vpop.f32.mrf.mxu0
  %v4073 = vadd.f32 %v3880, %v4072
  %v4074 = vpop.f32.mrf.mxu0
  %v4075 = vadd.f32 %v3880, %v4074
  %4076 = vmatmul.bf16.gmra.mxu0 %v3818
  %v4077 = vpop.f32.mrf.mxu0
  %v4078 = vadd.f32 %v3880, %v4077
  %v4079 = vpop.f32.mrf.mxu0
  %v4080 = vadd.f32 %v3880, %v4079
  %4081 = vmatmul.bf16.gmra.mxu0 %v3820
  %v4082 = vpop.f32.mrf.mxu0
  %v4083 = vadd.f32 %v3880, %v4082
  %v4084 = vpop.f32.mrf.mxu0
  %v4085 = vadd.f32 %v3880, %v4084
  %4086 = vmatmul.bf16.gmra.mxu0 %v3822
  %v4087 = vpop.f32.mrf.mxu0
  %v4088 = vadd.f32 %v3880, %v4087
  %v4089 = vpop.f32.mrf.mxu0
  %v4090 = vadd.f32 %v3880, %v4089
  %4091 = vmatmul.bf16.gmra.mxu0 %v3824
  %v4092 = vpop.f32.mrf.mxu0
  %v4093 = vadd.f32 %v3880, %v4092
  %v4094 = vpop.f32.mrf.mxu0
  %v4095 = vadd.f32 %v3880, %v4094
  %4096 = vmatmul.bf16.gmra.mxu0 %v3826
  %v4097 = vpop.f32.mrf.mxu0
  %v4098 = vadd.f32 %v3880, %v4097
  %v4099 = vpop.f32.mrf.mxu0
  %v4100 = vadd.f32 %v3880, %v4099
  %4101 = vmatmul.bf16.gmra.mxu0 %v3828
  %v4102 = vpop.f32.mrf.mxu0
  %v4103 = vadd.f32 %v3880, %v4102
  %v4104 = vpop.f32.mrf.mxu0
  %v4105 = vadd.f32 %v3880, %v4104
  %4106 = vmatmul.bf16.gmra.mxu0 %v3830
  %v4107 = vpop.f32.mrf.mxu0
  %v4108 = vadd.f32 %v3880, %v4107
  %v4109 = vpop.f32.mrf.mxu0
  %v4110 = vadd.f32 %v3880, %v4109
  %4111 = vmatmul.bf16.gmra.mxu0 %v3832
  %v4112 = vpop.f32.mrf.mxu0
  %v4113 = vadd.f32 %v3880, %v4112
  %v4114 = vpop.f32.mrf.mxu0
  %v4115 = vadd.f32 %v3880, %v4114
  %4116 = vmatmul.bf16.gmra.mxu0 %v3834
  %v4117 = vpop.f32.mrf.mxu0
  %v4118 = vadd.f32 %v3880, %v4117
  %v4119 = vpop.f32.mrf.mxu0
  %v4120 = vadd.f32 %v3880, %v4119
  %4121 = vmatmul.bf16.gmra.mxu0 %v3836
  %v4122 = vpop.f32.mrf.mxu0
  %v4123 = vadd.f32 %v3880, %v4122
  %v4124 = vpop.f32.mrf.mxu0
  %v4125 = vadd.f32 %v3880, %v4124
  %4126 = vmatmul.bf16.gmra.mxu0 %v3838
  %v4127 = vpop.f32.mrf.mxu0
  %v4128 = vadd.f32 %v3880, %v4127
  %v4129 = vpop.f32.mrf.mxu0
  %v4130 = vadd.f32 %v3880, %v4129
  %4131 = vmatmul.bf16.gmra.mxu0 %v3840
  %v4132 = vpop.f32.mrf.mxu0
  %v4133 = vadd.f32 %v3880, %v4132
  %v4134 = vpop.f32.mrf.mxu0
  %v4135 = vadd.f32 %v3880, %v4134
  %4136 = vmatmul.bf16.gmra.mxu0 %v3842
  %v4137 = vpop.f32.mrf.mxu0
  %v4138 = vadd.f32 %v3880, %v4137
  %v4139 = vpop.f32.mrf.mxu0
  %v4140 = vadd.f32 %v3880, %v4139
  %4141 = vmatmul.bf16.gmra.mxu0 %v3844
  %v4142 = vpop.f32.mrf.mxu0
  %v4143 = vadd.f32 %v3880, %v4142
  %v4144 = vpop.f32.mrf.mxu0
  %v4145 = vadd.f32 %v3880, %v4144
  %4146 = vdwg.mxu0
  %4147 = vmatpush.bf16.msra.mxu0 %v3961
  %4148 = vmatpush.bf16.msra.mxu0 %v3960
  %4149 = vmatpush.bf16.msra.mxu0 %v3959
  %4150 = vmatpush.bf16.msra.mxu0 %v3958
  %4151 = vmatpush.bf16.msra.mxu0 %v3957
  %4152 = vmatpush.bf16.msra.mxu0 %v3956
  %4153 = vmatpush.bf16.msra.mxu0 %v3955
  %4154 = vmatpush.bf16.msra.mxu0 %v3954
  %4155 = vmatmul.bf16.gmra.mxu0 %v3783
  %v4156 = vpop.f32.mrf.mxu0
  %v4157 = vadd.f32 %v3988, %v4156
  %v4158 = vpop.f32.mrf.mxu0
  %v4159 = vadd.f32 %v3990, %v4158
  %4160 = vmatmul.bf16.gmra.mxu0 %v3785
  %v4161 = vpop.f32.mrf.mxu0
  %v4162 = vadd.f32 %v3993, %v4161
  %v4163 = vpop.f32.mrf.mxu0
  %v4164 = vadd.f32 %v3995, %v4163
  %4165 = vmatmul.bf16.gmra.mxu0 %v3787
  %v4166 = vpop.f32.mrf.mxu0
  %v4167 = vadd.f32 %v3998, %v4166
  %v4168 = vpop.f32.mrf.mxu0
  %v4169 = vadd.f32 %v4000, %v4168
  %4170 = vmatmul.bf16.gmra.mxu0 %v3789
  %v4171 = vpop.f32.mrf.mxu0
  %v4172 = vadd.f32 %v4003, %v4171
  %v4173 = vpop.f32.mrf.mxu0
  %v4174 = vadd.f32 %v4005, %v4173
  %4175 = vmatmul.bf16.gmra.mxu0 %v3791
  %v4176 = vpop.f32.mrf.mxu0
  %v4177 = vadd.f32 %v4008, %v4176
  %v4178 = vpop.f32.mrf.mxu0
  %v4179 = vadd.f32 %v4010, %v4178
  %4180 = vmatmul.bf16.gmra.mxu0 %v3793
  %v4181 = vpop.f32.mrf.mxu0
  %v4182 = vadd.f32 %v4013, %v4181
  %v4183 = vpop.f32.mrf.mxu0
  %v4184 = vadd.f32 %v4015, %v4183
  %4185 = vmatmul.bf16.gmra.mxu0 %v3795
  %v4186 = vpop.f32.mrf.mxu0
  %v4187 = vadd.f32 %v4018, %v4186
  %v4188 = vpop.f32.mrf.mxu0
  %v4189 = vadd.f32 %v4020, %v4188
  %4190 = vmatmul.bf16.gmra.mxu0 %v3797
  %v4191 = vpop.f32.mrf.mxu0
  %v4192 = vadd.f32 %v4023, %v4191
  %v4193 = vpop.f32.mrf.mxu0
  %v4194 = vadd.f32 %v4025, %v4193
  %4195 = vmatmul.bf16.gmra.mxu0 %v3799
  %v4196 = vpop.f32.mrf.mxu0
  %v4197 = vadd.f32 %v4028, %v4196
  %v4198 = vpop.f32.mrf.mxu0
  %v4199 = vadd.f32 %v4030, %v4198
  %4200 = vmatmul.bf16.gmra.mxu0 %v3801
  %v4201 = vpop.f32.mrf.mxu0
  %v4202 = vadd.f32 %v4033, %v4201
  %v4203 = vpop.f32.mrf.mxu0
  %v4204 = vadd.f32 %v4035, %v4203
  %4205 = vmatmul.bf16.gmra.mxu0 %v3803
  %v4206 = vpop.f32.mrf.mxu0
  %v4207 = vadd.f32 %v4038, %v4206
  %v4208 = vpop.f32.mrf.mxu0
  %v4209 = vadd.f32 %v4040, %v4208
  %4210 = vmatmul.bf16.gmra.mxu0 %v3805
  %v4211 = vpop.f32.mrf.mxu0
  %v4212 = vadd.f32 %v4043, %v4211
  %v4213 = vpop.f32.mrf.mxu0
  %v4214 = vadd.f32 %v4045, %v4213
  %4215 = vmatmul.bf16.gmra.mxu0 %v3807
  %v4216 = vpop.f32.mrf.mxu0
  %v4217 = vadd.f32 %v4048, %v4216
  %v4218 = vpop.f32.mrf.mxu0
  %v4219 = vadd.f32 %v4050, %v4218
  %4220 = vmatmul.bf16.gmra.mxu0 %v3809
  %v4221 = vpop.f32.mrf.mxu0
  %v4222 = vadd.f32 %v4053, %v4221
  %v4223 = vpop.f32.mrf.mxu0
  %v4224 = vadd.f32 %v4055, %v4223
  %4225 = vmatmul.bf16.gmra.mxu0 %v3811
  %v4226 = vpop.f32.mrf.mxu0
  %v4227 = vadd.f32 %v4058, %v4226
  %v4228 = vpop.f32.mrf.mxu0
  %v4229 = vadd.f32 %v4060, %v4228
  %4230 = vmatmul.bf16.gmra.mxu0 %v3813
  %v4231 = vpop.f32.mrf.mxu0
  %v4232 = vadd.f32 %v4063, %v4231
  %v4233 = vpop.f32.mrf.mxu0
  %v4234 = vadd.f32 %v4065, %v4233
  %4235 = vmatmul.bf16.gmra.mxu0 %v3815
  %v4236 = vpop.f32.mrf.mxu0
  %v4237 = vadd.f32 %v4068, %v4236
  %v4238 = vpop.f32.mrf.mxu0
  %v4239 = vadd.f32 %v4070, %v4238
  %4240 = vmatmul.bf16.gmra.mxu0 %v3817
  %v4241 = vpop.f32.mrf.mxu0
  %v4242 = vadd.f32 %v4073, %v4241
  %v4243 = vpop.f32.mrf.mxu0
  %v4244 = vadd.f32 %v4075, %v4243
  %4245 = vmatmul.bf16.gmra.mxu0 %v3819
  %v4246 = vpop.f32.mrf.mxu0
  %v4247 = vadd.f32 %v4078, %v4246
  %v4248 = vpop.f32.mrf.mxu0
  %v4249 = vadd.f32 %v4080, %v4248
  %4250 = vmatmul.bf16.gmra.mxu0 %v3821
  %v4251 = vpop.f32.mrf.mxu0
  %v4252 = vadd.f32 %v4083, %v4251
  %v4253 = vpop.f32.mrf.mxu0
  %v4254 = vadd.f32 %v4085, %v4253
  %4255 = vmatmul.bf16.gmra.mxu0 %v3823
  %v4256 = vpop.f32.mrf.mxu0
  %v4257 = vadd.f32 %v4088, %v4256
  %v4258 = vpop.f32.mrf.mxu0
  %v4259 = vadd.f32 %v4090, %v4258
  %4260 = vmatmul.bf16.gmra.mxu0 %v3825
  %v4261 = vpop.f32.mrf.mxu0
  %v4262 = vadd.f32 %v4093, %v4261
  %v4263 = vpop.f32.mrf.mxu0
  %v4264 = vadd.f32 %v4095, %v4263
  %4265 = vmatmul.bf16.gmra.mxu0 %v3827
  %v4266 = vpop.f32.mrf.mxu0
  %v4267 = vadd.f32 %v4098, %v4266
  %v4268 = vpop.f32.mrf.mxu0
  %v4269 = vadd.f32 %v4100, %v4268
  %4270 = vmatmul.bf16.gmra.mxu0 %v3829
  %v4271 = vpop.f32.mrf.mxu0
  %v4272 = vadd.f32 %v4103, %v4271
  %v4273 = vpop.f32.mrf.mxu0
  %v4274 = vadd.f32 %v4105, %v4273
  %4275 = vmatmul.bf16.gmra.mxu0 %v3831
  %v4276 = vpop.f32.mrf.mxu0
  %v4277 = vadd.f32 %v4108, %v4276
  %v4278 = vpop.f32.mrf.mxu0
  %v4279 = vadd.f32 %v4110, %v4278
  %4280 = vmatmul.bf16.gmra.mxu0 %v3833
  %v4281 = vpop.f32.mrf.mxu0
  %v4282 = vadd.f32 %v4113, %v4281
  %v4283 = vpop.f32.mrf.mxu0
  %v4284 = vadd.f32 %v4115, %v4283
  %4285 = vmatmul.bf16.gmra.mxu0 %v3835
  %v4286 = vpop.f32.mrf.mxu0
  %v4287 = vadd.f32 %v4118, %v4286
  %v4288 = vpop.f32.mrf.mxu0
  %v4289 = vadd.f32 %v4120, %v4288
  %4290 = vmatmul.bf16.gmra.mxu0 %v3837
  %v4291 = vpop.f32.mrf.mxu0
  %v4292 = vadd.f32 %v4123, %v4291
  %v4293 = vpop.f32.mrf.mxu0
  %v4294 = vadd.f32 %v4125, %v4293
  %4295 = vmatmul.bf16.gmra.mxu0 %v3839
  %v4296 = vpop.f32.mrf.mxu0
  %v4297 = vadd.f32 %v4128, %v4296
  %v4298 = vpop.f32.mrf.mxu0
  %v4299 = vadd.f32 %v4130, %v4298
  %4300 = vmatmul.bf16.gmra.mxu0 %v3841
  %v4301 = vpop.f32.mrf.mxu0
  %v4302 = vadd.f32 %v4133, %v4301
  %v4303 = vpop.f32.mrf.mxu0
  %v4304 = vadd.f32 %v4135, %v4303
  %4305 = vmatmul.bf16.gmra.mxu0 %v3843
  %v4306 = vpop.f32.mrf.mxu0
  %v4307 = vadd.f32 %v4138, %v4306
  %v4308 = vpop.f32.mrf.mxu0
  %v4309 = vadd.f32 %v4140, %v4308
  %4310 = vmatmul.bf16.gmra.mxu0 %v3845
  %v4311 = vpop.f32.mrf.mxu0
  %v4312 = vadd.f32 %v4143, %v4311
  %v4313 = vpop.f32.mrf.mxu0
  %v4314 = vadd.f32 %v4145, %v4313
  %4315 = vdwg.mxu0
  %v4316 = vmax.f32 %v4157, 0.0
  %v4317 = vmax.f32 %v4159, 0.0
  %v4318 = vmax.f32 %v4162, 0.0
  %v4319 = vmax.f32 %v4164, 0.0
  %v4320 = vmax.f32 %v4167, 0.0
  %v4321 = vmax.f32 %v4169, 0.0
  %v4322 = vmax.f32 %v4172, 0.0
  %v4323 = vmax.f32 %v4174, 0.0
  %v4324 = vmax.f32 %v4177, 0.0
  %v4325 = vmax.f32 %v4179, 0.0
  %v4326 = vmax.f32 %v4182, 0.0
  %v4327 = vmax.f32 %v4184, 0.0
  %v4328 = vmax.f32 %v4187, 0.0
  %v4329 = vmax.f32 %v4189, 0.0
  %v4330 = vmax.f32 %v4192, 0.0
  %v4331 = vmax.f32 %v4194, 0.0
  %v4332 = vmax.f32 %v4197, 0.0
  %v4333 = vmax.f32 %v4199, 0.0
  %v4334 = vmax.f32 %v4202, 0.0
  %v4335 = vmax.f32 %v4204, 0.0
  %v4336 = vmax.f32 %v4207, 0.0
  %v4337 = vmax.f32 %v4209, 0.0
  %v4338 = vmax.f32 %v4212, 0.0
  %v4339 = vmax.f32 %v4214, 0.0
  %v4340 = vmax.f32 %v4217, 0.0
  %v4341 = vmax.f32 %v4219, 0.0
  %v4342 = vmax.f32 %v4222, 0.0
  %v4343 = vmax.f32 %v4224, 0.0
  %v4344 = vmax.f32 %v4227, 0.0
  %v4345 = vmax.f32 %v4229, 0.0
  %v4346 = vmax.f32 %v4232, 0.0
  %v4347 = vmax.f32 %v4234, 0.0
  %v4348 = vmax.f32 %v4237, 0.0
  %v4349 = vmax.f32 %v4239, 0.0
  %v4350 = vmax.f32 %v4242, 0.0
  %v4351 = vmax.f32 %v4244, 0.0
  %v4352 = vmax.f32 %v4247, 0.0
  %v4353 = vmax.f32 %v4249, 0.0
  %v4354 = vmax.f32 %v4252, 0.0
  %v4355 = vmax.f32 %v4254, 0.0
  %v4356 = vmax.f32 %v4257, 0.0
  %v4357 = vmax.f32 %v4259, 0.0
  %v4358 = vmax.f32 %v4262, 0.0
  %v4359 = vmax.f32 %v4264, 0.0
  %v4360 = vmax.f32 %v4267, 0.0
  %v4361 = vmax.f32 %v4269, 0.0
  %v4362 = vmax.f32 %v4272, 0.0
  %v4363 = vmax.f32 %v4274, 0.0
  %v4364 = vmax.f32 %v4277, 0.0
  %v4365 = vmax.f32 %v4279, 0.0
  %v4366 = vmax.f32 %v4282, 0.0
  %v4367 = vmax.f32 %v4284, 0.0
  %v4368 = vmax.f32 %v4287, 0.0
  %v4369 = vmax.f32 %v4289, 0.0
  %v4370 = vmax.f32 %v4292, 0.0
  %v4371 = vmax.f32 %v4294, 0.0
  %v4372 = vmax.f32 %v4297, 0.0
  %v4373 = vmax.f32 %v4299, 0.0
  %v4374 = vmax.f32 %v4302, 0.0
  %v4375 = vmax.f32 %v4304, 0.0
  %v4376 = vmax.f32 %v4307, 0.0
  %v4377 = vmax.f32 %v4309, 0.0
  %v4378 = vmax.f32 %v4312, 0.0
  %v4379 = vmax.f32 %v4314, 0.0
  %v4380 = vpack.c.bf16 %v4317, %v4316
  %v4381 = vpack.c.bf16 %v4319, %v4318
  %v4382 = vpack.c.bf16 %v4321, %v4320
  %v4383 = vpack.c.bf16 %v4323, %v4322
  %v4384 = vpack.c.bf16 %v4325, %v4324
  %v4385 = vpack.c.bf16 %v4327, %v4326
  %v4386 = vpack.c.bf16 %v4329, %v4328
  %v4387 = vpack.c.bf16 %v4331, %v4330
  %v4388 = vpack.c.bf16 %v4333, %v4332
  %v4389 = vpack.c.bf16 %v4335, %v4334
  %v4390 = vpack.c.bf16 %v4337, %v4336
  %v4391 = vpack.c.bf16 %v4339, %v4338
  %v4392 = vpack.c.bf16 %v4341, %v4340
  %v4393 = vpack.c.bf16 %v4343, %v4342
  %v4394 = vpack.c.bf16 %v4345, %v4344
  %v4395 = vpack.c.bf16 %v4347, %v4346
  %v4396 = vpack.c.bf16 %v4349, %v4348
  %v4397 = vpack.c.bf16 %v4351, %v4350
  %v4398 = vpack.c.bf16 %v4353, %v4352
  %v4399 = vpack.c.bf16 %v4355, %v4354
  %v4400 = vpack.c.bf16 %v4357, %v4356
  %v4401 = vpack.c.bf16 %v4359, %v4358
  %v4402 = vpack.c.bf16 %v4361, %v4360
  %v4403 = vpack.c.bf16 %v4363, %v4362
  %v4404 = vpack.c.bf16 %v4365, %v4364
  %v4405 = vpack.c.bf16 %v4367, %v4366
  %v4406 = vpack.c.bf16 %v4369, %v4368
  %v4407 = vpack.c.bf16 %v4371, %v4370
  %v4408 = vpack.c.bf16 %v4373, %v4372
  %v4409 = vpack.c.bf16 %v4375, %v4374
  %v4410 = vpack.c.bf16 %v4377, %v4376
  %v4411 = vpack.c.bf16 %v4379, %v4378
  %v4412 = vld [vmem:[%s11] sm:$0xf]
  %4413 = vmatpush.bf16.xpose.msra.mxu0 %v4387
  %4414 = vmatpush.bf16.xpose.msra.mxu0 %v4386
  %4415 = vmatpush.bf16.xpose.msra.mxu0 %v4385
  %4416 = vmatpush.bf16.xpose.msra.mxu0 %v4384
  %4417 = vmatpush.bf16.xpose.msra.mxu0 %v4383
  %4418 = vmatpush.bf16.xpose.msra.mxu0 %v4382
  %4419 = vmatpush.bf16.xpose.msra.mxu0 %v4381
  %4420 = vmatpush.bf16.xpose.msra.mxu0 %v4380
  %4421 = vmatmul.bf16.gmra.mxu0 %v4412
  %v4422 = vpop.f32.mrf.mxu0
  %v4423 = vadd.f32 0.0, %v4422
  %v4424 = vpop.f32.mrf.mxu0
  %4425 = vdwg.mxu0
  %4426 = vmatpush.bf16.xpose.msra.mxu0 %v4395
  %4427 = vmatpush.bf16.xpose.msra.mxu0 %v4394
  %4428 = vmatpush.bf16.xpose.msra.mxu0 %v4393
  %4429 = vmatpush.bf16.xpose.msra.mxu0 %v4392
  %4430 = vmatpush.bf16.xpose.msra.mxu0 %v4391
  %4431 = vmatpush.bf16.xpose.msra.mxu0 %v4390
  %4432 = vmatpush.bf16.xpose.msra.mxu0 %v4389
  %4433 = vmatpush.bf16.xpose.msra.mxu0 %v4388
  %4434 = vmatmul.bf16.gmra.mxu0 %v4412
  %v4435 = vpop.f32.mrf.mxu0
  %v4436 = vadd.f32 0.0, %v4435
  %v4437 = vpop.f32.mrf.mxu0
  %4438 = vdwg.mxu0
  %4439 = vmatpush.bf16.xpose.msra.mxu0 %v4403
  %4440 = vmatpush.bf16.xpose.msra.mxu0 %v4402
  %4441 = vmatpush.bf16.xpose.msra.mxu0 %v4401
  %4442 = vmatpush.bf16.xpose.msra.mxu0 %v4400
  %4443 = vmatpush.bf16.xpose.msra.mxu0 %v4399
  %4444 = vmatpush.bf16.xpose.msra.mxu0 %v4398
  %4445 = vmatpush.bf16.xpose.msra.mxu0 %v4397
  %4446 = vmatpush.bf16.xpose.msra.mxu0 %v4396
  %4447 = vmatmul.bf16.gmra.mxu0 %v4412
  %v4448 = vpop.f32.mrf.mxu0
  %v4449 = vadd.f32 0.0, %v4448
  %v4450 = vpop.f32.mrf.mxu0
  %4451 = vdwg.mxu0
  %4452 = vmatpush.bf16.xpose.msra.mxu0 %v4411
  %4453 = vmatpush.bf16.xpose.msra.mxu0 %v4410
  %4454 = vmatpush.bf16.xpose.msra.mxu0 %v4409
  %4455 = vmatpush.bf16.xpose.msra.mxu0 %v4408
  %4456 = vmatpush.bf16.xpose.msra.mxu0 %v4407
  %4457 = vmatpush.bf16.xpose.msra.mxu0 %v4406
  %4458 = vmatpush.bf16.xpose.msra.mxu0 %v4405
  %4459 = vmatpush.bf16.xpose.msra.mxu0 %v4404
  %4460 = vmatmul.bf16.gmra.mxu0 %v4412
  %v4461 = vpop.f32.mrf.mxu0
  %v4462 = vadd.f32 0.0, %v4461
  %v4463 = vpop.f32.mrf.mxu0
  %4464 = vdwg.mxu0
  %v4465 = vld [vmem:[#allocation2] sm:$0x1]
  %4467 = vset.pattern.permute.xlu0 0
  %4468 = vperm.xlu0 %4467, %v4465
  %v4469 = vpop.permute.xlu0 %4468
  %v4471 = vperm.slane %v4469, 0
  %v4472 = vadd.f32 %v4423, %v4471
  %v4473 = vadd.f32 %v4436, %v4471
  %v4474 = vadd.f32 %v4449, %v4471
  %v4475 = vadd.f32 %v4462, %v4471
  %v4480 = vrot.slane %v4473, 7
  %v4481 = vrot.slane %v4474, 6
  %v4482 = vrot.slane %v4475, 5
  %vm4483 = vcmask 1040384
  %v4484 = vsel %vm4483, %v4472, %v4480
  %vm4485 = vcmask 1042434
  %v4486 = vsel %vm4485, %v4481, %v4482
  %vm4487 = vcmask 1041408
  %v4488 = vsel %vm4487, %v4484, %v4486
  %v4490 = vlaneseq
  %vm4491 = vcmp.ge.s32.totalorder %v4490, 0
  %vm4492 = vcmp.lt.s32.totalorder %v4490, 512
  %vm4493 = vmand %vm4491, %vm4492
  %4494 = vst.msk [vmem:[%s13] sm:$0xf] %vm4493, %v4488
  // Predicated region
  $region54: #{global_metric_mlp_forward.1} parent=0 // pred_check
    _
  $region55: #{global_metric_mlp_forward.1} parent=0 // pred_check_branch
    %4496 = sbr.rel (0) target = $region57
  $region56: #{global_metric_mlp_forward.1} parent=0 // pred_region
    _
  $region57: #{global_metric_mlp_forward.1} parent=0 // pred_fallthru
    _
  // Predicated region
  $region58: #{global_metric_mlp_forward.1} parent=0 // pred_check
    _
  $region59: #{global_metric_mlp_forward.1} parent=0 // pred_check_branch
    %4498 = sbr.rel (0) target = $region61
  $region60: #{global_metric_mlp_forward.1} parent=0 // pred_region
    _
  $region61: #{global_metric_mlp_forward.1} parent=0 // pred_fallthru
    _

</llo_original>
